<compile_context>
chip_gen: v7x
topology: tpu7x:2x2x1
jax: 0.10.0
libtpu: 0.0.40
codegen_flags: <defaults>
</compile_context>

<pallas_src>
import functools

import numpy as np
import jax
import jax.numpy as jnp
from jax.experimental import pallas as pl
from jax.experimental.pallas import tpu as pltpu

# bf16 MXU inputs (v5e/v6e/v7x native); accumulation stays f32 via preferred_element_type.
MATMUL_DTYPE = jnp.bfloat16


# ---------------------------------------------------------------------------
# Shared in-kernel helper: shift a (channels, h*w) lane-flattened spatial grid
# by (dr, dc) with zero fill.  out[r, c] = a[r - dr, c - dc].
# ---------------------------------------------------------------------------
def _shift2d(a, dr, dc, h, w):
    m = h * w
    s = dr * w + dc
    if s > 0:
        out = jnp.concatenate(
            [jnp.zeros((a.shape[0], s), a.dtype), a[:, :m - s]], axis=1)
    elif s < 0:
        out = jnp.concatenate(
            [a[:, -s:], jnp.zeros((a.shape[0], -s), a.dtype)], axis=1)
    else:
        out = a
    if dc != 0:
        col = jax.lax.broadcasted_iota(jnp.int32, (1, m), 1) % w
        mask = (col >= dc) if dc > 0 else (col < w + dc)
        out = jnp.where(mask, out, jnp.zeros_like(out))
    return out


# ---------------------------------------------------------------------------
# Kernel 1: fused conv1 (1x1) + six dilated/strided branch convs + BN statistics.
# Channel-major: every activation is (channels, spatial-on-lanes).
# ---------------------------------------------------------------------------
def _branch_kernel(xee_ref, xoe_ref, xeo_ref, w1_ref, b1_ref,
                   wv_ref, bv_ref, wh_ref, bh_ref,
                   z_ref, stats_ref, *, h2, w2):
    mm = lambda a, b: jnp.dot(a, b, preferred_element_type=jnp.float32)
    w1 = w1_ref[...]

    # conv1 at the three stride-2 phases the branches actually read
    ee = (mm(w1, xee_ref[0]) + b1_ref[...]).astype(MATMUL_DTYPE)   # rows 2i,  cols 2j
    oe = (mm(w1, xoe_ref[0]) + b1_ref[...]).astype(MATMUL_DTYPE)   # rows 2i+1, cols 2j
    eo = (mm(w1, xeo_ref[0]) + b1_ref[...]).astype(MATMUL_DTYPE)   # rows 2i,  cols 2j+1

    wv0, wv1, wv2 = wv_ref[0], wv_ref[1], wv_ref[2]
    wh0, wh1, wh2 = wh_ref[0], wh_ref[1], wh_ref[2]
    bv, bh = bv_ref[...], bh_ref[...]

    zv_c = mm(wv1, ee)                    # center tap shared by the 3 vertical dilations
    zh_c = mm(wh1, ee)                    # center tap shared by the 3 horizontal dilations

    sh = functools.partial(_shift2d, h=h2, w=w2)
    # vertical branch dilation d: taps at rows 2i - d / 2i + d (cols 2j)
    v_taps = {1: (sh(oe, 1, 0), oe),
              2: (sh(ee, 1, 0), sh(ee, -1, 0)),
              3: (sh(oe, 2, 0), sh(oe, -1, 0))}
    # horizontal branch dilation d: taps at cols 2j - d / 2j + d (rows 2i)
    h_taps = {1: (sh(eo, 0, 1), eo),
              2: (sh(ee, 0, 1), sh(ee, 0, -1)),
              3: (sh(eo, 0, 2), sh(eo, 0, -1))}

    parts = []
    for d in (1, 2, 3):
        lo, hi = v_taps[d]
        parts.append(zv_c + mm(wv0, lo) + mm(wv2, hi) + bv)
    for d in (1, 2, 3):
        lo, hi = h_taps[d]
        parts.append(zh_c + mm(wh0, lo) + mm(wh2, hi) + bh)
    z = jnp.concatenate(parts, axis=0)                              # (6f, h2*w2) f32
    z_ref[0] = z

    # per-step BN statistics (reduced globally in glue -> exact train-mode BN)
    s = jnp.sum(z, axis=1, keepdims=True)
    sq = jnp.sum(z * z, axis=1, keepdims=True)
    stats_ref[0] = jnp.concatenate([s, sq], axis=1)                 # (6f, 2)


def branch_stage(x_ee, x_oe, x_eo, w1, b1, wv, bv, wh, bh, *, h2, w2):
    n, c, m2b = x_ee.shape
    f = w1.shape[0]
    c6 = 6 * f
    kern = functools.partial(_branch_kernel, h2=h2, w2=w2)
    return pl.pallas_call(
        kern,
        out_shape=(jax.ShapeDtypeStruct((n, c6, m2b), jnp.float32),
                   jax.ShapeDtypeStruct((n, c6, 2), jnp.float32)),
        grid=(n,),
        in_specs=[
            pl.BlockSpec((1, c, m2b), lambda b: (b, 0, 0)),
            pl.BlockSpec((1, c, m2b), lambda b: (b, 0, 0)),
            pl.BlockSpec((1, c, m2b), lambda b: (b, 0, 0)),
            pl.BlockSpec((f, c), lambda b: (0, 0)),
            pl.BlockSpec((f, 1), lambda b: (0, 0)),
            pl.BlockSpec((3, f, f), lambda b: (0, 0, 0)),
            pl.BlockSpec((f, 1), lambda b: (0, 0)),
            pl.BlockSpec((3, f, f), lambda b: (0, 0, 0)),
            pl.BlockSpec((f, 1), lambda b: (0, 0)),
        ],
        out_specs=(pl.BlockSpec((1, c6, m2b), lambda b: (b, 0, 0)),
                   pl.BlockSpec((1, c6, 2), lambda b: (b, 0, 0))),
        compiler_params=pltpu.CompilerParams(dimension_semantics=("parallel",)),
    )(x_ee, x_oe, x_eo, w1, b1, wv, bv, wh, bh)


# ---------------------------------------------------------------------------
# Kernel 2: fused tail per batch.
#   BN(train)+ReLU -> max_pool2d(4,2) -> conv3(3x3) -> conv_f(1x1, commuted)
#   -> bilinear resize (one matmul) -> sigmoid -> + residual x.
# ---------------------------------------------------------------------------
def _tail_kernel(z_ref, scale_ref, shift_ref, sel_ref, w3_ref, b3_ref,
                 wf_ref, bf_ref, up_ref, x_ref, o_ref, *, h2, w2, h3, w3):
    mm = lambda a, b: jnp.dot(a, b, preferred_element_type=jnp.float32)

    # BatchNorm (global stats folded into scale/shift) + ReLU
    y = jnp.maximum(z_ref[0] * scale_ref[...] + shift_ref[...], 0.0)   # (c6, h2*w2)

    # max_pool2d(kernel=4, stride=2): separable shifted maxes at full resolution,
    # then a static 0/1 selection matmul picks the stride-2 window origins (no gathers).
    cm = y
    for dc in (1, 2, 3):
        cm = jnp.maximum(cm, _shift2d(y, 0, -dc, h2, w2))
    wm = cm
    for dr in (1, 2, 3):
        wm = jnp.maximum(wm, _shift2d(cm, -dr, 0, h2, w2))
    pooled = mm(wm, sel_ref[...])                                      # (c6, h3*w3)
    pooled_b = pooled.astype(MATMUL_DTYPE)

    # conv3 (3x3, pad 1): 9 accumulated (c6, c6) matmuls over shifted taps
    c6 = pooled.shape[0]
    acc = jnp.zeros((c6, h3 * w3), jnp.float32)
    for kh in range(3):
        for kw in range(3):
            tap = _shift2d(pooled_b, -(kh - 1), -(kw - 1), h3, w3)
            acc = acc + mm(w3_ref[kh * 3 + kw], tap)
    c3 = acc + b3_ref[...]

    # conv_f (1x1), commuted ahead of the bilinear resize (exact: bilinear taps sum to 1)
    c4 = mm(wf_ref[...], c3.astype(MATMUL_DTYPE)) + bf_ref[...]        # (C, h3*w3)

    # bilinear upsample to (H, W) as one small matmul, then sigmoid + residual add
    m = jax.nn.sigmoid(mm(c4, up_ref[...]))                            # (C, H*W)
    o_ref[0] = x_ref[0] + m


def tail_stage(z, scale, shift, sel, w3p, b3, wf, bfb, up_mat, x_cm,
               *, h2, w2, h3, w3):
    n, c6, m2b = z.shape
    _, c, hw = x_cm.shape
    p3 = h3 * w3
    kern = functools.partial(_tail_kernel, h2=h2, w2=w2, h3=h3, w3=w3)
    return pl.pallas_call(
        kern,
        out_shape=jax.ShapeDtypeStruct((n, c, hw), jnp.float32),
        grid=(n,),
        in_specs=[
            pl.BlockSpec((1, c6, m2b), lambda b: (b, 0, 0)),
            pl.BlockSpec((c6, 1), lambda b: (0, 0)),
            pl.BlockSpec((c6, 1), lambda b: (0, 0)),
            pl.BlockSpec((m2b, p3), lambda b: (0, 0)),
            pl.BlockSpec((9, c6, c6), lambda b: (0, 0, 0)),
            pl.BlockSpec((c6, 1), lambda b: (0, 0)),
            pl.BlockSpec((c, c6), lambda b: (0, 0)),
            pl.BlockSpec((c, 1), lambda b: (0, 0)),
            pl.BlockSpec((p3, hw), lambda b: (0, 0)),
            pl.BlockSpec((1, c, hw), lambda b: (b, 0, 0)),
        ],
        out_specs=pl.BlockSpec((1, c, hw), lambda b: (b, 0, 0)),
        compiler_params=pltpu.CompilerParams(dimension_semantics=("parallel",)),
    )(z, scale, shift, sel, w3p, b3, wf, bfb, up_mat, x_cm)


# ---------------------------------------------------------------------------
# Glue helpers (layout plumbing only)
# ---------------------------------------------------------------------------
def _bilinear_matrix(out_size, in_size):
    # PyTorch F.interpolate(mode='bilinear', align_corners=False) 2-tap weights,
    # expressed as a dense (out_size, in_size) matrix (2 nonzeros per row).
    scale = in_size / out_size
    src = jnp.maximum(
        (jnp.arange(out_size, dtype=jnp.float32) + 0.5) * scale - 0.5, 0.0)
    i0 = jnp.minimum(jnp.floor(src).astype(jnp.int32), in_size - 1)
    i1 = jnp.minimum(i0 + 1, in_size - 1)
    lam1 = src - i0.astype(jnp.float32)
    lam0 = 1.0 - lam1
    return (lam0[:, None] * jax.nn.one_hot(i0, in_size, dtype=jnp.float32)
            + lam1[:, None] * jax.nn.one_hot(i1, in_size, dtype=jnp.float32))


def teab_forward(x_nchw, params):
    n, c, h, w = x_nchw.shape
    assert h % 2 == 0 and w % 2 == 0 and h >= 8 and w >= 8, "need even spatial dims >= 8"
    f = c // 4
    c6 = 6 * f
    h2, w2 = h // 2, w // 2
    m2b = h2 * w2
    h3 = (h2 - 4) // 2 + 1
    w3 = (w2 - 4) // 2 + 1
    p3 = h3 * w3
    x32 = x_nchw.astype(jnp.float32)

    # The six stride-2 branch convs only read c1 at (even,even), (odd,even) and
    # (even,odd) positions -> stream exactly those three phases of x (bf16).
    x_ee = x32[:, :, 0::2, 0::2].reshape(n, c, m2b).astype(MATMUL_DTYPE)
    x_oe = x32[:, :, 1::2, 0::2].reshape(n, c, m2b).astype(MATMUL_DTYPE)
    x_eo = x32[:, :, 0::2, 1::2].reshape(n, c, m2b).astype(MATMUL_DTYPE)

    # grid-invariant weights, pre-cast once in glue
    w1 = params["w_conv1"][:, :, 0, 0].astype(MATMUL_DTYPE)                  # (f, C)
    b1 = params["b_conv1"].reshape(f, 1).astype(jnp.float32)
    wv = jnp.transpose(params["w_v"][:, :, :, 0], (2, 0, 1)).astype(MATMUL_DTYPE)  # (3,f,f)
    wh = jnp.transpose(params["w_h"][:, :, 0, :], (2, 0, 1)).astype(MATMUL_DTYPE)  # (3,f,f)
    bv = params["b_v"].reshape(f, 1).astype(jnp.float32)
    bh = params["b_h"].reshape(f, 1).astype(jnp.float32)

    z, stats = branch_stage(x_ee, x_oe, x_eo, w1, b1, wv, bv, wh, bh, h2=h2, w2=w2)

    # BatchNorm2d(f) train-mode statistics (global over batch+spatial, per fused channel)
    tot = jnp.sum(stats, axis=0)                                             # (c6, 2)
    cnt = float(n * m2b)
    mean = tot[:, 0] / cnt
    var = jnp.maximum(tot[:, 1] / cnt - mean * mean, 0.0)
    inv = jax.lax.rsqrt(var + 1e-5)
    gamma6 = jnp.tile(params["bn_gamma"], 6)
    beta6 = jnp.tile(params["bn_beta"], 6)
    scale = (gamma6 * inv).reshape(c6, 1).astype(jnp.float32)
    shift = (beta6 - mean * gamma6 * inv).reshape(c6, 1).astype(jnp.float32)

    # static helper matrices for the tail kernel
    sel = np.zeros((m2b, p3), np.float32)          # maxpool(4,2) window-origin selection
    for i in range(h3):
        for j in range(w3):
            sel[(2 * i) * w2 + 2 * j, i * w3 + j] = 1.0
    sel = jnp.asarray(sel)
    ah = _bilinear_matrix(h, h3)                                             # (H, h3)
    aw = _bilinear_matrix(w, w3)                                             # (W, w3)
    up_mat = (ah.T[:, None, :, None] * aw.T[None, :, None, :]).reshape(p3, h * w)
    up_mat = up_mat.astype(jnp.float32)

    w3p = jnp.transpose(params["w_conv3"], (2, 3, 0, 1)).reshape(9, c6, c6)
    w3p = w3p.astype(MATMUL_DTYPE)
    b3 = params["b_conv3"].reshape(c6, 1).astype(jnp.float32)
    wf = params["w_convf"][:, :, 0, 0].astype(MATMUL_DTYPE)                  # (C, 6f)
    bfb = params["b_convf"].reshape(c, 1).astype(jnp.float32)

    x_cm = x32.reshape(n, c, h * w)                # residual, channel-major (free reshape)
    out = tail_stage(z, scale, shift, sel, w3p, b3, wf, bfb, up_mat, x_cm,
                     h2=h2, w2=w2, h3=h3, w3=w3)
    return out.reshape(n, c, h, w)                 # NCHW, like PyTorch


# ---------------------------------------------------------------------------
# Deterministic parameter init (shapes match the PyTorch module's __init__)
# ---------------------------------------------------------------------------
def init_params(key, n_feats):
    f = n_feats // 4
    ks = jax.random.split(key, 10)

    def nrm(k, shape, scale=0.1):
        return scale * jax.random.normal(k, shape, jnp.float32)

    return dict(
        w_conv1=nrm(ks[0], (f, n_feats, 1, 1)),
        b_conv1=nrm(ks[1], (f,)),
        w_v=jax.random.normal(ks[2], (f, f, 3, 1), jnp.float32),
        b_v=jax.random.normal(ks[3], (f,), jnp.float32),
        w_h=jax.random.normal(ks[4], (f, f, 1, 3), jnp.float32),
        b_h=jax.random.normal(ks[5], (f,), jnp.float32),
        w_conv3=nrm(ks[6], (6 * f, 6 * f, 3, 3)),
        b_conv3=nrm(ks[7], (6 * f,)),
        w_convf=nrm(ks[8], (n_feats, 6 * f, 1, 1)),
        b_convf=nrm(ks[9], (n_feats,)),
        bn_gamma=jnp.ones((f,), jnp.float32),      # BatchNorm2d default init
        bn_beta=jnp.zeros((f,), jnp.float32),
    )


if __name__ == "__main__":
    n_feats = 16
    key = jax.random.PRNGKey(0)
    kx, kp = jax.random.split(key)
    x = jax.random.normal(kx, (2, n_feats, 16, 16), jnp.float32)   # NCHW like PyTorch
    params = init_params(kp, n_feats)

    fwd = jax.jit(teab_forward)
    out = jax.block_until_ready(fwd(x, params))

    assert out.shape == x.shape, (out.shape, x.shape)
    assert bool(jnp.all(jnp.isfinite(out)))
    print("KERNEL_OK")
</pallas_src>

<mosaic_0001>
module attributes {stable_mosaic.version = 11 : i64} {
  func.func @_branch_kernel(%arg0: i32, %arg1: memref<1x16x64xbf16, #tpu.memory_space<vmem>>, %arg2: memref<1x16x64xbf16, #tpu.memory_space<vmem>>, %arg3: memref<1x16x64xbf16, #tpu.memory_space<vmem>>, %arg4: memref<4x16xbf16, #tpu.memory_space<vmem>>, %arg5: memref<4x1xf32, #tpu.memory_space<vmem>>, %arg6: memref<3x4x4xbf16, #tpu.memory_space<vmem>>, %arg7: memref<4x1xf32, #tpu.memory_space<vmem>>, %arg8: memref<3x4x4xbf16, #tpu.memory_space<vmem>>, %arg9: memref<4x1xf32, #tpu.memory_space<vmem>>, %arg10: memref<1x24x64xf32, #tpu.memory_space<vmem>>, %arg11: memref<1x24x2xf32, #tpu.memory_space<vmem>>) attributes {dimension_semantics = [#tpu.dimension_semantics<parallel>], iteration_bounds = array<i64: 2>, scalar_prefetch = 0 : i64, scratch_operands = 0 : i64, tpu.core_type = #tpu.core_type<tc>, window_params = [{transform_indices = @transform_0, window_bounds = array<i64: 1, 16, 64>}, {transform_indices = @transform_1, window_bounds = array<i64: 1, 16, 64>}, {transform_indices = @transform_2, window_bounds = array<i64: 1, 16, 64>}, {pipeline_mode = #tpu.pipeline_mode<synchronous>, transform_indices = @transform_3, window_bounds = array<i64: 4, 16>}, {pipeline_mode = #tpu.pipeline_mode<synchronous>, transform_indices = @transform_4, window_bounds = array<i64: 4, 1>}, {pipeline_mode = #tpu.pipeline_mode<synchronous>, transform_indices = @transform_5, window_bounds = array<i64: 3, 4, 4>}, {pipeline_mode = #tpu.pipeline_mode<synchronous>, transform_indices = @transform_6, window_bounds = array<i64: 4, 1>}, {pipeline_mode = #tpu.pipeline_mode<synchronous>, transform_indices = @transform_7, window_bounds = array<i64: 3, 4, 4>}, {pipeline_mode = #tpu.pipeline_mode<synchronous>, transform_indices = @transform_8, window_bounds = array<i64: 4, 1>}, {transform_indices = @transform_9, window_bounds = array<i64: 1, 24, 64>}, {transform_indices = @transform_10, window_bounds = array<i64: 1, 24, 2>}]} {
    %c0 = arith.constant 0 : index
    %c0_0 = arith.constant 0 : index
    %0 = vector.load %arg4[%c0, %c0_0] : memref<4x16xbf16, #tpu.memory_space<vmem>>, vector<4x16xbf16>
    %c0_1 = arith.constant 0 : index
    %c0_2 = arith.constant 0 : index
    %c0_3 = arith.constant 0 : index
    %1 = vector.load %arg1[%c0_1, %c0_2, %c0_3] : memref<1x16x64xbf16, #tpu.memory_space<vmem>>, vector<1x16x64xbf16>
    %2 = vector.shape_cast %1 : vector<1x16x64xbf16> to vector<16x64xbf16>
    %cst = arith.constant dense<0.000000e+00> : vector<4x64xf32>
    %3 = tpu.matmul %0, %2, %cst {dimension_numbers = #tpu.dot_dimension_numbers<[1], [0], [0], [1], [0, 0, 1, 1], [], []>} : vector<4x16xbf16>, vector<16x64xbf16>, vector<4x64xf32> -> vector<4x64xf32>
    %c0_4 = arith.constant 0 : index
    %c0_5 = arith.constant 0 : index
    %4 = vector.load %arg5[%c0_4, %c0_5] : memref<4x1xf32, #tpu.memory_space<vmem>>, vector<4x1xf32>
    %5 = vector.broadcast %4 : vector<4x1xf32> to vector<4x64xf32>
    %6 = arith.addf %3, %5 : vector<4x64xf32>
    %7 = arith.truncf %6 : vector<4x64xf32> to vector<4x64xbf16>
    %c0_6 = arith.constant 0 : index
    %c0_7 = arith.constant 0 : index
    %c0_8 = arith.constant 0 : index
    %8 = vector.load %arg2[%c0_6, %c0_7, %c0_8] : memref<1x16x64xbf16, #tpu.memory_space<vmem>>, vector<1x16x64xbf16>
    %9 = vector.shape_cast %8 : vector<1x16x64xbf16> to vector<16x64xbf16>
    %cst_9 = arith.constant dense<0.000000e+00> : vector<4x64xf32>
    %10 = tpu.matmul %0, %9, %cst_9 {dimension_numbers = #tpu.dot_dimension_numbers<[1], [0], [0], [1], [0, 0, 1, 1], [], []>} : vector<4x16xbf16>, vector<16x64xbf16>, vector<4x64xf32> -> vector<4x64xf32>
    %c0_10 = arith.constant 0 : index
    %c0_11 = arith.constant 0 : index
    %11 = vector.load %arg5[%c0_10, %c0_11] : memref<4x1xf32, #tpu.memory_space<vmem>>, vector<4x1xf32>
    %12 = vector.broadcast %11 : vector<4x1xf32> to vector<4x64xf32>
    %13 = arith.addf %10, %12 : vector<4x64xf32>
    %14 = arith.truncf %13 : vector<4x64xf32> to vector<4x64xbf16>
    %c0_12 = arith.constant 0 : index
    %c0_13 = arith.constant 0 : index
    %c0_14 = arith.constant 0 : index
    %15 = vector.load %arg3[%c0_12, %c0_13, %c0_14] : memref<1x16x64xbf16, #tpu.memory_space<vmem>>, vector<1x16x64xbf16>
    %16 = vector.shape_cast %15 : vector<1x16x64xbf16> to vector<16x64xbf16>
    %cst_15 = arith.constant dense<0.000000e+00> : vector<4x64xf32>
    %17 = tpu.matmul %0, %16, %cst_15 {dimension_numbers = #tpu.dot_dimension_numbers<[1], [0], [0], [1], [0, 0, 1, 1], [], []>} : vector<4x16xbf16>, vector<16x64xbf16>, vector<4x64xf32> -> vector<4x64xf32>
    %c0_16 = arith.constant 0 : index
    %c0_17 = arith.constant 0 : index
    %18 = vector.load %arg5[%c0_16, %c0_17] : memref<4x1xf32, #tpu.memory_space<vmem>>, vector<4x1xf32>
    %19 = vector.broadcast %18 : vector<4x1xf32> to vector<4x64xf32>
    %20 = arith.addf %17, %19 : vector<4x64xf32>
    %21 = arith.truncf %20 : vector<4x64xf32> to vector<4x64xbf16>
    %c0_18 = arith.constant 0 : index
    %c0_19 = arith.constant 0 : index
    %c0_20 = arith.constant 0 : index
    %22 = vector.load %arg6[%c0_18, %c0_19, %c0_20] : memref<3x4x4xbf16, #tpu.memory_space<vmem>>, vector<1x4x4xbf16>
    %23 = vector.shape_cast %22 : vector<1x4x4xbf16> to vector<4x4xbf16>
    %c1 = arith.constant 1 : index
    %c0_21 = arith.constant 0 : index
    %c0_22 = arith.constant 0 : index
    %24 = vector.load %arg6[%c1, %c0_21, %c0_22] : memref<3x4x4xbf16, #tpu.memory_space<vmem>>, vector<1x4x4xbf16>
    %25 = vector.shape_cast %24 : vector<1x4x4xbf16> to vector<4x4xbf16>
    %c2 = arith.constant 2 : index
    %c0_23 = arith.constant 0 : index
    %c0_24 = arith.constant 0 : index
    %26 = vector.load %arg6[%c2, %c0_23, %c0_24] : memref<3x4x4xbf16, #tpu.memory_space<vmem>>, vector<1x4x4xbf16>
    %27 = vector.shape_cast %26 : vector<1x4x4xbf16> to vector<4x4xbf16>
    %c0_25 = arith.constant 0 : index
    %c0_26 = arith.constant 0 : index
    %c0_27 = arith.constant 0 : index
    %28 = vector.load %arg8[%c0_25, %c0_26, %c0_27] : memref<3x4x4xbf16, #tpu.memory_space<vmem>>, vector<1x4x4xbf16>
    %29 = vector.shape_cast %28 : vector<1x4x4xbf16> to vector<4x4xbf16>
    %c1_28 = arith.constant 1 : index
    %c0_29 = arith.constant 0 : index
    %c0_30 = arith.constant 0 : index
    %30 = vector.load %arg8[%c1_28, %c0_29, %c0_30] : memref<3x4x4xbf16, #tpu.memory_space<vmem>>, vector<1x4x4xbf16>
    %31 = vector.shape_cast %30 : vector<1x4x4xbf16> to vector<4x4xbf16>
    %c2_31 = arith.constant 2 : index
    %c0_32 = arith.constant 0 : index
    %c0_33 = arith.constant 0 : index
    %32 = vector.load %arg8[%c2_31, %c0_32, %c0_33] : memref<3x4x4xbf16, #tpu.memory_space<vmem>>, vector<1x4x4xbf16>
    %33 = vector.shape_cast %32 : vector<1x4x4xbf16> to vector<4x4xbf16>
    %c0_34 = arith.constant 0 : index
    %c0_35 = arith.constant 0 : index
    %34 = vector.load %arg7[%c0_34, %c0_35] : memref<4x1xf32, #tpu.memory_space<vmem>>, vector<4x1xf32>
    %c0_36 = arith.constant 0 : index
    %c0_37 = arith.constant 0 : index
    %35 = vector.load %arg9[%c0_36, %c0_37] : memref<4x1xf32, #tpu.memory_space<vmem>>, vector<4x1xf32>
    %cst_38 = arith.constant dense<0.000000e+00> : vector<4x64xf32>
    %36 = tpu.matmul %25, %7, %cst_38 {dimension_numbers = #tpu.dot_dimension_numbers<[1], [0], [0], [1], [0, 0, 1, 1], [], []>} : vector<4x4xbf16>, vector<4x64xbf16>, vector<4x64xf32> -> vector<4x64xf32>
    %cst_39 = arith.constant dense<0.000000e+00> : vector<4x64xf32>
    %37 = tpu.matmul %31, %7, %cst_39 {dimension_numbers = #tpu.dot_dimension_numbers<[1], [0], [0], [1], [0, 0, 1, 1], [], []>} : vector<4x4xbf16>, vector<4x64xbf16>, vector<4x64xf32> -> vector<4x64xf32>
    %cst_40 = arith.constant 0.000000e+00 : bf16
    %38 = vector.broadcast %cst_40 : bf16 to vector<4x8xbf16>
    %39 = vector.extract_strided_slice %14 {offsets = [0, 0], sizes = [4, 56], strides = [1, 1]} : vector<4x64xbf16> to vector<4x56xbf16>
    %40 = tpu.concatenate %38, %39 in 1 : vector<4x8xbf16>, vector<4x56xbf16> -> vector<4x64xbf16>
    %cst_41 = arith.constant 0.000000e+00 : bf16
    %41 = vector.broadcast %cst_41 : bf16 to vector<4x8xbf16>
    %42 = vector.extract_strided_slice %7 {offsets = [0, 0], sizes = [4, 56], strides = [1, 1]} : vector<4x64xbf16> to vector<4x56xbf16>
    %43 = tpu.concatenate %41, %42 in 1 : vector<4x8xbf16>, vector<4x56xbf16> -> vector<4x64xbf16>
    %44 = vector.extract_strided_slice %7 {offsets = [0, 8], sizes = [4, 56], strides = [1, 1]} : vector<4x64xbf16> to vector<4x56xbf16>
    %cst_42 = arith.constant 0.000000e+00 : bf16
    %45 = vector.broadcast %cst_42 : bf16 to vector<4x8xbf16>
    %46 = tpu.concatenate %44, %45 in 1 : vector<4x56xbf16>, vector<4x8xbf16> -> vector<4x64xbf16>
    %cst_43 = arith.constant 0.000000e+00 : bf16
    %47 = vector.broadcast %cst_43 : bf16 to vector<4x16xbf16>
    %48 = vector.extract_strided_slice %14 {offsets = [0, 0], sizes = [4, 48], strides = [1, 1]} : vector<4x64xbf16> to vector<4x48xbf16>
    %49 = tpu.concatenate %47, %48 in 1 : vector<4x16xbf16>, vector<4x48xbf16> -> vector<4x64xbf16>
    %50 = vector.extract_strided_slice %14 {offsets = [0, 8], sizes = [4, 56], strides = [1, 1]} : vector<4x64xbf16> to vector<4x56xbf16>
    %cst_44 = arith.constant 0.000000e+00 : bf16
    %51 = vector.broadcast %cst_44 : bf16 to vector<4x8xbf16>
    %52 = tpu.concatenate %50, %51 in 1 : vector<4x56xbf16>, vector<4x8xbf16> -> vector<4x64xbf16>
    %cst_45 = arith.constant 0.000000e+00 : bf16
    %53 = vector.broadcast %cst_45 : bf16 to vector<4x1xbf16>
    %54 = vector.extract_strided_slice %21 {offsets = [0, 0], sizes = [4, 63], strides = [1, 1]} : vector<4x64xbf16> to vector<4x63xbf16>
    %55 = tpu.concatenate %53, %54 in 1 : vector<4x1xbf16>, vector<4x63xbf16> -> vector<4x64xbf16>
    %56 = tpu.iota {dimensions = array<i32: 1>} : vector<1x64xi32>
    %c8_i32 = arith.constant 8 : i32
    %c0_i32 = arith.constant 0 : i32
    %57 = arith.cmpi eq, %c8_i32, %c0_i32 : i32
    %c1_i32 = arith.constant 1 : i32
    %58 = arith.select %57, %c1_i32, %c8_i32 : i32
    %59 = vector.broadcast %58 : i32 to vector<1x64xi32>
    %60 = arith.remsi %56, %59 : vector<1x64xi32>
    %c0_i32_46 = arith.constant 0 : i32
    %61 = vector.broadcast %c0_i32_46 : i32 to vector<1x64xi32>
    %62 = arith.cmpi ne, %60, %61 : vector<1x64xi32>
    %c0_i32_47 = arith.constant 0 : i32
    %63 = vector.broadcast %c0_i32_47 : i32 to vector<1x64xi32>
    %64 = arith.cmpi slt, %60, %63 : vector<1x64xi32>
    %c0_i32_48 = arith.constant 0 : i32
    %65 = arith.cmpi slt, %58, %c0_i32_48 : i32
    %66 = vector.broadcast %65 : i1 to vector<1x64xi1>
    %67 = vector.broadcast %66 : vector<1x64xi1> to vector<1x64xi1>
    %68 = arith.xori %64, %67 : vector<1x64xi1>
    %69 = arith.andi %68, %62 : vector<1x64xi1>
    %70 = vector.broadcast %58 : i32 to vector<1x64xi32>
    %71 = arith.addi %60, %70 : vector<1x64xi32>
    %72 = arith.select %69, %71, %60 : vector<1x64xi1>, vector<1x64xi32>
    %c1_i32_49 = arith.constant 1 : i32
    %73 = vector.broadcast %c1_i32_49 : i32 to vector<1x64xi32>
    %74 = arith.cmpi sge, %72, %73 : vector<1x64xi32>
    %cst_50 = arith.constant 0.000000e+00 : bf16
    %75 = vector.broadcast %cst_50 : bf16 to vector<4x64xbf16>
    %76 = vector.shape_cast %74 : vector<1x64xi1> to vector<1x64xi1>
    %77 = vector.broadcast %76 : vector<1x64xi1> to vector<4x64xi1>
    %78 = arith.select %77, %55, %75 : vector<4x64xi1>, vector<4x64xbf16>
    %cst_51 = arith.constant 0.000000e+00 : bf16
    %79 = vector.broadcast %cst_51 : bf16 to vector<4x1xbf16>
    %80 = vector.extract_strided_slice %7 {offsets = [0, 0], sizes = [4, 63], strides = [1, 1]} : vector<4x64xbf16> to vector<4x63xbf16>
    %81 = tpu.concatenate %79, %80 in 1 : vector<4x1xbf16>, vector<4x63xbf16> -> vector<4x64xbf16>
    %82 = tpu.iota {dimensions = array<i32: 1>} : vector<1x64xi32>
    %c8_i32_52 = arith.constant 8 : i32
    %c0_i32_53 = arith.constant 0 : i32
    %83 = arith.cmpi eq, %c8_i32_52, %c0_i32_53 : i32
    %c1_i32_54 = arith.constant 1 : i32
    %84 = arith.select %83, %c1_i32_54, %c8_i32_52 : i32
    %85 = vector.broadcast %84 : i32 to vector<1x64xi32>
    %86 = arith.remsi %82, %85 : vector<1x64xi32>
    %c0_i32_55 = arith.constant 0 : i32
    %87 = vector.broadcast %c0_i32_55 : i32 to vector<1x64xi32>
    %88 = arith.cmpi ne, %86, %87 : vector<1x64xi32>
    %c0_i32_56 = arith.constant 0 : i32
    %89 = vector.broadcast %c0_i32_56 : i32 to vector<1x64xi32>
    %90 = arith.cmpi slt, %86, %89 : vector<1x64xi32>
    %c0_i32_57 = arith.constant 0 : i32
    %91 = arith.cmpi slt, %84, %c0_i32_57 : i32
    %92 = vector.broadcast %91 : i1 to vector<1x64xi1>
    %93 = vector.broadcast %92 : vector<1x64xi1> to vector<1x64xi1>
    %94 = arith.xori %90, %93 : vector<1x64xi1>
    %95 = arith.andi %94, %88 : vector<1x64xi1>
    %96 = vector.broadcast %84 : i32 to vector<1x64xi32>
    %97 = arith.addi %86, %96 : vector<1x64xi32>
    %98 = arith.select %95, %97, %86 : vector<1x64xi1>, vector<1x64xi32>
    %c1_i32_58 = arith.constant 1 : i32
    %99 = vector.broadcast %c1_i32_58 : i32 to vector<1x64xi32>
    %100 = arith.cmpi sge, %98, %99 : vector<1x64xi32>
    %cst_59 = arith.constant 0.000000e+00 : bf16
    %101 = vector.broadcast %cst_59 : bf16 to vector<4x64xbf16>
    %102 = vector.shape_cast %100 : vector<1x64xi1> to vector<1x64xi1>
    %103 = vector.broadcast %102 : vector<1x64xi1> to vector<4x64xi1>
    %104 = arith.select %103, %81, %101 : vector<4x64xi1>, vector<4x64xbf16>
    %105 = vector.extract_strided_slice %7 {offsets = [0, 1], sizes = [4, 63], strides = [1, 1]} : vector<4x64xbf16> to vector<4x63xbf16>
    %cst_60 = arith.constant 0.000000e+00 : bf16
    %106 = vector.broadcast %cst_60 : bf16 to vector<4x1xbf16>
    %107 = tpu.concatenate %105, %106 in 1 : vector<4x63xbf16>, vector<4x1xbf16> -> vector<4x64xbf16>
    %108 = tpu.iota {dimensions = array<i32: 1>} : vector<1x64xi32>
    %c8_i32_61 = arith.constant 8 : i32
    %c0_i32_62 = arith.constant 0 : i32
    %109 = arith.cmpi eq, %c8_i32_61, %c0_i32_62 : i32
    %c1_i32_63 = arith.constant 1 : i32
    %110 = arith.select %109, %c1_i32_63, %c8_i32_61 : i32
    %111 = vector.broadcast %110 : i32 to vector<1x64xi32>
    %112 = arith.remsi %108, %111 : vector<1x64xi32>
    %c0_i32_64 = arith.constant 0 : i32
    %113 = vector.broadcast %c0_i32_64 : i32 to vector<1x64xi32>
    %114 = arith.cmpi ne, %112, %113 : vector<1x64xi32>
    %c0_i32_65 = arith.constant 0 : i32
    %115 = vector.broadcast %c0_i32_65 : i32 to vector<1x64xi32>
    %116 = arith.cmpi slt, %112, %115 : vector<1x64xi32>
    %c0_i32_66 = arith.constant 0 : i32
    %117 = arith.cmpi slt, %110, %c0_i32_66 : i32
    %118 = vector.broadcast %117 : i1 to vector<1x64xi1>
    %119 = vector.broadcast %118 : vector<1x64xi1> to vector<1x64xi1>
    %120 = arith.xori %116, %119 : vector<1x64xi1>
    %121 = arith.andi %120, %114 : vector<1x64xi1>
    %122 = vector.broadcast %110 : i32 to vector<1x64xi32>
    %123 = arith.addi %112, %122 : vector<1x64xi32>
    %124 = arith.select %121, %123, %112 : vector<1x64xi1>, vector<1x64xi32>
    %c7_i32 = arith.constant 7 : i32
    %125 = vector.broadcast %c7_i32 : i32 to vector<1x64xi32>
    %126 = arith.cmpi slt, %124, %125 : vector<1x64xi32>
    %cst_67 = arith.constant 0.000000e+00 : bf16
    %127 = vector.broadcast %cst_67 : bf16 to vector<4x64xbf16>
    %128 = vector.shape_cast %126 : vector<1x64xi1> to vector<1x64xi1>
    %129 = vector.broadcast %128 : vector<1x64xi1> to vector<4x64xi1>
    %130 = arith.select %129, %107, %127 : vector<4x64xi1>, vector<4x64xbf16>
    %cst_68 = arith.constant 0.000000e+00 : bf16
    %131 = vector.broadcast %cst_68 : bf16 to vector<4x2xbf16>
    %132 = vector.extract_strided_slice %21 {offsets = [0, 0], sizes = [4, 62], strides = [1, 1]} : vector<4x64xbf16> to vector<4x62xbf16>
    %133 = tpu.concatenate %131, %132 in 1 : vector<4x2xbf16>, vector<4x62xbf16> -> vector<4x64xbf16>
    %134 = tpu.iota {dimensions = array<i32: 1>} : vector<1x64xi32>
    %c8_i32_69 = arith.constant 8 : i32
    %c0_i32_70 = arith.constant 0 : i32
    %135 = arith.cmpi eq, %c8_i32_69, %c0_i32_70 : i32
    %c1_i32_71 = arith.constant 1 : i32
    %136 = arith.select %135, %c1_i32_71, %c8_i32_69 : i32
    %137 = vector.broadcast %136 : i32 to vector<1x64xi32>
    %138 = arith.remsi %134, %137 : vector<1x64xi32>
    %c0_i32_72 = arith.constant 0 : i32
    %139 = vector.broadcast %c0_i32_72 : i32 to vector<1x64xi32>
    %140 = arith.cmpi ne, %138, %139 : vector<1x64xi32>
    %c0_i32_73 = arith.constant 0 : i32
    %141 = vector.broadcast %c0_i32_73 : i32 to vector<1x64xi32>
    %142 = arith.cmpi slt, %138, %141 : vector<1x64xi32>
    %c0_i32_74 = arith.constant 0 : i32
    %143 = arith.cmpi slt, %136, %c0_i32_74 : i32
    %144 = vector.broadcast %143 : i1 to vector<1x64xi1>
    %145 = vector.broadcast %144 : vector<1x64xi1> to vector<1x64xi1>
    %146 = arith.xori %142, %145 : vector<1x64xi1>
    %147 = arith.andi %146, %140 : vector<1x64xi1>
    %148 = vector.broadcast %136 : i32 to vector<1x64xi32>
    %149 = arith.addi %138, %148 : vector<1x64xi32>
    %150 = arith.select %147, %149, %138 : vector<1x64xi1>, vector<1x64xi32>
    %c2_i32 = arith.constant 2 : i32
    %151 = vector.broadcast %c2_i32 : i32 to vector<1x64xi32>
    %152 = arith.cmpi sge, %150, %151 : vector<1x64xi32>
    %cst_75 = arith.constant 0.000000e+00 : bf16
    %153 = vector.broadcast %cst_75 : bf16 to vector<4x64xbf16>
    %154 = vector.shape_cast %152 : vector<1x64xi1> to vector<1x64xi1>
    %155 = vector.broadcast %154 : vector<1x64xi1> to vector<4x64xi1>
    %156 = arith.select %155, %133, %153 : vector<4x64xi1>, vector<4x64xbf16>
    %157 = vector.extract_strided_slice %21 {offsets = [0, 1], sizes = [4, 63], strides = [1, 1]} : vector<4x64xbf16> to vector<4x63xbf16>
    %cst_76 = arith.constant 0.000000e+00 : bf16
    %158 = vector.broadcast %cst_76 : bf16 to vector<4x1xbf16>
    %159 = tpu.concatenate %157, %158 in 1 : vector<4x63xbf16>, vector<4x1xbf16> -> vector<4x64xbf16>
    %160 = tpu.iota {dimensions = array<i32: 1>} : vector<1x64xi32>
    %c8_i32_77 = arith.constant 8 : i32
    %c0_i32_78 = arith.constant 0 : i32
    %161 = arith.cmpi eq, %c8_i32_77, %c0_i32_78 : i32
    %c1_i32_79 = arith.constant 1 : i32
    %162 = arith.select %161, %c1_i32_79, %c8_i32_77 : i32
    %163 = vector.broadcast %162 : i32 to vector<1x64xi32>
    %164 = arith.remsi %160, %163 : vector<1x64xi32>
    %c0_i32_80 = arith.constant 0 : i32
    %165 = vector.broadcast %c0_i32_80 : i32 to vector<1x64xi32>
    %166 = arith.cmpi ne, %164, %165 : vector<1x64xi32>
    %c0_i32_81 = arith.constant 0 : i32
    %167 = vector.broadcast %c0_i32_81 : i32 to vector<1x64xi32>
    %168 = arith.cmpi slt, %164, %167 : vector<1x64xi32>
    %c0_i32_82 = arith.constant 0 : i32
    %169 = arith.cmpi slt, %162, %c0_i32_82 : i32
    %170 = vector.broadcast %169 : i1 to vector<1x64xi1>
    %171 = vector.broadcast %170 : vector<1x64xi1> to vector<1x64xi1>
    %172 = arith.xori %168, %171 : vector<1x64xi1>
    %173 = arith.andi %172, %166 : vector<1x64xi1>
    %174 = vector.broadcast %162 : i32 to vector<1x64xi32>
    %175 = arith.addi %164, %174 : vector<1x64xi32>
    %176 = arith.select %173, %175, %164 : vector<1x64xi1>, vector<1x64xi32>
    %c7_i32_83 = arith.constant 7 : i32
    %177 = vector.broadcast %c7_i32_83 : i32 to vector<1x64xi32>
    %178 = arith.cmpi slt, %176, %177 : vector<1x64xi32>
    %cst_84 = arith.constant 0.000000e+00 : bf16
    %179 = vector.broadcast %cst_84 : bf16 to vector<4x64xbf16>
    %180 = vector.shape_cast %178 : vector<1x64xi1> to vector<1x64xi1>
    %181 = vector.broadcast %180 : vector<1x64xi1> to vector<4x64xi1>
    %182 = arith.select %181, %159, %179 : vector<4x64xi1>, vector<4x64xbf16>
    %cst_85 = arith.constant dense<0.000000e+00> : vector<4x64xf32>
    %183 = tpu.matmul %23, %40, %cst_85 {dimension_numbers = #tpu.dot_dimension_numbers<[1], [0], [0], [1], [0, 0, 1, 1], [], []>} : vector<4x4xbf16>, vector<4x64xbf16>, vector<4x64xf32> -> vector<4x64xf32>
    %184 = arith.addf %36, %183 : vector<4x64xf32>
    %cst_86 = arith.constant dense<0.000000e+00> : vector<4x64xf32>
    %185 = tpu.matmul %27, %14, %cst_86 {dimension_numbers = #tpu.dot_dimension_numbers<[1], [0], [0], [1], [0, 0, 1, 1], [], []>} : vector<4x4xbf16>, vector<4x64xbf16>, vector<4x64xf32> -> vector<4x64xf32>
    %186 = arith.addf %184, %185 : vector<4x64xf32>
    %187 = vector.broadcast %34 : vector<4x1xf32> to vector<4x64xf32>
    %188 = arith.addf %186, %187 : vector<4x64xf32>
    %cst_87 = arith.constant dense<0.000000e+00> : vector<4x64xf32>
    %189 = tpu.matmul %23, %43, %cst_87 {dimension_numbers = #tpu.dot_dimension_numbers<[1], [0], [0], [1], [0, 0, 1, 1], [], []>} : vector<4x4xbf16>, vector<4x64xbf16>, vector<4x64xf32> -> vector<4x64xf32>
    %190 = arith.addf %36, %189 : vector<4x64xf32>
    %cst_88 = arith.constant dense<0.000000e+00> : vector<4x64xf32>
    %191 = tpu.matmul %27, %46, %cst_88 {dimension_numbers = #tpu.dot_dimension_numbers<[1], [0], [0], [1], [0, 0, 1, 1], [], []>} : vector<4x4xbf16>, vector<4x64xbf16>, vector<4x64xf32> -> vector<4x64xf32>
    %192 = arith.addf %190, %191 : vector<4x64xf32>
    %193 = vector.broadcast %34 : vector<4x1xf32> to vector<4x64xf32>
    %194 = arith.addf %192, %193 : vector<4x64xf32>
    %cst_89 = arith.constant dense<0.000000e+00> : vector<4x64xf32>
    %195 = tpu.matmul %23, %49, %cst_89 {dimension_numbers = #tpu.dot_dimension_numbers<[1], [0], [0], [1], [0, 0, 1, 1], [], []>} : vector<4x4xbf16>, vector<4x64xbf16>, vector<4x64xf32> -> vector<4x64xf32>
    %196 = arith.addf %36, %195 : vector<4x64xf32>
    %cst_90 = arith.constant dense<0.000000e+00> : vector<4x64xf32>
    %197 = tpu.matmul %27, %52, %cst_90 {dimension_numbers = #tpu.dot_dimension_numbers<[1], [0], [0], [1], [0, 0, 1, 1], [], []>} : vector<4x4xbf16>, vector<4x64xbf16>, vector<4x64xf32> -> vector<4x64xf32>
    %198 = arith.addf %196, %197 : vector<4x64xf32>
    %199 = vector.broadcast %34 : vector<4x1xf32> to vector<4x64xf32>
    %200 = arith.addf %198, %199 : vector<4x64xf32>
    %cst_91 = arith.constant dense<0.000000e+00> : vector<4x64xf32>
    %201 = tpu.matmul %29, %78, %cst_91 {dimension_numbers = #tpu.dot_dimension_numbers<[1], [0], [0], [1], [0, 0, 1, 1], [], []>} : vector<4x4xbf16>, vector<4x64xbf16>, vector<4x64xf32> -> vector<4x64xf32>
    %202 = arith.addf %37, %201 : vector<4x64xf32>
    %cst_92 = arith.constant dense<0.000000e+00> : vector<4x64xf32>
    %203 = tpu.matmul %33, %21, %cst_92 {dimension_numbers = #tpu.dot_dimension_numbers<[1], [0], [0], [1], [0, 0, 1, 1], [], []>} : vector<4x4xbf16>, vector<4x64xbf16>, vector<4x64xf32> -> vector<4x64xf32>
    %204 = arith.addf %202, %203 : vector<4x64xf32>
    %205 = vector.broadcast %35 : vector<4x1xf32> to vector<4x64xf32>
    %206 = arith.addf %204, %205 : vector<4x64xf32>
    %cst_93 = arith.constant dense<0.000000e+00> : vector<4x64xf32>
    %207 = tpu.matmul %29, %104, %cst_93 {dimension_numbers = #tpu.dot_dimension_numbers<[1], [0], [0], [1], [0, 0, 1, 1], [], []>} : vector<4x4xbf16>, vector<4x64xbf16>, vector<4x64xf32> -> vector<4x64xf32>
    %208 = arith.addf %37, %207 : vector<4x64xf32>
    %cst_94 = arith.constant dense<0.000000e+00> : vector<4x64xf32>
    %209 = tpu.matmul %33, %130, %cst_94 {dimension_numbers = #tpu.dot_dimension_numbers<[1], [0], [0], [1], [0, 0, 1, 1], [], []>} : vector<4x4xbf16>, vector<4x64xbf16>, vector<4x64xf32> -> vector<4x64xf32>
    %210 = arith.addf %208, %209 : vector<4x64xf32>
    %211 = vector.broadcast %35 : vector<4x1xf32> to vector<4x64xf32>
    %212 = arith.addf %210, %211 : vector<4x64xf32>
    %cst_95 = arith.constant dense<0.000000e+00> : vector<4x64xf32>
    %213 = tpu.matmul %29, %156, %cst_95 {dimension_numbers = #tpu.dot_dimension_numbers<[1], [0], [0], [1], [0, 0, 1, 1], [], []>} : vector<4x4xbf16>, vector<4x64xbf16>, vector<4x64xf32> -> vector<4x64xf32>
    %214 = arith.addf %37, %213 : vector<4x64xf32>
    %cst_96 = arith.constant dense<0.000000e+00> : vector<4x64xf32>
    %215 = tpu.matmul %33, %182, %cst_96 {dimension_numbers = #tpu.dot_dimension_numbers<[1], [0], [0], [1], [0, 0, 1, 1], [], []>} : vector<4x4xbf16>, vector<4x64xbf16>, vector<4x64xf32> -> vector<4x64xf32>
    %216 = arith.addf %214, %215 : vector<4x64xf32>
    %217 = vector.broadcast %35 : vector<4x1xf32> to vector<4x64xf32>
    %218 = arith.addf %216, %217 : vector<4x64xf32>
    %219 = tpu.concatenate %188, %194, %200, %206, %212, %218 in 0 : vector<4x64xf32>, vector<4x64xf32>, vector<4x64xf32>, vector<4x64xf32>, vector<4x64xf32>, vector<4x64xf32> -> vector<24x64xf32>
    %c0_97 = arith.constant 0 : index
    %c0_98 = arith.constant 0 : index
    %c0_99 = arith.constant 0 : index
    %220 = vector.load %arg10[%c0_97, %c0_98, %c0_99] : memref<1x24x64xf32, #tpu.memory_space<vmem>>, vector<1x24x64xf32>
    %221 = vector.shape_cast %220 : vector<1x24x64xf32> to vector<24x64xf32>
    %222 = vector.shape_cast %219 : vector<24x64xf32> to vector<1x24x64xf32>
    tpu.vector_store %arg10[%c0_97, %c0_98, %c0_99], %222 {strides = array<i32>} : memref<1x24x64xf32, #tpu.memory_space<vmem>>, vector<1x24x64xf32>,
    %cst_100 = arith.constant dense<0.000000e+00> : vector<24xf32>
    %223 = vector.multi_reduction <add>, %219, %cst_100 [1] : vector<24x64xf32> to vector<24xf32>
    %224 = vector.shape_cast %223 : vector<24xf32> to vector<24x1xf32>
    %225 = arith.mulf %219, %219 : vector<24x64xf32>
    %cst_101 = arith.constant dense<0.000000e+00> : vector<24xf32>
    %226 = vector.multi_reduction <add>, %225, %cst_101 [1] : vector<24x64xf32> to vector<24xf32>
    %227 = vector.shape_cast %226 : vector<24xf32> to vector<24x1xf32>
    %228 = tpu.concatenate %224, %227 in 1 : vector<24x1xf32>, vector<24x1xf32> -> vector<24x2xf32>
    %c0_102 = arith.constant 0 : index
    %c0_103 = arith.constant 0 : index
    %c0_104 = arith.constant 0 : index
    %229 = vector.load %arg11[%c0_102, %c0_103, %c0_104] : memref<1x24x2xf32, #tpu.memory_space<vmem>>, vector<1x24x2xf32>
    %230 = vector.shape_cast %229 : vector<1x24x2xf32> to vector<24x2xf32>
    %231 = vector.shape_cast %228 : vector<24x2xf32> to vector<1x24x2xf32>
    tpu.vector_store %arg11[%c0_102, %c0_103, %c0_104], %231 {strides = array<i32>} : memref<1x24x2xf32, #tpu.memory_space<vmem>>, vector<1x24x2xf32>,
    return
  }
  func.func @transform_0(%arg0: i32) -> (i32, i32, i32) {
    %c0_i32 = arith.constant 0 : i32
    %c0_i32_0 = arith.constant 0 : i32
    %c0_i32_1 = arith.constant 0 : i32
    return %arg0, %c0_i32, %c0_i32_0 : i32, i32, i32
  }
  func.func @transform_1(%arg0: i32) -> (i32, i32, i32) {
    %c0_i32 = arith.constant 0 : i32
    %c0_i32_0 = arith.constant 0 : i32
    %c0_i32_1 = arith.constant 0 : i32
    return %arg0, %c0_i32, %c0_i32_0 : i32, i32, i32
  }
  func.func @transform_2(%arg0: i32) -> (i32, i32, i32) {
    %c0_i32 = arith.constant 0 : i32
    %c0_i32_0 = arith.constant 0 : i32
    %c0_i32_1 = arith.constant 0 : i32
    return %arg0, %c0_i32, %c0_i32_0 : i32, i32, i32
  }
  func.func @transform_3(%arg0: i32) -> (i32, i32) {
    %c0_i32 = arith.constant 0 : i32
    %c0_i32_0 = arith.constant 0 : i32
    %c0_i32_1 = arith.constant 0 : i32
    return %c0_i32, %c0_i32_0 : i32, i32
  }
  func.func @transform_4(%arg0: i32) -> (i32, i32) {
    %c0_i32 = arith.constant 0 : i32
    %c0_i32_0 = arith.constant 0 : i32
    %c0_i32_1 = arith.constant 0 : i32
    return %c0_i32, %c0_i32_0 : i32, i32
  }
  func.func @transform_5(%arg0: i32) -> (i32, i32, i32) {
    %c0_i32 = arith.constant 0 : i32
    %c0_i32_0 = arith.constant 0 : i32
    %c0_i32_1 = arith.constant 0 : i32
    %c0_i32_2 = arith.constant 0 : i32
    return %c0_i32, %c0_i32_0, %c0_i32_1 : i32, i32, i32
  }
  func.func @transform_6(%arg0: i32) -> (i32, i32) {
    %c0_i32 = arith.constant 0 : i32
    %c0_i32_0 = arith.constant 0 : i32
    %c0_i32_1 = arith.constant 0 : i32
    return %c0_i32, %c0_i32_0 : i32, i32
  }
  func.func @transform_7(%arg0: i32) -> (i32, i32, i32) {
    %c0_i32 = arith.constant 0 : i32
    %c0_i32_0 = arith.constant 0 : i32
    %c0_i32_1 = arith.constant 0 : i32
    %c0_i32_2 = arith.constant 0 : i32
    return %c0_i32, %c0_i32_0, %c0_i32_1 : i32, i32, i32
  }
  func.func @transform_8(%arg0: i32) -> (i32, i32) {
    %c0_i32 = arith.constant 0 : i32
    %c0_i32_0 = arith.constant 0 : i32
    %c0_i32_1 = arith.constant 0 : i32
    return %c0_i32, %c0_i32_0 : i32, i32
  }
  func.func @transform_9(%arg0: i32) -> (i32, i32, i32) {
    %c0_i32 = arith.constant 0 : i32
    %c0_i32_0 = arith.constant 0 : i32
    %c0_i32_1 = arith.constant 0 : i32
    return %arg0, %c0_i32, %c0_i32_0 : i32, i32, i32
  }
  func.func @transform_10(%arg0: i32) -> (i32, i32, i32) {
    %c0_i32 = arith.constant 0 : i32
    %c0_i32_0 = arith.constant 0 : i32
    %c0_i32_1 = arith.constant 0 : i32
    return %arg0, %c0_i32, %c0_i32_0 : i32, i32, i32
  }
}

module attributes {stable_mosaic.version = 11 : i64} {
  func.func @_tail_kernel(%arg0: i32, %arg1: memref<1x24x64xf32, #tpu.memory_space<vmem>>, %arg2: memref<24x1xf32, #tpu.memory_space<vmem>>, %arg3: memref<24x1xf32, #tpu.memory_space<vmem>>, %arg4: memref<64x9xf32, #tpu.memory_space<vmem>>, %arg5: memref<9x24x24xbf16, #tpu.memory_space<vmem>>, %arg6: memref<24x1xf32, #tpu.memory_space<vmem>>, %arg7: memref<16x24xbf16, #tpu.memory_space<vmem>>, %arg8: memref<16x1xf32, #tpu.memory_space<vmem>>, %arg9: memref<9x256xf32, #tpu.memory_space<vmem>>, %arg10: memref<1x16x256xf32, #tpu.memory_space<vmem>>, %arg11: memref<1x16x256xf32, #tpu.memory_space<vmem>>) attributes {dimension_semantics = [#tpu.dimension_semantics<parallel>], iteration_bounds = array<i64: 2>, scalar_prefetch = 0 : i64, scratch_operands = 0 : i64, tpu.core_type = #tpu.core_type<tc>, window_params = [{transform_indices = @transform_0, window_bounds = array<i64: 1, 24, 64>}, {pipeline_mode = #tpu.pipeline_mode<synchronous>, transform_indices = @transform_1, window_bounds = array<i64: 24, 1>}, {pipeline_mode = #tpu.pipeline_mode<synchronous>, transform_indices = @transform_2, window_bounds = array<i64: 24, 1>}, {pipeline_mode = #tpu.pipeline_mode<synchronous>, transform_indices = @transform_3, window_bounds = array<i64: 64, 9>}, {pipeline_mode = #tpu.pipeline_mode<synchronous>, transform_indices = @transform_4, window_bounds = array<i64: 9, 24, 24>}, {pipeline_mode = #tpu.pipeline_mode<synchronous>, transform_indices = @transform_5, window_bounds = array<i64: 24, 1>}, {pipeline_mode = #tpu.pipeline_mode<synchronous>, transform_indices = @transform_6, window_bounds = array<i64: 16, 24>}, {pipeline_mode = #tpu.pipeline_mode<synchronous>, transform_indices = @transform_7, window_bounds = array<i64: 16, 1>}, {pipeline_mode = #tpu.pipeline_mode<synchronous>, transform_indices = @transform_8, window_bounds = array<i64: 9, 256>}, {transform_indices = @transform_9, window_bounds = array<i64: 1, 16, 256>}, {transform_indices = @transform_10, window_bounds = array<i64: 1, 16, 256>}]} {
    %c0 = arith.constant 0 : index
    %c0_0 = arith.constant 0 : index
    %c0_1 = arith.constant 0 : index
    %0 = vector.load %arg1[%c0, %c0_0, %c0_1] : memref<1x24x64xf32, #tpu.memory_space<vmem>>, vector<1x24x64xf32>
    %1 = vector.shape_cast %0 : vector<1x24x64xf32> to vector<24x64xf32>
    %c0_2 = arith.constant 0 : index
    %c0_3 = arith.constant 0 : index
    %2 = vector.load %arg2[%c0_2, %c0_3] : memref<24x1xf32, #tpu.memory_space<vmem>>, vector<24x1xf32>
    %3 = vector.broadcast %2 : vector<24x1xf32> to vector<24x64xf32>
    %4 = arith.mulf %1, %3 : vector<24x64xf32>
    %c0_4 = arith.constant 0 : index
    %c0_5 = arith.constant 0 : index
    %5 = vector.load %arg3[%c0_4, %c0_5] : memref<24x1xf32, #tpu.memory_space<vmem>>, vector<24x1xf32>
    %6 = vector.broadcast %5 : vector<24x1xf32> to vector<24x64xf32>
    %7 = arith.addf %4, %6 : vector<24x64xf32>
    %cst = arith.constant 0.000000e+00 : f32
    %8 = vector.broadcast %cst : f32 to vector<24x64xf32>
    %9 = arith.maximumf %7, %8 : vector<24x64xf32>
    %10 = vector.extract_strided_slice %9 {offsets = [0, 1], sizes = [24, 63], strides = [1, 1]} : vector<24x64xf32> to vector<24x63xf32>
    %cst_6 = arith.constant 0.000000e+00 : f32
    %11 = vector.broadcast %cst_6 : f32 to vector<24x1xf32>
    %12 = tpu.concatenate %10, %11 in 1 : vector<24x63xf32>, vector<24x1xf32> -> vector<24x64xf32>
    %13 = tpu.iota {dimensions = array<i32: 1>} : vector<1x64xi32>
    %c8_i32 = arith.constant 8 : i32
    %c0_i32 = arith.constant 0 : i32
    %14 = arith.cmpi eq, %c8_i32, %c0_i32 : i32
    %c1_i32 = arith.constant 1 : i32
    %15 = arith.select %14, %c1_i32, %c8_i32 : i32
    %16 = vector.broadcast %15 : i32 to vector<1x64xi32>
    %17 = arith.remsi %13, %16 : vector<1x64xi32>
    %c0_i32_7 = arith.constant 0 : i32
    %18 = vector.broadcast %c0_i32_7 : i32 to vector<1x64xi32>
    %19 = arith.cmpi ne, %17, %18 : vector<1x64xi32>
    %c0_i32_8 = arith.constant 0 : i32
    %20 = vector.broadcast %c0_i32_8 : i32 to vector<1x64xi32>
    %21 = arith.cmpi slt, %17, %20 : vector<1x64xi32>
    %c0_i32_9 = arith.constant 0 : i32
    %22 = arith.cmpi slt, %15, %c0_i32_9 : i32
    %23 = vector.broadcast %22 : i1 to vector<1x64xi1>
    %24 = vector.broadcast %23 : vector<1x64xi1> to vector<1x64xi1>
    %25 = arith.xori %21, %24 : vector<1x64xi1>
    %26 = arith.andi %25, %19 : vector<1x64xi1>
    %27 = vector.broadcast %15 : i32 to vector<1x64xi32>
    %28 = arith.addi %17, %27 : vector<1x64xi32>
    %29 = arith.select %26, %28, %17 : vector<1x64xi1>, vector<1x64xi32>
    %c7_i32 = arith.constant 7 : i32
    %30 = vector.broadcast %c7_i32 : i32 to vector<1x64xi32>
    %31 = arith.cmpi slt, %29, %30 : vector<1x64xi32>
    %cst_10 = arith.constant 0.000000e+00 : f32
    %32 = vector.broadcast %cst_10 : f32 to vector<24x64xf32>
    %33 = vector.shape_cast %31 : vector<1x64xi1> to vector<1x64xi1>
    %34 = vector.broadcast %33 : vector<1x64xi1> to vector<24x64xi1>
    %35 = arith.select %34, %12, %32 : vector<24x64xi1>, vector<24x64xf32>
    %36 = arith.maximumf %9, %35 : vector<24x64xf32>
    %37 = vector.extract_strided_slice %9 {offsets = [0, 2], sizes = [24, 62], strides = [1, 1]} : vector<24x64xf32> to vector<24x62xf32>
    %cst_11 = arith.constant 0.000000e+00 : f32
    %38 = vector.broadcast %cst_11 : f32 to vector<24x2xf32>
    %39 = tpu.concatenate %37, %38 in 1 : vector<24x62xf32>, vector<24x2xf32> -> vector<24x64xf32>
    %40 = tpu.iota {dimensions = array<i32: 1>} : vector<1x64xi32>
    %c8_i32_12 = arith.constant 8 : i32
    %c0_i32_13 = arith.constant 0 : i32
    %41 = arith.cmpi eq, %c8_i32_12, %c0_i32_13 : i32
    %c1_i32_14 = arith.constant 1 : i32
    %42 = arith.select %41, %c1_i32_14, %c8_i32_12 : i32
    %43 = vector.broadcast %42 : i32 to vector<1x64xi32>
    %44 = arith.remsi %40, %43 : vector<1x64xi32>
    %c0_i32_15 = arith.constant 0 : i32
    %45 = vector.broadcast %c0_i32_15 : i32 to vector<1x64xi32>
    %46 = arith.cmpi ne, %44, %45 : vector<1x64xi32>
    %c0_i32_16 = arith.constant 0 : i32
    %47 = vector.broadcast %c0_i32_16 : i32 to vector<1x64xi32>
    %48 = arith.cmpi slt, %44, %47 : vector<1x64xi32>
    %c0_i32_17 = arith.constant 0 : i32
    %49 = arith.cmpi slt, %42, %c0_i32_17 : i32
    %50 = vector.broadcast %49 : i1 to vector<1x64xi1>
    %51 = vector.broadcast %50 : vector<1x64xi1> to vector<1x64xi1>
    %52 = arith.xori %48, %51 : vector<1x64xi1>
    %53 = arith.andi %52, %46 : vector<1x64xi1>
    %54 = vector.broadcast %42 : i32 to vector<1x64xi32>
    %55 = arith.addi %44, %54 : vector<1x64xi32>
    %56 = arith.select %53, %55, %44 : vector<1x64xi1>, vector<1x64xi32>
    %c6_i32 = arith.constant 6 : i32
    %57 = vector.broadcast %c6_i32 : i32 to vector<1x64xi32>
    %58 = arith.cmpi slt, %56, %57 : vector<1x64xi32>
    %cst_18 = arith.constant 0.000000e+00 : f32
    %59 = vector.broadcast %cst_18 : f32 to vector<24x64xf32>
    %60 = vector.shape_cast %58 : vector<1x64xi1> to vector<1x64xi1>
    %61 = vector.broadcast %60 : vector<1x64xi1> to vector<24x64xi1>
    %62 = arith.select %61, %39, %59 : vector<24x64xi1>, vector<24x64xf32>
    %63 = arith.maximumf %36, %62 : vector<24x64xf32>
    %64 = vector.extract_strided_slice %9 {offsets = [0, 3], sizes = [24, 61], strides = [1, 1]} : vector<24x64xf32> to vector<24x61xf32>
    %cst_19 = arith.constant 0.000000e+00 : f32
    %65 = vector.broadcast %cst_19 : f32 to vector<24x3xf32>
    %66 = tpu.concatenate %64, %65 in 1 : vector<24x61xf32>, vector<24x3xf32> -> vector<24x64xf32>
    %67 = tpu.iota {dimensions = array<i32: 1>} : vector<1x64xi32>
    %c8_i32_20 = arith.constant 8 : i32
    %c0_i32_21 = arith.constant 0 : i32
    %68 = arith.cmpi eq, %c8_i32_20, %c0_i32_21 : i32
    %c1_i32_22 = arith.constant 1 : i32
    %69 = arith.select %68, %c1_i32_22, %c8_i32_20 : i32
    %70 = vector.broadcast %69 : i32 to vector<1x64xi32>
    %71 = arith.remsi %67, %70 : vector<1x64xi32>
    %c0_i32_23 = arith.constant 0 : i32
    %72 = vector.broadcast %c0_i32_23 : i32 to vector<1x64xi32>
    %73 = arith.cmpi ne, %71, %72 : vector<1x64xi32>
    %c0_i32_24 = arith.constant 0 : i32
    %74 = vector.broadcast %c0_i32_24 : i32 to vector<1x64xi32>
    %75 = arith.cmpi slt, %71, %74 : vector<1x64xi32>
    %c0_i32_25 = arith.constant 0 : i32
    %76 = arith.cmpi slt, %69, %c0_i32_25 : i32
    %77 = vector.broadcast %76 : i1 to vector<1x64xi1>
    %78 = vector.broadcast %77 : vector<1x64xi1> to vector<1x64xi1>
    %79 = arith.xori %75, %78 : vector<1x64xi1>
    %80 = arith.andi %79, %73 : vector<1x64xi1>
    %81 = vector.broadcast %69 : i32 to vector<1x64xi32>
    %82 = arith.addi %71, %81 : vector<1x64xi32>
    %83 = arith.select %80, %82, %71 : vector<1x64xi1>, vector<1x64xi32>
    %c5_i32 = arith.constant 5 : i32
    %84 = vector.broadcast %c5_i32 : i32 to vector<1x64xi32>
    %85 = arith.cmpi slt, %83, %84 : vector<1x64xi32>
    %cst_26 = arith.constant 0.000000e+00 : f32
    %86 = vector.broadcast %cst_26 : f32 to vector<24x64xf32>
    %87 = vector.shape_cast %85 : vector<1x64xi1> to vector<1x64xi1>
    %88 = vector.broadcast %87 : vector<1x64xi1> to vector<24x64xi1>
    %89 = arith.select %88, %66, %86 : vector<24x64xi1>, vector<24x64xf32>
    %90 = arith.maximumf %63, %89 : vector<24x64xf32>
    %91 = vector.extract_strided_slice %90 {offsets = [0, 8], sizes = [24, 56], strides = [1, 1]} : vector<24x64xf32> to vector<24x56xf32>
    %cst_27 = arith.constant 0.000000e+00 : f32
    %92 = vector.broadcast %cst_27 : f32 to vector<24x8xf32>
    %93 = tpu.concatenate %91, %92 in 1 : vector<24x56xf32>, vector<24x8xf32> -> vector<24x64xf32>
    %94 = arith.maximumf %90, %93 : vector<24x64xf32>
    %95 = vector.extract_strided_slice %90 {offsets = [0, 16], sizes = [24, 48], strides = [1, 1]} : vector<24x64xf32> to vector<24x48xf32>
    %cst_28 = arith.constant 0.000000e+00 : f32
    %96 = vector.broadcast %cst_28 : f32 to vector<24x16xf32>
    %97 = tpu.concatenate %95, %96 in 1 : vector<24x48xf32>, vector<24x16xf32> -> vector<24x64xf32>
    %98 = arith.maximumf %94, %97 : vector<24x64xf32>
    %99 = vector.extract_strided_slice %90 {offsets = [0, 24], sizes = [24, 40], strides = [1, 1]} : vector<24x64xf32> to vector<24x40xf32>
    %cst_29 = arith.constant 0.000000e+00 : f32
    %100 = vector.broadcast %cst_29 : f32 to vector<24x24xf32>
    %101 = tpu.concatenate %99, %100 in 1 : vector<24x40xf32>, vector<24x24xf32> -> vector<24x64xf32>
    %102 = arith.maximumf %98, %101 : vector<24x64xf32>
    %c0_30 = arith.constant 0 : index
    %c0_31 = arith.constant 0 : index
    %103 = vector.load %arg4[%c0_30, %c0_31] : memref<64x9xf32, #tpu.memory_space<vmem>>, vector<64x9xf32>
    %cst_32 = arith.constant dense<0.000000e+00> : vector<24x9xf32>
    %104 = tpu.matmul %102, %103, %cst_32 {dimension_numbers = #tpu.dot_dimension_numbers<[1], [0], [0], [1], [0, 0, 1, 1], [], []>} : vector<24x64xf32>, vector<64x9xf32>, vector<24x9xf32> -> vector<24x9xf32>
    %105 = arith.truncf %104 : vector<24x9xf32> to vector<24x9xbf16>
    %cst_33 = arith.constant 0.000000e+00 : f32
    %106 = vector.broadcast %cst_33 : f32 to vector<24x9xf32>
    %cst_34 = arith.constant 0.000000e+00 : bf16
    %107 = vector.broadcast %cst_34 : bf16 to vector<24x4xbf16>
    %108 = vector.extract_strided_slice %105 {offsets = [0, 0], sizes = [24, 5], strides = [1, 1]} : vector<24x9xbf16> to vector<24x5xbf16>
    %109 = tpu.concatenate %107, %108 in 1 : vector<24x4xbf16>, vector<24x5xbf16> -> vector<24x9xbf16>
    %110 = tpu.iota {dimensions = array<i32: 1>} : vector<1x9xi32>
    %c3_i32 = arith.constant 3 : i32
    %c0_i32_35 = arith.constant 0 : i32
    %111 = arith.cmpi eq, %c3_i32, %c0_i32_35 : i32
    %c1_i32_36 = arith.constant 1 : i32
    %112 = arith.select %111, %c1_i32_36, %c3_i32 : i32
    %113 = vector.broadcast %112 : i32 to vector<1x9xi32>
    %114 = arith.remsi %110, %113 : vector<1x9xi32>
    %c0_i32_37 = arith.constant 0 : i32
    %115 = vector.broadcast %c0_i32_37 : i32 to vector<1x9xi32>
    %116 = arith.cmpi ne, %114, %115 : vector<1x9xi32>
    %c0_i32_38 = arith.constant 0 : i32
    %117 = vector.broadcast %c0_i32_38 : i32 to vector<1x9xi32>
    %118 = arith.cmpi slt, %114, %117 : vector<1x9xi32>
    %c0_i32_39 = arith.constant 0 : i32
    %119 = arith.cmpi slt, %112, %c0_i32_39 : i32
    %120 = vector.broadcast %119 : i1 to vector<1x9xi1>
    %121 = vector.broadcast %120 : vector<1x9xi1> to vector<1x9xi1>
    %122 = arith.xori %118, %121 : vector<1x9xi1>
    %123 = arith.andi %122, %116 : vector<1x9xi1>
    %124 = vector.broadcast %112 : i32 to vector<1x9xi32>
    %125 = arith.addi %114, %124 : vector<1x9xi32>
    %126 = arith.select %123, %125, %114 : vector<1x9xi1>, vector<1x9xi32>
    %c1_i32_40 = arith.constant 1 : i32
    %127 = vector.broadcast %c1_i32_40 : i32 to vector<1x9xi32>
    %128 = arith.cmpi sge, %126, %127 : vector<1x9xi32>
    %cst_41 = arith.constant 0.000000e+00 : bf16
    %129 = vector.broadcast %cst_41 : bf16 to vector<24x9xbf16>
    %130 = vector.shape_cast %128 : vector<1x9xi1> to vector<1x9xi1>
    %131 = vector.broadcast %130 : vector<1x9xi1> to vector<24x9xi1>
    %132 = arith.select %131, %109, %129 : vector<24x9xi1>, vector<24x9xbf16>
    %c0_42 = arith.constant 0 : index
    %c0_43 = arith.constant 0 : index
    %c0_44 = arith.constant 0 : index
    %133 = vector.load %arg5[%c0_42, %c0_43, %c0_44] : memref<9x24x24xbf16, #tpu.memory_space<vmem>>, vector<1x24x24xbf16>
    %134 = vector.shape_cast %133 : vector<1x24x24xbf16> to vector<24x24xbf16>
    %cst_45 = arith.constant dense<0.000000e+00> : vector<24x9xf32>
    %135 = tpu.matmul %134, %132, %cst_45 {dimension_numbers = #tpu.dot_dimension_numbers<[1], [0], [0], [1], [0, 0, 1, 1], [], []>} : vector<24x24xbf16>, vector<24x9xbf16>, vector<24x9xf32> -> vector<24x9xf32>
    %136 = arith.addf %106, %135 : vector<24x9xf32>
    %cst_46 = arith.constant 0.000000e+00 : bf16
    %137 = vector.broadcast %cst_46 : bf16 to vector<24x3xbf16>
    %138 = vector.extract_strided_slice %105 {offsets = [0, 0], sizes = [24, 6], strides = [1, 1]} : vector<24x9xbf16> to vector<24x6xbf16>
    %139 = tpu.concatenate %137, %138 in 1 : vector<24x3xbf16>, vector<24x6xbf16> -> vector<24x9xbf16>
    %c1 = arith.constant 1 : index
    %c0_47 = arith.constant 0 : index
    %c0_48 = arith.constant 0 : index
    %140 = vector.load %arg5[%c1, %c0_47, %c0_48] : memref<9x24x24xbf16, #tpu.memory_space<vmem>>, vector<1x24x24xbf16>
    %141 = vector.shape_cast %140 : vector<1x24x24xbf16> to vector<24x24xbf16>
    %cst_49 = arith.constant dense<0.000000e+00> : vector<24x9xf32>
    %142 = tpu.matmul %141, %139, %cst_49 {dimension_numbers = #tpu.dot_dimension_numbers<[1], [0], [0], [1], [0, 0, 1, 1], [], []>} : vector<24x24xbf16>, vector<24x9xbf16>, vector<24x9xf32> -> vector<24x9xf32>
    %143 = arith.addf %136, %142 : vector<24x9xf32>
    %cst_50 = arith.constant 0.000000e+00 : bf16
    %144 = vector.broadcast %cst_50 : bf16 to vector<24x2xbf16>
    %145 = vector.extract_strided_slice %105 {offsets = [0, 0], sizes = [24, 7], strides = [1, 1]} : vector<24x9xbf16> to vector<24x7xbf16>
    %146 = tpu.concatenate %144, %145 in 1 : vector<24x2xbf16>, vector<24x7xbf16> -> vector<24x9xbf16>
    %147 = tpu.iota {dimensions = array<i32: 1>} : vector<1x9xi32>
    %c3_i32_51 = arith.constant 3 : i32
    %c0_i32_52 = arith.constant 0 : i32
    %148 = arith.cmpi eq, %c3_i32_51, %c0_i32_52 : i32
    %c1_i32_53 = arith.constant 1 : i32
    %149 = arith.select %148, %c1_i32_53, %c3_i32_51 : i32
    %150 = vector.broadcast %149 : i32 to vector<1x9xi32>
    %151 = arith.remsi %147, %150 : vector<1x9xi32>
    %c0_i32_54 = arith.constant 0 : i32
    %152 = vector.broadcast %c0_i32_54 : i32 to vector<1x9xi32>
    %153 = arith.cmpi ne, %151, %152 : vector<1x9xi32>
    %c0_i32_55 = arith.constant 0 : i32
    %154 = vector.broadcast %c0_i32_55 : i32 to vector<1x9xi32>
    %155 = arith.cmpi slt, %151, %154 : vector<1x9xi32>
    %c0_i32_56 = arith.constant 0 : i32
    %156 = arith.cmpi slt, %149, %c0_i32_56 : i32
    %157 = vector.broadcast %156 : i1 to vector<1x9xi1>
    %158 = vector.broadcast %157 : vector<1x9xi1> to vector<1x9xi1>
    %159 = arith.xori %155, %158 : vector<1x9xi1>
    %160 = arith.andi %159, %153 : vector<1x9xi1>
    %161 = vector.broadcast %149 : i32 to vector<1x9xi32>
    %162 = arith.addi %151, %161 : vector<1x9xi32>
    %163 = arith.select %160, %162, %151 : vector<1x9xi1>, vector<1x9xi32>
    %c2_i32 = arith.constant 2 : i32
    %164 = vector.broadcast %c2_i32 : i32 to vector<1x9xi32>
    %165 = arith.cmpi slt, %163, %164 : vector<1x9xi32>
    %cst_57 = arith.constant 0.000000e+00 : bf16
    %166 = vector.broadcast %cst_57 : bf16 to vector<24x9xbf16>
    %167 = vector.shape_cast %165 : vector<1x9xi1> to vector<1x9xi1>
    %168 = vector.broadcast %167 : vector<1x9xi1> to vector<24x9xi1>
    %169 = arith.select %168, %146, %166 : vector<24x9xi1>, vector<24x9xbf16>
    %c2 = arith.constant 2 : index
    %c0_58 = arith.constant 0 : index
    %c0_59 = arith.constant 0 : index
    %170 = vector.load %arg5[%c2, %c0_58, %c0_59] : memref<9x24x24xbf16, #tpu.memory_space<vmem>>, vector<1x24x24xbf16>
    %171 = vector.shape_cast %170 : vector<1x24x24xbf16> to vector<24x24xbf16>
    %cst_60 = arith.constant dense<0.000000e+00> : vector<24x9xf32>
    %172 = tpu.matmul %171, %169, %cst_60 {dimension_numbers = #tpu.dot_dimension_numbers<[1], [0], [0], [1], [0, 0, 1, 1], [], []>} : vector<24x24xbf16>, vector<24x9xbf16>, vector<24x9xf32> -> vector<24x9xf32>
    %173 = arith.addf %143, %172 : vector<24x9xf32>
    %cst_61 = arith.constant 0.000000e+00 : bf16
    %174 = vector.broadcast %cst_61 : bf16 to vector<24x1xbf16>
    %175 = vector.extract_strided_slice %105 {offsets = [0, 0], sizes = [24, 8], strides = [1, 1]} : vector<24x9xbf16> to vector<24x8xbf16>
    %176 = tpu.concatenate %174, %175 in 1 : vector<24x1xbf16>, vector<24x8xbf16> -> vector<24x9xbf16>
    %177 = tpu.iota {dimensions = array<i32: 1>} : vector<1x9xi32>
    %c3_i32_62 = arith.constant 3 : i32
    %c0_i32_63 = arith.constant 0 : i32
    %178 = arith.cmpi eq, %c3_i32_62, %c0_i32_63 : i32
    %c1_i32_64 = arith.constant 1 : i32
    %179 = arith.select %178, %c1_i32_64, %c3_i32_62 : i32
    %180 = vector.broadcast %179 : i32 to vector<1x9xi32>
    %181 = arith.remsi %177, %180 : vector<1x9xi32>
    %c0_i32_65 = arith.constant 0 : i32
    %182 = vector.broadcast %c0_i32_65 : i32 to vector<1x9xi32>
    %183 = arith.cmpi ne, %181, %182 : vector<1x9xi32>
    %c0_i32_66 = arith.constant 0 : i32
    %184 = vector.broadcast %c0_i32_66 : i32 to vector<1x9xi32>
    %185 = arith.cmpi slt, %181, %184 : vector<1x9xi32>
    %c0_i32_67 = arith.constant 0 : i32
    %186 = arith.cmpi slt, %179, %c0_i32_67 : i32
    %187 = vector.broadcast %186 : i1 to vector<1x9xi1>
    %188 = vector.broadcast %187 : vector<1x9xi1> to vector<1x9xi1>
    %189 = arith.xori %185, %188 : vector<1x9xi1>
    %190 = arith.andi %189, %183 : vector<1x9xi1>
    %191 = vector.broadcast %179 : i32 to vector<1x9xi32>
    %192 = arith.addi %181, %191 : vector<1x9xi32>
    %193 = arith.select %190, %192, %181 : vector<1x9xi1>, vector<1x9xi32>
    %c1_i32_68 = arith.constant 1 : i32
    %194 = vector.broadcast %c1_i32_68 : i32 to vector<1x9xi32>
    %195 = arith.cmpi sge, %193, %194 : vector<1x9xi32>
    %cst_69 = arith.constant 0.000000e+00 : bf16
    %196 = vector.broadcast %cst_69 : bf16 to vector<24x9xbf16>
    %197 = vector.shape_cast %195 : vector<1x9xi1> to vector<1x9xi1>
    %198 = vector.broadcast %197 : vector<1x9xi1> to vector<24x9xi1>
    %199 = arith.select %198, %176, %196 : vector<24x9xi1>, vector<24x9xbf16>
    %c3 = arith.constant 3 : index
    %c0_70 = arith.constant 0 : index
    %c0_71 = arith.constant 0 : index
    %200 = vector.load %arg5[%c3, %c0_70, %c0_71] : memref<9x24x24xbf16, #tpu.memory_space<vmem>>, vector<1x24x24xbf16>
    %201 = vector.shape_cast %200 : vector<1x24x24xbf16> to vector<24x24xbf16>
    %cst_72 = arith.constant dense<0.000000e+00> : vector<24x9xf32>
    %202 = tpu.matmul %201, %199, %cst_72 {dimension_numbers = #tpu.dot_dimension_numbers<[1], [0], [0], [1], [0, 0, 1, 1], [], []>} : vector<24x24xbf16>, vector<24x9xbf16>, vector<24x9xf32> -> vector<24x9xf32>
    %203 = arith.addf %173, %202 : vector<24x9xf32>
    %c4 = arith.constant 4 : index
    %c0_73 = arith.constant 0 : index
    %c0_74 = arith.constant 0 : index
    %204 = vector.load %arg5[%c4, %c0_73, %c0_74] : memref<9x24x24xbf16, #tpu.memory_space<vmem>>, vector<1x24x24xbf16>
    %205 = vector.shape_cast %204 : vector<1x24x24xbf16> to vector<24x24xbf16>
    %cst_75 = arith.constant dense<0.000000e+00> : vector<24x9xf32>
    %206 = tpu.matmul %205, %105, %cst_75 {dimension_numbers = #tpu.dot_dimension_numbers<[1], [0], [0], [1], [0, 0, 1, 1], [], []>} : vector<24x24xbf16>, vector<24x9xbf16>, vector<24x9xf32> -> vector<24x9xf32>
    %207 = arith.addf %203, %206 : vector<24x9xf32>
    %208 = vector.extract_strided_slice %105 {offsets = [0, 1], sizes = [24, 8], strides = [1, 1]} : vector<24x9xbf16> to vector<24x8xbf16>
    %cst_76 = arith.constant 0.000000e+00 : bf16
    %209 = vector.broadcast %cst_76 : bf16 to vector<24x1xbf16>
    %210 = tpu.concatenate %208, %209 in 1 : vector<24x8xbf16>, vector<24x1xbf16> -> vector<24x9xbf16>
    %211 = tpu.iota {dimensions = array<i32: 1>} : vector<1x9xi32>
    %c3_i32_77 = arith.constant 3 : i32
    %c0_i32_78 = arith.constant 0 : i32
    %212 = arith.cmpi eq, %c3_i32_77, %c0_i32_78 : i32
    %c1_i32_79 = arith.constant 1 : i32
    %213 = arith.select %212, %c1_i32_79, %c3_i32_77 : i32
    %214 = vector.broadcast %213 : i32 to vector<1x9xi32>
    %215 = arith.remsi %211, %214 : vector<1x9xi32>
    %c0_i32_80 = arith.constant 0 : i32
    %216 = vector.broadcast %c0_i32_80 : i32 to vector<1x9xi32>
    %217 = arith.cmpi ne, %215, %216 : vector<1x9xi32>
    %c0_i32_81 = arith.constant 0 : i32
    %218 = vector.broadcast %c0_i32_81 : i32 to vector<1x9xi32>
    %219 = arith.cmpi slt, %215, %218 : vector<1x9xi32>
    %c0_i32_82 = arith.constant 0 : i32
    %220 = arith.cmpi slt, %213, %c0_i32_82 : i32
    %221 = vector.broadcast %220 : i1 to vector<1x9xi1>
    %222 = vector.broadcast %221 : vector<1x9xi1> to vector<1x9xi1>
    %223 = arith.xori %219, %222 : vector<1x9xi1>
    %224 = arith.andi %223, %217 : vector<1x9xi1>
    %225 = vector.broadcast %213 : i32 to vector<1x9xi32>
    %226 = arith.addi %215, %225 : vector<1x9xi32>
    %227 = arith.select %224, %226, %215 : vector<1x9xi1>, vector<1x9xi32>
    %c2_i32_83 = arith.constant 2 : i32
    %228 = vector.broadcast %c2_i32_83 : i32 to vector<1x9xi32>
    %229 = arith.cmpi slt, %227, %228 : vector<1x9xi32>
    %cst_84 = arith.constant 0.000000e+00 : bf16
    %230 = vector.broadcast %cst_84 : bf16 to vector<24x9xbf16>
    %231 = vector.shape_cast %229 : vector<1x9xi1> to vector<1x9xi1>
    %232 = vector.broadcast %231 : vector<1x9xi1> to vector<24x9xi1>
    %233 = arith.select %232, %210, %230 : vector<24x9xi1>, vector<24x9xbf16>
    %c5 = arith.constant 5 : index
    %c0_85 = arith.constant 0 : index
    %c0_86 = arith.constant 0 : index
    %234 = vector.load %arg5[%c5, %c0_85, %c0_86] : memref<9x24x24xbf16, #tpu.memory_space<vmem>>, vector<1x24x24xbf16>
    %235 = vector.shape_cast %234 : vector<1x24x24xbf16> to vector<24x24xbf16>
    %cst_87 = arith.constant dense<0.000000e+00> : vector<24x9xf32>
    %236 = tpu.matmul %235, %233, %cst_87 {dimension_numbers = #tpu.dot_dimension_numbers<[1], [0], [0], [1], [0, 0, 1, 1], [], []>} : vector<24x24xbf16>, vector<24x9xbf16>, vector<24x9xf32> -> vector<24x9xf32>
    %237 = arith.addf %207, %236 : vector<24x9xf32>
    %238 = vector.extract_strided_slice %105 {offsets = [0, 2], sizes = [24, 7], strides = [1, 1]} : vector<24x9xbf16> to vector<24x7xbf16>
    %cst_88 = arith.constant 0.000000e+00 : bf16
    %239 = vector.broadcast %cst_88 : bf16 to vector<24x2xbf16>
    %240 = tpu.concatenate %238, %239 in 1 : vector<24x7xbf16>, vector<24x2xbf16> -> vector<24x9xbf16>
    %241 = tpu.iota {dimensions = array<i32: 1>} : vector<1x9xi32>
    %c3_i32_89 = arith.constant 3 : i32
    %c0_i32_90 = arith.constant 0 : i32
    %242 = arith.cmpi eq, %c3_i32_89, %c0_i32_90 : i32
    %c1_i32_91 = arith.constant 1 : i32
    %243 = arith.select %242, %c1_i32_91, %c3_i32_89 : i32
    %244 = vector.broadcast %243 : i32 to vector<1x9xi32>
    %245 = arith.remsi %241, %244 : vector<1x9xi32>
    %c0_i32_92 = arith.constant 0 : i32
    %246 = vector.broadcast %c0_i32_92 : i32 to vector<1x9xi32>
    %247 = arith.cmpi ne, %245, %246 : vector<1x9xi32>
    %c0_i32_93 = arith.constant 0 : i32
    %248 = vector.broadcast %c0_i32_93 : i32 to vector<1x9xi32>
    %249 = arith.cmpi slt, %245, %248 : vector<1x9xi32>
    %c0_i32_94 = arith.constant 0 : i32
    %250 = arith.cmpi slt, %243, %c0_i32_94 : i32
    %251 = vector.broadcast %250 : i1 to vector<1x9xi1>
    %252 = vector.broadcast %251 : vector<1x9xi1> to vector<1x9xi1>
    %253 = arith.xori %249, %252 : vector<1x9xi1>
    %254 = arith.andi %253, %247 : vector<1x9xi1>
    %255 = vector.broadcast %243 : i32 to vector<1x9xi32>
    %256 = arith.addi %245, %255 : vector<1x9xi32>
    %257 = arith.select %254, %256, %245 : vector<1x9xi1>, vector<1x9xi32>
    %c1_i32_95 = arith.constant 1 : i32
    %258 = vector.broadcast %c1_i32_95 : i32 to vector<1x9xi32>
    %259 = arith.cmpi sge, %257, %258 : vector<1x9xi32>
    %cst_96 = arith.constant 0.000000e+00 : bf16
    %260 = vector.broadcast %cst_96 : bf16 to vector<24x9xbf16>
    %261 = vector.shape_cast %259 : vector<1x9xi1> to vector<1x9xi1>
    %262 = vector.broadcast %261 : vector<1x9xi1> to vector<24x9xi1>
    %263 = arith.select %262, %240, %260 : vector<24x9xi1>, vector<24x9xbf16>
    %c6 = arith.constant 6 : index
    %c0_97 = arith.constant 0 : index
    %c0_98 = arith.constant 0 : index
    %264 = vector.load %arg5[%c6, %c0_97, %c0_98] : memref<9x24x24xbf16, #tpu.memory_space<vmem>>, vector<1x24x24xbf16>
    %265 = vector.shape_cast %264 : vector<1x24x24xbf16> to vector<24x24xbf16>
    %cst_99 = arith.constant dense<0.000000e+00> : vector<24x9xf32>
    %266 = tpu.matmul %265, %263, %cst_99 {dimension_numbers = #tpu.dot_dimension_numbers<[1], [0], [0], [1], [0, 0, 1, 1], [], []>} : vector<24x24xbf16>, vector<24x9xbf16>, vector<24x9xf32> -> vector<24x9xf32>
    %267 = arith.addf %237, %266 : vector<24x9xf32>
    %268 = vector.extract_strided_slice %105 {offsets = [0, 3], sizes = [24, 6], strides = [1, 1]} : vector<24x9xbf16> to vector<24x6xbf16>
    %cst_100 = arith.constant 0.000000e+00 : bf16
    %269 = vector.broadcast %cst_100 : bf16 to vector<24x3xbf16>
    %270 = tpu.concatenate %268, %269 in 1 : vector<24x6xbf16>, vector<24x3xbf16> -> vector<24x9xbf16>
    %c7 = arith.constant 7 : index
    %c0_101 = arith.constant 0 : index
    %c0_102 = arith.constant 0 : index
    %271 = vector.load %arg5[%c7, %c0_101, %c0_102] : memref<9x24x24xbf16, #tpu.memory_space<vmem>>, vector<1x24x24xbf16>
    %272 = vector.shape_cast %271 : vector<1x24x24xbf16> to vector<24x24xbf16>
    %cst_103 = arith.constant dense<0.000000e+00> : vector<24x9xf32>
    %273 = tpu.matmul %272, %270, %cst_103 {dimension_numbers = #tpu.dot_dimension_numbers<[1], [0], [0], [1], [0, 0, 1, 1], [], []>} : vector<24x24xbf16>, vector<24x9xbf16>, vector<24x9xf32> -> vector<24x9xf32>
    %274 = arith.addf %267, %273 : vector<24x9xf32>
    %275 = vector.extract_strided_slice %105 {offsets = [0, 4], sizes = [24, 5], strides = [1, 1]} : vector<24x9xbf16> to vector<24x5xbf16>
    %cst_104 = arith.constant 0.000000e+00 : bf16
    %276 = vector.broadcast %cst_104 : bf16 to vector<24x4xbf16>
    %277 = tpu.concatenate %275, %276 in 1 : vector<24x5xbf16>, vector<24x4xbf16> -> vector<24x9xbf16>
    %278 = tpu.iota {dimensions = array<i32: 1>} : vector<1x9xi32>
    %c3_i32_105 = arith.constant 3 : i32
    %c0_i32_106 = arith.constant 0 : i32
    %279 = arith.cmpi eq, %c3_i32_105, %c0_i32_106 : i32
    %c1_i32_107 = arith.constant 1 : i32
    %280 = arith.select %279, %c1_i32_107, %c3_i32_105 : i32
    %281 = vector.broadcast %280 : i32 to vector<1x9xi32>
    %282 = arith.remsi %278, %281 : vector<1x9xi32>
    %c0_i32_108 = arith.constant 0 : i32
    %283 = vector.broadcast %c0_i32_108 : i32 to vector<1x9xi32>
    %284 = arith.cmpi ne, %282, %283 : vector<1x9xi32>
    %c0_i32_109 = arith.constant 0 : i32
    %285 = vector.broadcast %c0_i32_109 : i32 to vector<1x9xi32>
    %286 = arith.cmpi slt, %282, %285 : vector<1x9xi32>
    %c0_i32_110 = arith.constant 0 : i32
    %287 = arith.cmpi slt, %280, %c0_i32_110 : i32
    %288 = vector.broadcast %287 : i1 to vector<1x9xi1>
    %289 = vector.broadcast %288 : vector<1x9xi1> to vector<1x9xi1>
    %290 = arith.xori %286, %289 : vector<1x9xi1>
    %291 = arith.andi %290, %284 : vector<1x9xi1>
    %292 = vector.broadcast %280 : i32 to vector<1x9xi32>
    %293 = arith.addi %282, %292 : vector<1x9xi32>
    %294 = arith.select %291, %293, %282 : vector<1x9xi1>, vector<1x9xi32>
    %c2_i32_111 = arith.constant 2 : i32
    %295 = vector.broadcast %c2_i32_111 : i32 to vector<1x9xi32>
    %296 = arith.cmpi slt, %294, %295 : vector<1x9xi32>
    %cst_112 = arith.constant 0.000000e+00 : bf16
    %297 = vector.broadcast %cst_112 : bf16 to vector<24x9xbf16>
    %298 = vector.shape_cast %296 : vector<1x9xi1> to vector<1x9xi1>
    %299 = vector.broadcast %298 : vector<1x9xi1> to vector<24x9xi1>
    %300 = arith.select %299, %277, %297 : vector<24x9xi1>, vector<24x9xbf16>
    %c8 = arith.constant 8 : index
    %c0_113 = arith.constant 0 : index
    %c0_114 = arith.constant 0 : index
    %301 = vector.load %arg5[%c8, %c0_113, %c0_114] : memref<9x24x24xbf16, #tpu.memory_space<vmem>>, vector<1x24x24xbf16>
    %302 = vector.shape_cast %301 : vector<1x24x24xbf16> to vector<24x24xbf16>
    %cst_115 = arith.constant dense<0.000000e+00> : vector<24x9xf32>
    %303 = tpu.matmul %302, %300, %cst_115 {dimension_numbers = #tpu.dot_dimension_numbers<[1], [0], [0], [1], [0, 0, 1, 1], [], []>} : vector<24x24xbf16>, vector<24x9xbf16>, vector<24x9xf32> -> vector<24x9xf32>
    %304 = arith.addf %274, %303 : vector<24x9xf32>
    %c0_116 = arith.constant 0 : index
    %c0_117 = arith.constant 0 : index
    %305 = vector.load %arg6[%c0_116, %c0_117] : memref<24x1xf32, #tpu.memory_space<vmem>>, vector<24x1xf32>
    %306 = vector.broadcast %305 : vector<24x1xf32> to vector<24x9xf32>
    %307 = arith.addf %304, %306 : vector<24x9xf32>
    %c0_118 = arith.constant 0 : index
    %c0_119 = arith.constant 0 : index
    %308 = vector.load %arg7[%c0_118, %c0_119] : memref<16x24xbf16, #tpu.memory_space<vmem>>, vector<16x24xbf16>
    %309 = arith.truncf %307 : vector<24x9xf32> to vector<24x9xbf16>
    %cst_120 = arith.constant dense<0.000000e+00> : vector<16x9xf32>
    %310 = tpu.matmul %308, %309, %cst_120 {dimension_numbers = #tpu.dot_dimension_numbers<[1], [0], [0], [1], [0, 0, 1, 1], [], []>} : vector<16x24xbf16>, vector<24x9xbf16>, vector<16x9xf32> -> vector<16x9xf32>
    %c0_121 = arith.constant 0 : index
    %c0_122 = arith.constant 0 : index
    %311 = vector.load %arg8[%c0_121, %c0_122] : memref<16x1xf32, #tpu.memory_space<vmem>>, vector<16x1xf32>
    %312 = vector.broadcast %311 : vector<16x1xf32> to vector<16x9xf32>
    %313 = arith.addf %310, %312 : vector<16x9xf32>
    %c0_123 = arith.constant 0 : index
    %c0_124 = arith.constant 0 : index
    %314 = vector.load %arg9[%c0_123, %c0_124] : memref<9x256xf32, #tpu.memory_space<vmem>>, vector<9x256xf32>
    %cst_125 = arith.constant dense<0.000000e+00> : vector<16x256xf32>
    %315 = tpu.matmul %313, %314, %cst_125 {dimension_numbers = #tpu.dot_dimension_numbers<[1], [0], [0], [1], [0, 0, 1, 1], [], []>} : vector<16x9xf32>, vector<9x256xf32>, vector<16x256xf32> -> vector<16x256xf32>
    %316 = arith.negf %315 : vector<16x256xf32>
    %317 = math.exp %316 : vector<16x256xf32>
    %cst_126 = arith.constant 1.000000e+00 : f32
    %318 = vector.broadcast %cst_126 : f32 to vector<16x256xf32>
    %319 = arith.addf %318, %317 : vector<16x256xf32>
    %320 = arith.divf %318, %319 : vector<16x256xf32>
    %c0_127 = arith.constant 0 : index
    %c0_128 = arith.constant 0 : index
    %c0_129 = arith.constant 0 : index
    %321 = vector.load %arg10[%c0_127, %c0_128, %c0_129] : memref<1x16x256xf32, #tpu.memory_space<vmem>>, vector<1x16x256xf32>
    %322 = vector.shape_cast %321 : vector<1x16x256xf32> to vector<16x256xf32>
    %323 = arith.addf %322, %320 : vector<16x256xf32>
    %c0_130 = arith.constant 0 : index
    %c0_131 = arith.constant 0 : index
    %c0_132 = arith.constant 0 : index
    %324 = vector.load %arg11[%c0_130, %c0_131, %c0_132] : memref<1x16x256xf32, #tpu.memory_space<vmem>>, vector<1x16x256xf32>
    %325 = vector.shape_cast %324 : vector<1x16x256xf32> to vector<16x256xf32>
    %326 = vector.shape_cast %323 : vector<16x256xf32> to vector<1x16x256xf32>
    tpu.vector_store %arg11[%c0_130, %c0_131, %c0_132], %326 {strides = array<i32>} : memref<1x16x256xf32, #tpu.memory_space<vmem>>, vector<1x16x256xf32>,
    return
  }
  func.func @transform_0(%arg0: i32) -> (i32, i32, i32) {
    %c0_i32 = arith.constant 0 : i32
    %c0_i32_0 = arith.constant 0 : i32
    %c0_i32_1 = arith.constant 0 : i32
    return %arg0, %c0_i32, %c0_i32_0 : i32, i32, i32
  }
  func.func @transform_1(%arg0: i32) -> (i32, i32) {
    %c0_i32 = arith.constant 0 : i32
    %c0_i32_0 = arith.constant 0 : i32
    %c0_i32_1 = arith.constant 0 : i32
    return %c0_i32, %c0_i32_0 : i32, i32
  }
  func.func @transform_2(%arg0: i32) -> (i32, i32) {
    %c0_i32 = arith.constant 0 : i32
    %c0_i32_0 = arith.constant 0 : i32
    %c0_i32_1 = arith.constant 0 : i32
    return %c0_i32, %c0_i32_0 : i32, i32
  }
  func.func @transform_3(%arg0: i32) -> (i32, i32) {
    %c0_i32 = arith.constant 0 : i32
    %c0_i32_0 = arith.constant 0 : i32
    %c0_i32_1 = arith.constant 0 : i32
    return %c0_i32, %c0_i32_0 : i32, i32
  }
  func.func @transform_4(%arg0: i32) -> (i32, i32, i32) {
    %c0_i32 = arith.constant 0 : i32
    %c0_i32_0 = arith.constant 0 : i32
    %c0_i32_1 = arith.constant 0 : i32
    %c0_i32_2 = arith.constant 0 : i32
    return %c0_i32, %c0_i32_0, %c0_i32_1 : i32, i32, i32
  }
  func.func @transform_5(%arg0: i32) -> (i32, i32) {
    %c0_i32 = arith.constant 0 : i32
    %c0_i32_0 = arith.constant 0 : i32
    %c0_i32_1 = arith.constant 0 : i32
    return %c0_i32, %c0_i32_0 : i32, i32
  }
  func.func @transform_6(%arg0: i32) -> (i32, i32) {
    %c0_i32 = arith.constant 0 : i32
    %c0_i32_0 = arith.constant 0 : i32
    %c0_i32_1 = arith.constant 0 : i32
    return %c0_i32, %c0_i32_0 : i32, i32
  }
  func.func @transform_7(%arg0: i32) -> (i32, i32) {
    %c0_i32 = arith.constant 0 : i32
    %c0_i32_0 = arith.constant 0 : i32
    %c0_i32_1 = arith.constant 0 : i32
    return %c0_i32, %c0_i32_0 : i32, i32
  }
  func.func @transform_8(%arg0: i32) -> (i32, i32) {
    %c0_i32 = arith.constant 0 : i32
    %c0_i32_0 = arith.constant 0 : i32
    %c0_i32_1 = arith.constant 0 : i32
    return %c0_i32, %c0_i32_0 : i32, i32
  }
  func.func @transform_9(%arg0: i32) -> (i32, i32, i32) {
    %c0_i32 = arith.constant 0 : i32
    %c0_i32_0 = arith.constant 0 : i32
    %c0_i32_1 = arith.constant 0 : i32
    return %arg0, %c0_i32, %c0_i32_0 : i32, i32, i32
  }
  func.func @transform_10(%arg0: i32) -> (i32, i32, i32) {
    %c0_i32 = arith.constant 0 : i32
    %c0_i32_0 = arith.constant 0 : i32
    %c0_i32_1 = arith.constant 0 : i32
    return %arg0, %c0_i32, %c0_i32_0 : i32, i32, i32
  }
}

</mosaic_0001>

<llo_original>
// kernel: tile.13
$region0: #{tile.13}
  #allocation0 [shape = 's32[1]{0}', space=sflag, size = 0x4, scoped, tag = 'scoped memory for tile.13']
  %s0 = inlined_call_operand.vmem [shape: f32[4], index: 0, kind: input, shape index: {}]
  %s1 = inlined_call_operand.vmem [shape: f32[6,4], index: 1, kind: output, shape index: {}]
  // Predicated region
  $region2: #{tile.13} parent=0 // pred_check
    _
  $region3: #{tile.13} parent=0 // pred_check_branch
    %3 = sbr.rel (0) target = $region5
  $region4: #{tile.13} parent=0 // pred_region
    _
  $region5: #{tile.13} parent=0 // pred_fallthru
    _
  %v4 = vld [vmem:[%s0] ss:$0 sm:$0xff]
  %5 = vst [vmem:[%s1] sm:$0xff] %v4

// kernel: teab_forward.2
$region0: #{teab_forward.2}
  #allocation0 [shape = 'u32[]', space=smem, size = 0x4, offset = 0x4, fixed_abs, tag = 'smem constant byte address 0x4 - core index']
  #allocation1 [shape = 'u32[144,128]{1,0:T(1,128)}', space=vmem, size = 0x12000, scoped, tag = 'internal scratch']
  %s0 = inlined_call_operand.vmem [shape: bf16[2,16,64], index: 0, kind: input, shape index: {}]
  %s1 = inlined_call_operand.vmem [shape: bf16[2,16,64], index: 1, kind: input, shape index: {}]
  %s2 = inlined_call_operand.vmem [shape: bf16[2,16,64], index: 2, kind: input, shape index: {}]
  %s3 = inlined_call_operand.vmem [shape: bf16[4,16], index: 3, kind: input, shape index: {}]
  %s4 = inlined_call_operand.vmem [shape: f32[4,1], index: 4, kind: input, shape index: {}]
  %s5 = inlined_call_operand.vmem [shape: bf16[3,4,4], index: 5, kind: input, shape index: {}]
  %s6 = inlined_call_operand.vmem [shape: f32[4,1], index: 6, kind: input, shape index: {}]
  %s7 = inlined_call_operand.vmem [shape: bf16[3,4,4], index: 7, kind: input, shape index: {}]
  %s8 = inlined_call_operand.vmem [shape: f32[4,1], index: 8, kind: input, shape index: {}]
  %s9 = inlined_call_operand.vmem [shape: f32[2,24,64], index: 9, kind: output, shape index: {0}]
  %s10 = inlined_call_operand.vmem [shape: f32[2,24,2], index: 10, kind: output, shape index: {1}]
  %11 = xla_tuple %s9, %s10
  %s12 = sld [smem:[#allocation0]]
  $region77: #{teab_forward.2} parent=0
    _
  %s14 = ssub.s32 1, %s12
  %s15 = scalar_select 0, %s14, %s12
  loop: start=0, step=1, limit=4
  $region2: #{teab_forward.2} parent=0 // loop_pre_header
    _
  $region3: #{teab_forward.2} parent=0 // loop_header
    %s17 = sphi 0, %s21
    %p18 = scmp.ge.s32.totalorder %s17, 4
    %s27 = sphi 0, %s29
    %s30 = sphi 0, %s27
    %s31 = sphi 0, %s30
    %s47 = sphi 0, %s31
    %s53 = sphi 0, %s55
    %s56 = sphi 0, %s53
    %s57 = sphi 0, %s56
    %s73 = sphi 0, %s57
    %s79 = sphi 0, %s81
    %s82 = sphi 0, %s79
    %s83 = sphi 0, %s82
    %s99 = sphi 0, %s83
    %s103 = sphi 0, %s103
    %s105 = sphi 0, %s103
    %s106 = sphi 0, %s105
    %s120 = sphi 0, %s106
    %s124 = sphi 0, %s124
    %s126 = sphi 0, %s124
    %s127 = sphi 0, %s126
    %s141 = sphi 0, %s127
    %s145 = sphi 0, %s145
    %s147 = sphi 0, %s145
    %s148 = sphi 0, %s147
    %s162 = sphi 0, %s148
    %s166 = sphi 0, %s166
    %s168 = sphi 0, %s166
    %s169 = sphi 0, %s168
    %s183 = sphi 0, %s169
    %s187 = sphi 0, %s187
    %s189 = sphi 0, %s187
    %s190 = sphi 0, %s189
    %s204 = sphi 0, %s190
    %s208 = sphi 0, %s208
    %s210 = sphi 0, %s208
    %s211 = sphi 0, %s210
    %s225 = sphi 0, %s211
    %s231 = sphi 0, %s233
    %s234 = sphi 0, %s231
    %s235 = sphi 0, %s234
    %s251 = sphi 0, %s235
    %s257 = sphi 0, %s259
    %s260 = sphi 0, %s257
    %s261 = sphi 0, %s260
    %s277 = sphi 0, %s261
  $region4: #{teab_forward.2} parent=0 // loop_header_branch
    %20 = sbr.rel (%p18) target = $region8
  $region5: #{teab_forward.2} parent=0 // loop_body
    %s22 = ssub.s32 %s17, 1
    %s23 = ssub.s32 %s17, 2
    %s24 = sadd.s32 %s17, 1
    %s25 = ssub.s32 %s17, %s24
    %p26 = scmp.eq.s32.totalorder %s25, 0
    %s28 = sadd.s32 %s27, 1
    %s29 = scalar_select %p26, %s27, %s28
    %p32 = pneg %p26
    %p33 = scmp.eq.s32.totalorder %s17, 1
    %p34 = por %p32, %p33
    %p35 = scmp.ne.s32.totalorder %s27, %s30
    %p36 = scmp.eq.s32.totalorder %s17, 0
    %p37 = por %p35, %p36
    %p38 = scmp.ne.s32.totalorder %s27, %s30
    %p39 = scmp.eq.s32.totalorder %s22, 1
    %p40 = por %p38, %p39
    %p41 = scmp.ne.s32.totalorder %s30, %s31
    %p42 = scmp.eq.s32.totalorder %s22, 0
    %p43 = por %p41, %p42
    %p44 = scmp.ne.s32.totalorder %s30, %s31
    %p45 = scmp.eq.s32.totalorder %s23, 1
    %p46 = por %p44, %p45
    %p48 = scmp.ne.s32.totalorder %s31, %s47
    %p49 = scmp.eq.s32.totalorder %s23, 0
    %p50 = por %p48, %p49
    %s51 = ssub.s32 %s17, %s24
    %p52 = scmp.eq.s32.totalorder %s51, 0
    %s54 = sadd.s32 %s53, 1
    %s55 = scalar_select %p52, %s53, %s54
    %p58 = pneg %p52
    %p59 = scmp.eq.s32.totalorder %s17, 1
    %p60 = por %p58, %p59
    %p61 = scmp.ne.s32.totalorder %s53, %s56
    %p62 = scmp.eq.s32.totalorder %s17, 0
    %p63 = por %p61, %p62
    %p64 = scmp.ne.s32.totalorder %s53, %s56
    %p65 = scmp.eq.s32.totalorder %s22, 1
    %p66 = por %p64, %p65
    %p67 = scmp.ne.s32.totalorder %s56, %s57
    %p68 = scmp.eq.s32.totalorder %s22, 0
    %p69 = por %p67, %p68
    %p70 = scmp.ne.s32.totalorder %s56, %s57
    %p71 = scmp.eq.s32.totalorder %s23, 1
    %p72 = por %p70, %p71
    %p74 = scmp.ne.s32.totalorder %s57, %s73
    %p75 = scmp.eq.s32.totalorder %s23, 0
    %p76 = por %p74, %p75
    %s77 = ssub.s32 %s17, %s24
    %p78 = scmp.eq.s32.totalorder %s77, 0
    %s80 = sadd.s32 %s79, 1
    %s81 = scalar_select %p78, %s79, %s80
    %p84 = pneg %p78
    %p85 = scmp.eq.s32.totalorder %s17, 1
    %p86 = por %p84, %p85
    %p87 = scmp.ne.s32.totalorder %s79, %s82
    %p88 = scmp.eq.s32.totalorder %s17, 0
    %p89 = por %p87, %p88
    %p90 = scmp.ne.s32.totalorder %s79, %s82
    %p91 = scmp.eq.s32.totalorder %s22, 1
    %p92 = por %p90, %p91
    %p93 = scmp.ne.s32.totalorder %s82, %s83
    %p94 = scmp.eq.s32.totalorder %s22, 0
    %p95 = por %p93, %p94
    %p96 = scmp.ne.s32.totalorder %s82, %s83
    %p97 = scmp.eq.s32.totalorder %s23, 1
    %p98 = por %p96, %p97
    %p100 = scmp.ne.s32.totalorder %s83, %s99
    %p101 = scmp.eq.s32.totalorder %s23, 0
    %p102 = por %p100, %p101
    %s104 = sadd.s32 %s103, 1
    %p107 = scmp.eq.s32.totalorder %s17, 1
    %p108 = scmp.ne.s32.totalorder %s103, %s105
    %p109 = scmp.eq.s32.totalorder %s17, 0
    %p110 = por %p108, %p109
    %p111 = scmp.ne.s32.totalorder %s103, %s105
    %p112 = scmp.eq.s32.totalorder %s22, 1
    %p113 = por %p111, %p112
    %p114 = scmp.ne.s32.totalorder %s105, %s106
    %p115 = scmp.eq.s32.totalorder %s22, 0
    %p116 = por %p114, %p115
    %p117 = scmp.ne.s32.totalorder %s105, %s106
    %p118 = scmp.eq.s32.totalorder %s23, 1
    %p119 = por %p117, %p118
    %p121 = scmp.ne.s32.totalorder %s106, %s120
    %p122 = scmp.eq.s32.totalorder %s23, 0
    %p123 = por %p121, %p122
    %s125 = sadd.s32 %s124, 1
    %p128 = scmp.eq.s32.totalorder %s17, 1
    %p129 = scmp.ne.s32.totalorder %s124, %s126
    %p130 = scmp.eq.s32.totalorder %s17, 0
    %p131 = por %p129, %p130
    %p132 = scmp.ne.s32.totalorder %s124, %s126
    %p133 = scmp.eq.s32.totalorder %s22, 1
    %p134 = por %p132, %p133
    %p135 = scmp.ne.s32.totalorder %s126, %s127
    %p136 = scmp.eq.s32.totalorder %s22, 0
    %p137 = por %p135, %p136
    %p138 = scmp.ne.s32.totalorder %s126, %s127
    %p139 = scmp.eq.s32.totalorder %s23, 1
    %p140 = por %p138, %p139
    %p142 = scmp.ne.s32.totalorder %s127, %s141
    %p143 = scmp.eq.s32.totalorder %s23, 0
    %p144 = por %p142, %p143
    %s146 = sadd.s32 %s145, 1
    %p149 = scmp.eq.s32.totalorder %s17, 1
    %p150 = scmp.ne.s32.totalorder %s145, %s147
    %p151 = scmp.eq.s32.totalorder %s17, 0
    %p152 = por %p150, %p151
    %p153 = scmp.ne.s32.totalorder %s145, %s147
    %p154 = scmp.eq.s32.totalorder %s22, 1
    %p155 = por %p153, %p154
    %p156 = scmp.ne.s32.totalorder %s147, %s148
    %p157 = scmp.eq.s32.totalorder %s22, 0
    %p158 = por %p156, %p157
    %p159 = scmp.ne.s32.totalorder %s147, %s148
    %p160 = scmp.eq.s32.totalorder %s23, 1
    %p161 = por %p159, %p160
    %p163 = scmp.ne.s32.totalorder %s148, %s162
    %p164 = scmp.eq.s32.totalorder %s23, 0
    %p165 = por %p163, %p164
    %s167 = sadd.s32 %s166, 1
    %p170 = scmp.eq.s32.totalorder %s17, 1
    %p171 = scmp.ne.s32.totalorder %s166, %s168
    %p172 = scmp.eq.s32.totalorder %s17, 0
    %p173 = por %p171, %p172
    %p174 = scmp.ne.s32.totalorder %s166, %s168
    %p175 = scmp.eq.s32.totalorder %s22, 1
    %p176 = por %p174, %p175
    %p177 = scmp.ne.s32.totalorder %s168, %s169
    %p178 = scmp.eq.s32.totalorder %s22, 0
    %p179 = por %p177, %p178
    %p180 = scmp.ne.s32.totalorder %s168, %s169
    %p181 = scmp.eq.s32.totalorder %s23, 1
    %p182 = por %p180, %p181
    %p184 = scmp.ne.s32.totalorder %s169, %s183
    %p185 = scmp.eq.s32.totalorder %s23, 0
    %p186 = por %p184, %p185
    %s188 = sadd.s32 %s187, 1
    %p191 = scmp.eq.s32.totalorder %s17, 1
    %p192 = scmp.ne.s32.totalorder %s187, %s189
    %p193 = scmp.eq.s32.totalorder %s17, 0
    %p194 = por %p192, %p193
    %p195 = scmp.ne.s32.totalorder %s187, %s189
    %p196 = scmp.eq.s32.totalorder %s22, 1
    %p197 = por %p195, %p196
    %p198 = scmp.ne.s32.totalorder %s189, %s190
    %p199 = scmp.eq.s32.totalorder %s22, 0
    %p200 = por %p198, %p199
    %p201 = scmp.ne.s32.totalorder %s189, %s190
    %p202 = scmp.eq.s32.totalorder %s23, 1
    %p203 = por %p201, %p202
    %p205 = scmp.ne.s32.totalorder %s190, %s204
    %p206 = scmp.eq.s32.totalorder %s23, 0
    %p207 = por %p205, %p206
    %s209 = sadd.s32 %s208, 1
    %p212 = scmp.eq.s32.totalorder %s17, 1
    %p213 = scmp.ne.s32.totalorder %s208, %s210
    %p214 = scmp.eq.s32.totalorder %s17, 0
    %p215 = por %p213, %p214
    %p216 = scmp.ne.s32.totalorder %s208, %s210
    %p217 = scmp.eq.s32.totalorder %s22, 1
    %p218 = por %p216, %p217
    %p219 = scmp.ne.s32.totalorder %s210, %s211
    %p220 = scmp.eq.s32.totalorder %s22, 0
    %p221 = por %p219, %p220
    %p222 = scmp.ne.s32.totalorder %s210, %s211
    %p223 = scmp.eq.s32.totalorder %s23, 1
    %p224 = por %p222, %p223
    %p226 = scmp.ne.s32.totalorder %s211, %s225
    %p227 = scmp.eq.s32.totalorder %s23, 0
    %p228 = por %p226, %p227
    %s229 = ssub.s32 %s17, %s24
    %p230 = scmp.eq.s32.totalorder %s229, 0
    %s232 = sadd.s32 %s231, 1
    %s233 = scalar_select %p230, %s231, %s232
    %p236 = pneg %p230
    %p237 = scmp.eq.s32.totalorder %s17, 1
    %p238 = por %p236, %p237
    %p239 = scmp.ne.s32.totalorder %s231, %s234
    %p240 = scmp.eq.s32.totalorder %s17, 0
    %p241 = por %p239, %p240
    %p242 = scmp.ne.s32.totalorder %s231, %s234
    %p243 = scmp.eq.s32.totalorder %s22, 1
    %p244 = por %p242, %p243
    %p245 = scmp.ne.s32.totalorder %s234, %s235
    %p246 = scmp.eq.s32.totalorder %s22, 0
    %p247 = por %p245, %p246
    %p248 = scmp.ne.s32.totalorder %s234, %s235
    %p249 = scmp.eq.s32.totalorder %s23, 1
    %p250 = por %p248, %p249
    %p252 = scmp.ne.s32.totalorder %s235, %s251
    %p253 = scmp.eq.s32.totalorder %s23, 0
    %p254 = por %p252, %p253
    %s255 = ssub.s32 %s17, %s24
    %p256 = scmp.eq.s32.totalorder %s255, 0
    %s258 = sadd.s32 %s257, 1
    %s259 = scalar_select %p256, %s257, %s258
    %p262 = pneg %p256
    %p263 = scmp.eq.s32.totalorder %s17, 1
    %p264 = por %p262, %p263
    %p265 = scmp.ne.s32.totalorder %s257, %s260
    %p266 = scmp.eq.s32.totalorder %s17, 0
    %p267 = por %p265, %p266
    %p268 = scmp.ne.s32.totalorder %s257, %s260
    %p269 = scmp.eq.s32.totalorder %s22, 1
    %p270 = por %p268, %p269
    %p271 = scmp.ne.s32.totalorder %s260, %s261
    %p272 = scmp.eq.s32.totalorder %s22, 0
    %p273 = por %p271, %p272
    %p274 = scmp.ne.s32.totalorder %s260, %s261
    %p275 = scmp.eq.s32.totalorder %s23, 1
    %p276 = por %p274, %p275
    %p278 = scmp.ne.s32.totalorder %s261, %s277
    %p279 = scmp.eq.s32.totalorder %s23, 0
    %p280 = por %p278, %p279
    %p281 = scmp.le.s32.totalorder 1, %s17
    %p282 = scmp.lt.s32.totalorder %s17, 3
    %p283 = pnand %p281, %p282
    %p284 = pneg %p283
    // Predicated region
    $region9: #{teab_forward.2} parent=5 // pred_check
      _
    $region10: #{teab_forward.2} parent=5 // pred_check_branch
      %286 = sbr.rel (%p283) target = $region12
    $region11: #{teab_forward.2} parent=5 // pred_region
      %s287 = ssub.s32 %s17, 1
      // Predicated region
      $region13: #{teab_forward.2} parent=11 // pred_check
        %p288 = pneg %p116
      $region14: #{teab_forward.2} parent=11 // pred_check_branch
        %290 = sbr.rel (%p288) target = $region16
      $region15: #{teab_forward.2} parent=11 // pred_region
        _
      $region16: #{teab_forward.2} parent=11 // pred_fallthru
        _
      // Predicated region
      $region17: #{teab_forward.2} parent=11 // pred_check
        %p291 = pneg %p137
      $region18: #{teab_forward.2} parent=11 // pred_check_branch
        %293 = sbr.rel (%p291) target = $region20
      $region19: #{teab_forward.2} parent=11 // pred_region
        _
      $region20: #{teab_forward.2} parent=11 // pred_fallthru
        _
      // Predicated region
      $region21: #{teab_forward.2} parent=11 // pred_check
        %p294 = pneg %p158
      $region22: #{teab_forward.2} parent=11 // pred_check_branch
        %296 = sbr.rel (%p294) target = $region24
      $region23: #{teab_forward.2} parent=11 // pred_region
        _
      $region24: #{teab_forward.2} parent=11 // pred_fallthru
        _
      // Predicated region
      $region25: #{teab_forward.2} parent=11 // pred_check
        %p297 = pneg %p179
      $region26: #{teab_forward.2} parent=11 // pred_check_branch
        %299 = sbr.rel (%p297) target = $region28
      $region27: #{teab_forward.2} parent=11 // pred_region
        _
      $region28: #{teab_forward.2} parent=11 // pred_fallthru
        _
      // Predicated region
      $region29: #{teab_forward.2} parent=11 // pred_check
        %p300 = pneg %p200
      $region30: #{teab_forward.2} parent=11 // pred_check_branch
        %302 = sbr.rel (%p300) target = $region32
      $region31: #{teab_forward.2} parent=11 // pred_region
        _
      $region32: #{teab_forward.2} parent=11 // pred_fallthru
        _
      // Predicated region
      $region33: #{teab_forward.2} parent=11 // pred_check
        %p303 = pneg %p221
      $region34: #{teab_forward.2} parent=11 // pred_check_branch
        %305 = sbr.rel (%p303) target = $region36
      $region35: #{teab_forward.2} parent=11 // pred_region
        _
      $region36: #{teab_forward.2} parent=11 // pred_fallthru
        _
    $region12: #{teab_forward.2} parent=5 // pred_fallthru
      _
    %p306 = scmp.lt.s32.totalorder %s17, 2
    // Predicated region
    $region37: #{teab_forward.2} parent=5 // pred_check
      %p307 = pneg %p306
    $region38: #{teab_forward.2} parent=5 // pred_check_branch
      %309 = sbr.rel (%p307) target = $region40
    $region39: #{teab_forward.2} parent=5 // pred_region
      // Predicated region
      $region41: #{teab_forward.2} parent=39 // pred_check
        %p310 = pneg %p37
      $region42: #{teab_forward.2} parent=39 // pred_check_branch
        %312 = sbr.rel (%p310) target = $region44
      $region43: #{teab_forward.2} parent=39 // pred_region
        %p313 = scmp.lt.s32.totalorder %s17, 1
        %s314 = scalar_select %p313, %s17, 1
        %s315 = smul.addr %s314, 2
        %s316 = smul.addr %s315, 4
        %s317 = scalar_lea.vmem %s0, %s316
      $region44: #{teab_forward.2} parent=39 // pred_fallthru
        _
      // Predicated region
      $region45: #{teab_forward.2} parent=39 // pred_check
        %p318 = pneg %p63
      $region46: #{teab_forward.2} parent=39 // pred_check_branch
        %320 = sbr.rel (%p318) target = $region48
      $region47: #{teab_forward.2} parent=39 // pred_region
        %p321 = scmp.lt.s32.totalorder %s17, 1
        %s322 = scalar_select %p321, %s17, 1
        %s323 = smul.addr %s322, 2
        %s324 = smul.addr %s323, 4
        %s325 = scalar_lea.vmem %s1, %s324
      $region48: #{teab_forward.2} parent=39 // pred_fallthru
        _
      // Predicated region
      $region49: #{teab_forward.2} parent=39 // pred_check
        %p326 = pneg %p89
      $region50: #{teab_forward.2} parent=39 // pred_check_branch
        %328 = sbr.rel (%p326) target = $region52
      $region51: #{teab_forward.2} parent=39 // pred_region
        %p329 = scmp.lt.s32.totalorder %s17, 1
        %s330 = scalar_select %p329, %s17, 1
        %s331 = smul.addr %s330, 2
        %s332 = smul.addr %s331, 4
        %s333 = scalar_lea.vmem %s2, %s332
      $region52: #{teab_forward.2} parent=39 // pred_fallthru
        _
    $region40: #{teab_forward.2} parent=5 // pred_fallthru
      _
    %p334 = scmp.le.s32.totalorder 1, %s17
    %p335 = scmp.lt.s32.totalorder %s17, 3
    %p336 = pnand %p334, %p335
    %p337 = pneg %p336
    // Predicated region
    $region53: #{teab_forward.2} parent=5 // pred_check
      _
    $region54: #{teab_forward.2} parent=5 // pred_check_branch
      %339 = sbr.rel (%p336) target = $region56
    $region55: #{teab_forward.2} parent=5 // pred_region
      %s340 = ssub.s32 %s17, 1
      %p341 = scmp.lt.s32.totalorder %s22, 1
      %s342 = scalar_select %p341, %s22, 1
      %s343 = smul.addr %s342, 2
      %s344 = smul.addr %s343, 4
      %s345 = scalar_lea.vmem %s0, %s344
      %p346 = pneg %p43
      %p347 = pneg %p40
      %p348 = scmp.lt.s32.totalorder %s22, 1
      %s349 = scalar_select %p348, %s22, 1
      %s350 = smul.addr %s349, 2
      %s351 = smul.addr %s350, 4
      %s352 = scalar_lea.vmem %s1, %s351
      %p353 = pneg %p69
      %p354 = pneg %p66
      %p355 = scmp.lt.s32.totalorder %s22, 1
      %s356 = scalar_select %p355, %s22, 1
      %s357 = smul.addr %s356, 2
      %s358 = smul.addr %s357, 4
      %s359 = scalar_lea.vmem %s2, %s358
      %p360 = pneg %p95
      %p361 = pneg %p92
      %p362 = pneg %p116
      %p363 = pneg %p113
      %p364 = pneg %p137
      %p365 = pneg %p134
      %p366 = pneg %p158
      %p367 = pneg %p155
      %p368 = pneg %p179
      %p369 = pneg %p176
      %p370 = pneg %p200
      %p371 = pneg %p197
      %p372 = pneg %p221
      %p373 = pneg %p218
      %p374 = pneg %p247
      %p375 = pneg %p244
      %p376 = scmp.lt.s32.totalorder %s22, 1
      %s377 = scalar_select %p376, %s22, 1
      %s378 = smul.addr %s377, 3
      %s379 = smul.addr %s378, 8
      %s380 = scalar_lea.vmem %s9, %s379
      %p381 = pneg %p273
      %p382 = pneg %p270
      %p383 = scmp.lt.s32.totalorder %s22, 1
      %s384 = scalar_select %p383, %s22, 1
      %s385 = smul.addr %s384, 3
      %s386 = smul.addr %s385, 8
      %s387 = scalar_lea.vmem %s10, %s386
      %p388 = scmp.lt.s32.totalorder %s22, 1
      %s389 = scalar_select %p388, %s22, 1
      %s390 = smul.addr %s389, 2
      %s391 = smul.addr %s390, 4
      %s392 = scalar_lea.vmem %s0, %s391
      %p393 = scmp.lt.s32.totalorder %s22, 1
      %s394 = scalar_select %p393, %s22, 1
      %s395 = smul.addr %s394, 2
      %s396 = smul.addr %s395, 4
      %s397 = scalar_lea.vmem %s1, %s396
      %p398 = scmp.lt.s32.totalorder %s22, 1
      %s399 = scalar_select %p398, %s22, 1
      %s400 = smul.addr %s399, 2
      %s401 = smul.addr %s400, 4
      %s402 = scalar_lea.vmem %s2, %s401
      %p403 = scmp.lt.s32.totalorder %s22, 1
      %s404 = scalar_select %p403, %s22, 1
      %s405 = smul.addr %s404, 3
      %s406 = smul.addr %s405, 8
      %s407 = scalar_lea.vmem %s9, %s406
      %p408 = scmp.lt.s32.totalorder %s22, 1
      %s409 = scalar_select %p408, %s22, 1
      %s410 = smul.addr %s409, 3
      %s411 = smul.addr %s410, 8
      %s412 = scalar_lea.vmem %s10, %s411
      %v414 = vld [vmem:[%s3] sm:$0x3]
      %v415 = vld [vmem:[%s392] sm:$0xf]
      %v416 = vld [vmem:[%s392 + $0x4] sm:$0xf]
      %v417 = vld [vmem:[%s4] sm:$0xf]
      %419 = vset.pattern.permute.xlu0 0
      %420 = vperm.xlu0 %419, %v417
      %v421 = vpop.permute.xlu0 %420
      %v425 = vunpack.c.l.b16 %v415
      %v426 = vunpack.c.l.b16 %v416
      %v427 = vpack.c.b16 %v426, %v425
      %vm429 = vcmask 130048
      %v431 = vsel %vm429, %v414, 0
      %433 = vmatprep.subr.bf16.mxu0 0
      %434 = vmatpush1.bf16.msra.mxu0 %v427
      %435 = vmatprep.subr.bf16.mxu0 0
      %436 = vmatpush1.bf16.msra.mxu0 0
      %437 = vmatprep.subr.bf16.mxu0 0
      %438 = vmatpush1.bf16.msra.mxu0 0
      %439 = vmatprep.subr.bf16.mxu0 0
      %440 = vmatpush1.bf16.msra.mxu0 0
      %441 = vmatprep.subr.bf16.mxu0 0
      %442 = vmatpush1.bf16.msra.mxu0 0
      %443 = vmatprep.subr.bf16.mxu0 0
      %444 = vmatpush1.bf16.msra.mxu0 0
      %445 = vmatprep.subr.bf16.mxu0 0
      %446 = vmatpush1.bf16.msra.mxu0 0
      %447 = vmatprep.subr.bf16.mxu0 0
      %448 = vmatpush1.bf16.msra.mxu0 0
      %449 = vmatprep.subr.bf16.mxu0 0
      %450 = vmatpush1.bf16.msra.mxu0 0
      %451 = vmatprep.subr.bf16.mxu0 0
      %452 = vmatpush1.bf16.msra.mxu0 0
      %453 = vmatprep.subr.bf16.mxu0 0
      %454 = vmatpush1.bf16.msra.mxu0 0
      %455 = vmatprep.subr.bf16.mxu0 0
      %456 = vmatpush1.bf16.msra.mxu0 0
      %457 = vmatprep.subr.bf16.mxu0 0
      %458 = vmatpush1.bf16.msra.mxu0 0
      %459 = vmatprep.subr.bf16.mxu0 0
      %460 = vmatpush1.bf16.msra.mxu0 0
      %461 = vmatprep.subr.bf16.mxu0 0
      %462 = vmatpush1.bf16.msra.mxu0 0
      %463 = vmatprep.subr.bf16.mxu0 0
      %464 = vmatpush1.bf16.msra.mxu0 0
      %465 = vmatprep.mubr.bf16.mxu0 0
      %466 = vmatmul.mubr.bf16.gmra.mrb[0].mxu0 %v431
      %v467 = vpop.f32.mrb[0].mxu0
      %v468 = vadd.f32 %v421, %v467
      %v469 = vpop.f32.mrb[0].mxu0
      %v470 = vpop.f32.mrb[0].mxu0
      %v471 = vpop.f32.mrb[0].mxu0
      %472 = vdwg.mxu0
      %v473 = vpack.c.bf16 %v468, %v468
      %v474 = vld [vmem:[%s397] sm:$0xf]
      %v475 = vld [vmem:[%s397 + $0x4] sm:$0xf]
      %v478 = vunpack.c.l.b16 %v474
      %v479 = vunpack.c.l.b16 %v475
      %v480 = vpack.c.b16 %v479, %v478
      %482 = vmatprep.subr.bf16.mxu0 0
      %483 = vmatpush1.bf16.msra.mxu0 %v480
      %484 = vmatprep.subr.bf16.mxu0 0
      %485 = vmatpush1.bf16.msra.mxu0 0
      %486 = vmatprep.subr.bf16.mxu0 0
      %487 = vmatpush1.bf16.msra.mxu0 0
      %488 = vmatprep.subr.bf16.mxu0 0
      %489 = vmatpush1.bf16.msra.mxu0 0
      %490 = vmatprep.subr.bf16.mxu0 0
      %491 = vmatpush1.bf16.msra.mxu0 0
      %492 = vmatprep.subr.bf16.mxu0 0
      %493 = vmatpush1.bf16.msra.mxu0 0
      %494 = vmatprep.subr.bf16.mxu0 0
      %495 = vmatpush1.bf16.msra.mxu0 0
      %496 = vmatprep.subr.bf16.mxu0 0
      %497 = vmatpush1.bf16.msra.mxu0 0
      %498 = vmatprep.subr.bf16.mxu0 0
      %499 = vmatpush1.bf16.msra.mxu0 0
      %500 = vmatprep.subr.bf16.mxu0 0
      %501 = vmatpush1.bf16.msra.mxu0 0
      %502 = vmatprep.subr.bf16.mxu0 0
      %503 = vmatpush1.bf16.msra.mxu0 0
      %504 = vmatprep.subr.bf16.mxu0 0
      %505 = vmatpush1.bf16.msra.mxu0 0
      %506 = vmatprep.subr.bf16.mxu0 0
      %507 = vmatpush1.bf16.msra.mxu0 0
      %508 = vmatprep.subr.bf16.mxu0 0
      %509 = vmatpush1.bf16.msra.mxu0 0
      %510 = vmatprep.subr.bf16.mxu0 0
      %511 = vmatpush1.bf16.msra.mxu0 0
      %512 = vmatprep.subr.bf16.mxu0 0
      %513 = vmatpush1.bf16.msra.mxu0 0
      %514 = vmatprep.mubr.bf16.mxu0 0
      %515 = vmatmul.mubr.bf16.gmra.mrb[0].mxu0 %v431
      %v516 = vpop.f32.mrb[0].mxu0
      %v517 = vadd.f32 %v421, %v516
      %v518 = vpop.f32.mrb[0].mxu0
      %v519 = vpop.f32.mrb[0].mxu0
      %v520 = vpop.f32.mrb[0].mxu0
      %521 = vdwg.mxu0
      %v522 = vpack.c.bf16 %v517, %v517
      %v523 = vld [vmem:[%s402] sm:$0xf]
      %v524 = vld [vmem:[%s402 + $0x4] sm:$0xf]
      %v527 = vunpack.c.l.b16 %v523
      %v528 = vunpack.c.l.b16 %v524
      %v529 = vpack.c.b16 %v528, %v527
      %531 = vmatprep.subr.bf16.mxu0 0
      %532 = vmatpush1.bf16.msra.mxu0 %v529
      %533 = vmatprep.subr.bf16.mxu0 0
      %534 = vmatpush1.bf16.msra.mxu0 0
      %535 = vmatprep.subr.bf16.mxu0 0
      %536 = vmatpush1.bf16.msra.mxu0 0
      %537 = vmatprep.subr.bf16.mxu0 0
      %538 = vmatpush1.bf16.msra.mxu0 0
      %539 = vmatprep.subr.bf16.mxu0 0
      %540 = vmatpush1.bf16.msra.mxu0 0
      %541 = vmatprep.subr.bf16.mxu0 0
      %542 = vmatpush1.bf16.msra.mxu0 0
      %543 = vmatprep.subr.bf16.mxu0 0
      %544 = vmatpush1.bf16.msra.mxu0 0
      %545 = vmatprep.subr.bf16.mxu0 0
      %546 = vmatpush1.bf16.msra.mxu0 0
      %547 = vmatprep.subr.bf16.mxu0 0
      %548 = vmatpush1.bf16.msra.mxu0 0
      %549 = vmatprep.subr.bf16.mxu0 0
      %550 = vmatpush1.bf16.msra.mxu0 0
      %551 = vmatprep.subr.bf16.mxu0 0
      %552 = vmatpush1.bf16.msra.mxu0 0
      %553 = vmatprep.subr.bf16.mxu0 0
      %554 = vmatpush1.bf16.msra.mxu0 0
      %555 = vmatprep.subr.bf16.mxu0 0
      %556 = vmatpush1.bf16.msra.mxu0 0
      %557 = vmatprep.subr.bf16.mxu0 0
      %558 = vmatpush1.bf16.msra.mxu0 0
      %559 = vmatprep.subr.bf16.mxu0 0
      %560 = vmatpush1.bf16.msra.mxu0 0
      %561 = vmatprep.subr.bf16.mxu0 0
      %562 = vmatpush1.bf16.msra.mxu0 0
      %563 = vmatprep.mubr.bf16.mxu0 0
      %564 = vmatmul.mubr.bf16.gmra.mrb[0].mxu0 %v431
      %v565 = vpop.f32.mrb[0].mxu0
      %v566 = vadd.f32 %v421, %v565
      %v567 = vpop.f32.mrb[0].mxu0
      %v568 = vpop.f32.mrb[0].mxu0
      %v569 = vpop.f32.mrb[0].mxu0
      %570 = vdwg.mxu0
      %v571 = vpack.c.bf16 %v566, %v566
      %v572 = vld [vmem:[%s5] sm:$0x3]
      %s573 = scalar_lea.vmem %s5, 2
      %v574 = vld [vmem:[%s573] sm:$0x3]
      %s575 = scalar_lea.vmem %s5, 4
      %v576 = vld [vmem:[%s575] sm:$0x3]
      %v577 = vld [vmem:[%s7] sm:$0x3]
      %s578 = scalar_lea.vmem %s7, 2
      %v579 = vld [vmem:[%s578] sm:$0x3]
      %s580 = scalar_lea.vmem %s7, 4
      %v581 = vld [vmem:[%s580] sm:$0x3]
      %v582 = vld [vmem:[%s6] sm:$0xf]
      %v583 = vld [vmem:[%s8] sm:$0xf]
      %vm584 = vcmask 31744
      %v586 = vsel %vm584, %v574, 0
      %vm588 = vcmask 1041408
      %v590 = vsel %vm588, %v473, 0
      %592 = vmatprep.subr.bf16.mxu0 0
      %593 = vmatpush1.bf16.msra.mxu0 %v590
      %594 = vmatprep.subr.bf16.mxu0 0
      %595 = vmatpush1.bf16.msra.mxu0 0
      %596 = vmatprep.subr.bf16.mxu0 0
      %597 = vmatpush1.bf16.msra.mxu0 0
      %598 = vmatprep.subr.bf16.mxu0 0
      %599 = vmatpush1.bf16.msra.mxu0 0
      %600 = vmatprep.subr.bf16.mxu0 0
      %601 = vmatpush1.bf16.msra.mxu0 0
      %602 = vmatprep.subr.bf16.mxu0 0
      %603 = vmatpush1.bf16.msra.mxu0 0
      %604 = vmatprep.subr.bf16.mxu0 0
      %605 = vmatpush1.bf16.msra.mxu0 0
      %606 = vmatprep.subr.bf16.mxu0 0
      %607 = vmatpush1.bf16.msra.mxu0 0
      %608 = vmatprep.subr.bf16.mxu0 0
      %609 = vmatpush1.bf16.msra.mxu0 0
      %610 = vmatprep.subr.bf16.mxu0 0
      %611 = vmatpush1.bf16.msra.mxu0 0
      %612 = vmatprep.subr.bf16.mxu0 0
      %613 = vmatpush1.bf16.msra.mxu0 0
      %614 = vmatprep.subr.bf16.mxu0 0
      %615 = vmatpush1.bf16.msra.mxu0 0
      %616 = vmatprep.subr.bf16.mxu0 0
      %617 = vmatpush1.bf16.msra.mxu0 0
      %618 = vmatprep.subr.bf16.mxu0 0
      %619 = vmatpush1.bf16.msra.mxu0 0
      %620 = vmatprep.subr.bf16.mxu0 0
      %621 = vmatpush1.bf16.msra.mxu0 0
      %622 = vmatprep.subr.bf16.mxu0 0
      %623 = vmatpush1.bf16.msra.mxu0 0
      %624 = vmatprep.mubr.bf16.mxu0 0
      %625 = vmatmul.mubr.bf16.gmra.mrb[0].mxu0 %v586
      %v626 = vpop.f32.mrb[0].mxu0
      %v627 = vadd.f32 0.0, %v626
      %v628 = vpop.f32.mrb[0].mxu0
      %v629 = vpop.f32.mrb[0].mxu0
      %v630 = vpop.f32.mrb[0].mxu0
      %631 = vdwg.mxu0
      %v633 = vsel %vm584, %v579, 0
      %635 = vmatprep.subr.bf16.mxu0 0
      %636 = vmatpush1.bf16.msra.mxu0 %v590
      %637 = vmatprep.subr.bf16.mxu0 0
      %638 = vmatpush1.bf16.msra.mxu0 0
      %639 = vmatprep.subr.bf16.mxu0 0
      %640 = vmatpush1.bf16.msra.mxu0 0
      %641 = vmatprep.subr.bf16.mxu0 0
      %642 = vmatpush1.bf16.msra.mxu0 0
      %643 = vmatprep.subr.bf16.mxu0 0
      %644 = vmatpush1.bf16.msra.mxu0 0
      %645 = vmatprep.subr.bf16.mxu0 0
      %646 = vmatpush1.bf16.msra.mxu0 0
      %647 = vmatprep.subr.bf16.mxu0 0
      %648 = vmatpush1.bf16.msra.mxu0 0
      %649 = vmatprep.subr.bf16.mxu0 0
      %650 = vmatpush1.bf16.msra.mxu0 0
      %651 = vmatprep.subr.bf16.mxu0 0
      %652 = vmatpush1.bf16.msra.mxu0 0
      %653 = vmatprep.subr.bf16.mxu0 0
      %654 = vmatpush1.bf16.msra.mxu0 0
      %655 = vmatprep.subr.bf16.mxu0 0
      %656 = vmatpush1.bf16.msra.mxu0 0
      %657 = vmatprep.subr.bf16.mxu0 0
      %658 = vmatpush1.bf16.msra.mxu0 0
      %659 = vmatprep.subr.bf16.mxu0 0
      %660 = vmatpush1.bf16.msra.mxu0 0
      %661 = vmatprep.subr.bf16.mxu0 0
      %662 = vmatpush1.bf16.msra.mxu0 0
      %663 = vmatprep.subr.bf16.mxu0 0
      %664 = vmatpush1.bf16.msra.mxu0 0
      %665 = vmatprep.subr.bf16.mxu0 0
      %666 = vmatpush1.bf16.msra.mxu0 0
      %667 = vmatprep.mubr.bf16.mxu0 0
      %668 = vmatmul.mubr.bf16.gmra.mrb[0].mxu0 %v633
      %v669 = vpop.f32.mrb[0].mxu0
      %v670 = vadd.f32 0.0, %v669
      %v671 = vpop.f32.mrb[0].mxu0
      %v672 = vpop.f32.mrb[0].mxu0
      %v673 = vpop.f32.mrb[0].mxu0
      %674 = vdwg.mxu0
      %676 = vrot.lane.b32.xlu0 %v522, 8
      %v677 = vpop.permute.xlu0 %676
      %vm678 = vcmask 64512
      %v681 = vsel %vm678, 0, %v677
      %683 = vrot.lane.b32.xlu0 %v473, 8
      %v684 = vpop.permute.xlu0 %683
      %v686 = vsel %vm678, 0, %v684
      %687 = vrot.lane.b32.xlu0 %v473, 120
      %v688 = vpop.permute.xlu0 %687
      %vm689 = vcmask 457728
      %v691 = vsel %vm689, %v688, 0
      %692 = vrot.lane.b32.xlu0 %v522, 16
      %v693 = vpop.permute.xlu0 %692
      %v695 = vsel %vm429, 0, %v693
      %696 = vrot.lane.b32.xlu0 %v522, 120
      %v697 = vpop.permute.xlu0 %696
      %v699 = vsel %vm689, %v697, 0
      %701 = vrot.lane.b32.xlu0 %v571, 1
      %v702 = vpop.permute.xlu0 %701
      %vm703 = vcmask 7168
      %v705 = vsel %vm703, 0, %v702
      %v707 = vlaneseq
      %v708 = vand.u32 %v707, 127
      %vm709 = vcmp.lt.s32.totalorder %v708, 0
      %v710 = vsub.s32 0, %v708
      %v711 = vsel %vm709, %v710, %v708
      %v712 = vshrl.u32 %v711, 3
      %v713 = vand.u32 %v711, 7
      %v714 = vsub.s32 0, %v713
      %v715 = vsel %vm709, %v714, %v713
      %vm716 = vcmp.ne.s32.totalorder %v715, 0
      %vm717 = vcmp.lt.s32.totalorder %v715, 0
      %vm718 = vmand %vm717, %vm716
      %v719 = vadd.s32 %v715, 8
      %v720 = vsel %vm718, %v719, %v715
      %vm721 = vcmp.ge.s32.totalorder %v720, 1
      %v722 = vsel %vm721, 1, 0
      %vm723 = vcmp.eq.s32.totalorder %v722, 1
      %vm724 = vmpackc.low %vm723, %vm723
      %v725 = vsel %vm724, %v705, 0
      %726 = vrot.lane.b32.xlu0 %v473, 1
      %v727 = vpop.permute.xlu0 %726
      %v729 = vsel %vm703, 0, %v727
      %v731 = vsel %vm724, %v729, 0
      %732 = vrot.lane.b32.xlu0 %v473, 127
      %v733 = vpop.permute.xlu0 %732
      %vm734 = vcmask 515072
      %v736 = vsel %vm734, %v733, 0
      %vm738 = vcmp.lt.s32.totalorder %v720, 7
      %v739 = vsel %vm738, 1, 0
      %vm740 = vcmp.eq.s32.totalorder %v739, 1
      %vm741 = vmpackc.low %vm740, %vm740
      %v742 = vsel %vm741, %v736, 0
      %743 = vrot.lane.b32.xlu0 %v571, 2
      %v744 = vpop.permute.xlu0 %743
      %vm745 = vcmask 15360
      %v747 = vsel %vm745, 0, %v744
      %vm749 = vcmp.ge.s32.totalorder %v720, 2
      %v750 = vsel %vm749, 1, 0
      %vm751 = vcmp.eq.s32.totalorder %v750, 1
      %vm752 = vmpackc.low %vm751, %vm751
      %v753 = vsel %vm752, %v747, 0
      %754 = vrot.lane.b32.xlu0 %v571, 127
      %v755 = vpop.permute.xlu0 %754
      %v757 = vsel %vm734, %v755, 0
      %v759 = vsel %vm741, %v757, 0
      %v761 = vsel %vm584, %v572, 0
      %v763 = vsel %vm588, %v681, 0
      %765 = vmatprep.subr.bf16.mxu0 0
      %766 = vmatpush1.bf16.msra.mxu0 %v763
      %767 = vmatprep.subr.bf16.mxu0 0
      %768 = vmatpush1.bf16.msra.mxu0 0
      %769 = vmatprep.subr.bf16.mxu0 0
      %770 = vmatpush1.bf16.msra.mxu0 0
      %771 = vmatprep.subr.bf16.mxu0 0
      %772 = vmatpush1.bf16.msra.mxu0 0
      %773 = vmatprep.subr.bf16.mxu0 0
      %774 = vmatpush1.bf16.msra.mxu0 0
      %775 = vmatprep.subr.bf16.mxu0 0
      %776 = vmatpush1.bf16.msra.mxu0 0
      %777 = vmatprep.subr.bf16.mxu0 0
      %778 = vmatpush1.bf16.msra.mxu0 0
      %779 = vmatprep.subr.bf16.mxu0 0
      %780 = vmatpush1.bf16.msra.mxu0 0
      %781 = vmatprep.subr.bf16.mxu0 0
      %782 = vmatpush1.bf16.msra.mxu0 0
      %783 = vmatprep.subr.bf16.mxu0 0
      %784 = vmatpush1.bf16.msra.mxu0 0
      %785 = vmatprep.subr.bf16.mxu0 0
      %786 = vmatpush1.bf16.msra.mxu0 0
      %787 = vmatprep.subr.bf16.mxu0 0
      %788 = vmatpush1.bf16.msra.mxu0 0
      %789 = vmatprep.subr.bf16.mxu0 0
      %790 = vmatpush1.bf16.msra.mxu0 0
      %791 = vmatprep.subr.bf16.mxu0 0
      %792 = vmatpush1.bf16.msra.mxu0 0
      %793 = vmatprep.subr.bf16.mxu0 0
      %794 = vmatpush1.bf16.msra.mxu0 0
      %795 = vmatprep.subr.bf16.mxu0 0
      %796 = vmatpush1.bf16.msra.mxu0 0
      %797 = vmatprep.mubr.bf16.mxu0 0
      %798 = vmatmul.mubr.bf16.gmra.mrb[0].mxu0 %v761
      %v799 = vpop.f32.mrb[0].mxu0
      %v800 = vadd.f32 0.0, %v799
      %v801 = vpop.f32.mrb[0].mxu0
      %v802 = vpop.f32.mrb[0].mxu0
      %v803 = vpop.f32.mrb[0].mxu0
      %804 = vdwg.mxu0
      %v805 = vadd.f32 %v627, %v800
      %v807 = vsel %vm584, %v576, 0
      %v810 = vsel %vm588, %v522, 0
      %812 = vmatprep.subr.bf16.mxu0 0
      %813 = vmatpush1.bf16.msra.mxu0 %v810
      %814 = vmatprep.subr.bf16.mxu0 0
      %815 = vmatpush1.bf16.msra.mxu0 0
      %816 = vmatprep.subr.bf16.mxu0 0
      %817 = vmatpush1.bf16.msra.mxu0 0
      %818 = vmatprep.subr.bf16.mxu0 0
      %819 = vmatpush1.bf16.msra.mxu0 0
      %820 = vmatprep.subr.bf16.mxu0 0
      %821 = vmatpush1.bf16.msra.mxu0 0
      %822 = vmatprep.subr.bf16.mxu0 0
      %823 = vmatpush1.bf16.msra.mxu0 0
      %824 = vmatprep.subr.bf16.mxu0 0
      %825 = vmatpush1.bf16.msra.mxu0 0
      %826 = vmatprep.subr.bf16.mxu0 0
      %827 = vmatpush1.bf16.msra.mxu0 0
      %828 = vmatprep.subr.bf16.mxu0 0
      %829 = vmatpush1.bf16.msra.mxu0 0
      %830 = vmatprep.subr.bf16.mxu0 0
      %831 = vmatpush1.bf16.msra.mxu0 0
      %832 = vmatprep.subr.bf16.mxu0 0
      %833 = vmatpush1.bf16.msra.mxu0 0
      %834 = vmatprep.subr.bf16.mxu0 0
      %835 = vmatpush1.bf16.msra.mxu0 0
      %836 = vmatprep.subr.bf16.mxu0 0
      %837 = vmatpush1.bf16.msra.mxu0 0
      %838 = vmatprep.subr.bf16.mxu0 0
      %839 = vmatpush1.bf16.msra.mxu0 0
      %840 = vmatprep.subr.bf16.mxu0 0
      %841 = vmatpush1.bf16.msra.mxu0 0
      %842 = vmatprep.subr.bf16.mxu0 0
      %843 = vmatpush1.bf16.msra.mxu0 0
      %844 = vmatprep.mubr.bf16.mxu0 0
      %845 = vmatmul.mubr.bf16.gmra.mrb[0].mxu0 %v807
      %v846 = vpop.f32.mrb[0].mxu0
      %v847 = vadd.f32 0.0, %v846
      %v848 = vpop.f32.mrb[0].mxu0
      %v849 = vpop.f32.mrb[0].mxu0
      %v850 = vpop.f32.mrb[0].mxu0
      %851 = vdwg.mxu0
      %v852 = vadd.f32 %v805, %v847
      %854 = vset.pattern.permute.xlu0 0
      %855 = vperm.xlu0 %854, %v582
      %v856 = vpop.permute.xlu0 %855
      %v858 = vadd.f32 %v852, %v856
      %v859 = vsel %vm588, %v686, 0
      %861 = vmatprep.subr.bf16.mxu0 0
      %862 = vmatpush1.bf16.msra.mxu0 %v859
      %863 = vmatprep.subr.bf16.mxu0 0
      %864 = vmatpush1.bf16.msra.mxu0 0
      %865 = vmatprep.subr.bf16.mxu0 0
      %866 = vmatpush1.bf16.msra.mxu0 0
      %867 = vmatprep.subr.bf16.mxu0 0
      %868 = vmatpush1.bf16.msra.mxu0 0
      %869 = vmatprep.subr.bf16.mxu0 0
      %870 = vmatpush1.bf16.msra.mxu0 0
      %871 = vmatprep.subr.bf16.mxu0 0
      %872 = vmatpush1.bf16.msra.mxu0 0
      %873 = vmatprep.subr.bf16.mxu0 0
      %874 = vmatpush1.bf16.msra.mxu0 0
      %875 = vmatprep.subr.bf16.mxu0 0
      %876 = vmatpush1.bf16.msra.mxu0 0
      %877 = vmatprep.subr.bf16.mxu0 0
      %878 = vmatpush1.bf16.msra.mxu0 0
      %879 = vmatprep.subr.bf16.mxu0 0
      %880 = vmatpush1.bf16.msra.mxu0 0
      %881 = vmatprep.subr.bf16.mxu0 0
      %882 = vmatpush1.bf16.msra.mxu0 0
      %883 = vmatprep.subr.bf16.mxu0 0
      %884 = vmatpush1.bf16.msra.mxu0 0
      %885 = vmatprep.subr.bf16.mxu0 0
      %886 = vmatpush1.bf16.msra.mxu0 0
      %887 = vmatprep.subr.bf16.mxu0 0
      %888 = vmatpush1.bf16.msra.mxu0 0
      %889 = vmatprep.subr.bf16.mxu0 0
      %890 = vmatpush1.bf16.msra.mxu0 0
      %891 = vmatprep.subr.bf16.mxu0 0
      %892 = vmatpush1.bf16.msra.mxu0 0
      %893 = vmatprep.mubr.bf16.mxu0 0
      %894 = vmatmul.mubr.bf16.gmra.mrb[0].mxu0 %v761
      %v895 = vpop.f32.mrb[0].mxu0
      %v896 = vadd.f32 0.0, %v895
      %v897 = vpop.f32.mrb[0].mxu0
      %v898 = vpop.f32.mrb[0].mxu0
      %v899 = vpop.f32.mrb[0].mxu0
      %900 = vdwg.mxu0
      %v901 = vadd.f32 %v627, %v896
      %v902 = vsel %vm588, %v691, 0
      %904 = vmatprep.subr.bf16.mxu0 0
      %905 = vmatpush1.bf16.msra.mxu0 %v902
      %906 = vmatprep.subr.bf16.mxu0 0
      %907 = vmatpush1.bf16.msra.mxu0 0
      %908 = vmatprep.subr.bf16.mxu0 0
      %909 = vmatpush1.bf16.msra.mxu0 0
      %910 = vmatprep.subr.bf16.mxu0 0
      %911 = vmatpush1.bf16.msra.mxu0 0
      %912 = vmatprep.subr.bf16.mxu0 0
      %913 = vmatpush1.bf16.msra.mxu0 0
      %914 = vmatprep.subr.bf16.mxu0 0
      %915 = vmatpush1.bf16.msra.mxu0 0
      %916 = vmatprep.subr.bf16.mxu0 0
      %917 = vmatpush1.bf16.msra.mxu0 0
      %918 = vmatprep.subr.bf16.mxu0 0
      %919 = vmatpush1.bf16.msra.mxu0 0
      %920 = vmatprep.subr.bf16.mxu0 0
      %921 = vmatpush1.bf16.msra.mxu0 0
      %922 = vmatprep.subr.bf16.mxu0 0
      %923 = vmatpush1.bf16.msra.mxu0 0
      %924 = vmatprep.subr.bf16.mxu0 0
      %925 = vmatpush1.bf16.msra.mxu0 0
      %926 = vmatprep.subr.bf16.mxu0 0
      %927 = vmatpush1.bf16.msra.mxu0 0
      %928 = vmatprep.subr.bf16.mxu0 0
      %929 = vmatpush1.bf16.msra.mxu0 0
      %930 = vmatprep.subr.bf16.mxu0 0
      %931 = vmatpush1.bf16.msra.mxu0 0
      %932 = vmatprep.subr.bf16.mxu0 0
      %933 = vmatpush1.bf16.msra.mxu0 0
      %934 = vmatprep.subr.bf16.mxu0 0
      %935 = vmatpush1.bf16.msra.mxu0 0
      %936 = vmatprep.mubr.bf16.mxu0 0
      %937 = vmatmul.mubr.bf16.gmra.mrb[0].mxu0 %v807
      %v938 = vpop.f32.mrb[0].mxu0
      %v939 = vadd.f32 0.0, %v938
      %v940 = vpop.f32.mrb[0].mxu0
      %v941 = vpop.f32.mrb[0].mxu0
      %v942 = vpop.f32.mrb[0].mxu0
      %943 = vdwg.mxu0
      %v944 = vadd.f32 %v901, %v939
      %v945 = vadd.f32 %v944, %v856
      %v946 = vsel %vm588, %v695, 0
      %948 = vmatprep.subr.bf16.mxu0 0
      %949 = vmatpush1.bf16.msra.mxu0 %v946
      %950 = vmatprep.subr.bf16.mxu0 0
      %951 = vmatpush1.bf16.msra.mxu0 0
      %952 = vmatprep.subr.bf16.mxu0 0
      %953 = vmatpush1.bf16.msra.mxu0 0
      %954 = vmatprep.subr.bf16.mxu0 0
      %955 = vmatpush1.bf16.msra.mxu0 0
      %956 = vmatprep.subr.bf16.mxu0 0
      %957 = vmatpush1.bf16.msra.mxu0 0
      %958 = vmatprep.subr.bf16.mxu0 0
      %959 = vmatpush1.bf16.msra.mxu0 0
      %960 = vmatprep.subr.bf16.mxu0 0
      %961 = vmatpush1.bf16.msra.mxu0 0
      %962 = vmatprep.subr.bf16.mxu0 0
      %963 = vmatpush1.bf16.msra.mxu0 0
      %964 = vmatprep.subr.bf16.mxu0 0
      %965 = vmatpush1.bf16.msra.mxu0 0
      %966 = vmatprep.subr.bf16.mxu0 0
      %967 = vmatpush1.bf16.msra.mxu0 0
      %968 = vmatprep.subr.bf16.mxu0 0
      %969 = vmatpush1.bf16.msra.mxu0 0
      %970 = vmatprep.subr.bf16.mxu0 0
      %971 = vmatpush1.bf16.msra.mxu0 0
      %972 = vmatprep.subr.bf16.mxu0 0
      %973 = vmatpush1.bf16.msra.mxu0 0
      %974 = vmatprep.subr.bf16.mxu0 0
      %975 = vmatpush1.bf16.msra.mxu0 0
      %976 = vmatprep.subr.bf16.mxu0 0
      %977 = vmatpush1.bf16.msra.mxu0 0
      %978 = vmatprep.subr.bf16.mxu0 0
      %979 = vmatpush1.bf16.msra.mxu0 0
      %980 = vmatprep.mubr.bf16.mxu0 0
      %981 = vmatmul.mubr.bf16.gmra.mrb[0].mxu0 %v761
      %v982 = vpop.f32.mrb[0].mxu0
      %v983 = vadd.f32 0.0, %v982
      %v984 = vpop.f32.mrb[0].mxu0
      %v985 = vpop.f32.mrb[0].mxu0
      %v986 = vpop.f32.mrb[0].mxu0
      %987 = vdwg.mxu0
      %v988 = vadd.f32 %v627, %v983
      %v989 = vsel %vm588, %v699, 0
      %991 = vmatprep.subr.bf16.mxu0 0
      %992 = vmatpush1.bf16.msra.mxu0 %v989
      %993 = vmatprep.subr.bf16.mxu0 0
      %994 = vmatpush1.bf16.msra.mxu0 0
      %995 = vmatprep.subr.bf16.mxu0 0
      %996 = vmatpush1.bf16.msra.mxu0 0
      %997 = vmatprep.subr.bf16.mxu0 0
      %998 = vmatpush1.bf16.msra.mxu0 0
      %999 = vmatprep.subr.bf16.mxu0 0
      %1000 = vmatpush1.bf16.msra.mxu0 0
      %1001 = vmatprep.subr.bf16.mxu0 0
      %1002 = vmatpush1.bf16.msra.mxu0 0
      %1003 = vmatprep.subr.bf16.mxu0 0
      %1004 = vmatpush1.bf16.msra.mxu0 0
      %1005 = vmatprep.subr.bf16.mxu0 0
      %1006 = vmatpush1.bf16.msra.mxu0 0
      %1007 = vmatprep.subr.bf16.mxu0 0
      %1008 = vmatpush1.bf16.msra.mxu0 0
      %1009 = vmatprep.subr.bf16.mxu0 0
      %1010 = vmatpush1.bf16.msra.mxu0 0
      %1011 = vmatprep.subr.bf16.mxu0 0
      %1012 = vmatpush1.bf16.msra.mxu0 0
      %1013 = vmatprep.subr.bf16.mxu0 0
      %1014 = vmatpush1.bf16.msra.mxu0 0
      %1015 = vmatprep.subr.bf16.mxu0 0
      %1016 = vmatpush1.bf16.msra.mxu0 0
      %1017 = vmatprep.subr.bf16.mxu0 0
      %1018 = vmatpush1.bf16.msra.mxu0 0
      %1019 = vmatprep.subr.bf16.mxu0 0
      %1020 = vmatpush1.bf16.msra.mxu0 0
      %1021 = vmatprep.subr.bf16.mxu0 0
      %1022 = vmatpush1.bf16.msra.mxu0 0
      %1023 = vmatprep.mubr.bf16.mxu0 0
      %1024 = vmatmul.mubr.bf16.gmra.mrb[0].mxu0 %v807
      %v1025 = vpop.f32.mrb[0].mxu0
      %v1026 = vadd.f32 0.0, %v1025
      %v1027 = vpop.f32.mrb[0].mxu0
      %v1028 = vpop.f32.mrb[0].mxu0
      %v1029 = vpop.f32.mrb[0].mxu0
      %1030 = vdwg.mxu0
      %v1031 = vadd.f32 %v988, %v1026
      %v1032 = vadd.f32 %v1031, %v856
      %v1034 = vsel %vm584, %v577, 0
      %v1037 = vsel %vm588, %v725, 0
      %1039 = vmatprep.subr.bf16.mxu0 0
      %1040 = vmatpush1.bf16.msra.mxu0 %v1037
      %1041 = vmatprep.subr.bf16.mxu0 0
      %1042 = vmatpush1.bf16.msra.mxu0 0
      %1043 = vmatprep.subr.bf16.mxu0 0
      %1044 = vmatpush1.bf16.msra.mxu0 0
      %1045 = vmatprep.subr.bf16.mxu0 0
      %1046 = vmatpush1.bf16.msra.mxu0 0
      %1047 = vmatprep.subr.bf16.mxu0 0
      %1048 = vmatpush1.bf16.msra.mxu0 0
      %1049 = vmatprep.subr.bf16.mxu0 0
      %1050 = vmatpush1.bf16.msra.mxu0 0
      %1051 = vmatprep.subr.bf16.mxu0 0
      %1052 = vmatpush1.bf16.msra.mxu0 0
      %1053 = vmatprep.subr.bf16.mxu0 0
      %1054 = vmatpush1.bf16.msra.mxu0 0
      %1055 = vmatprep.subr.bf16.mxu0 0
      %1056 = vmatpush1.bf16.msra.mxu0 0
      %1057 = vmatprep.subr.bf16.mxu0 0
      %1058 = vmatpush1.bf16.msra.mxu0 0
      %1059 = vmatprep.subr.bf16.mxu0 0
      %1060 = vmatpush1.bf16.msra.mxu0 0
      %1061 = vmatprep.subr.bf16.mxu0 0
      %1062 = vmatpush1.bf16.msra.mxu0 0
      %1063 = vmatprep.subr.bf16.mxu0 0
      %1064 = vmatpush1.bf16.msra.mxu0 0
      %1065 = vmatprep.subr.bf16.mxu0 0
      %1066 = vmatpush1.bf16.msra.mxu0 0
      %1067 = vmatprep.subr.bf16.mxu0 0
      %1068 = vmatpush1.bf16.msra.mxu0 0
      %1069 = vmatprep.subr.bf16.mxu0 0
      %1070 = vmatpush1.bf16.msra.mxu0 0
      %1071 = vmatprep.mubr.bf16.mxu0 0
      %1072 = vmatmul.mubr.bf16.gmra.mrb[0].mxu0 %v1034
      %v1073 = vpop.f32.mrb[0].mxu0
      %v1074 = vadd.f32 0.0, %v1073
      %v1075 = vpop.f32.mrb[0].mxu0
      %v1076 = vpop.f32.mrb[0].mxu0
      %v1077 = vpop.f32.mrb[0].mxu0
      %1078 = vdwg.mxu0
      %v1079 = vadd.f32 %v670, %v1074
      %v1081 = vsel %vm584, %v581, 0
      %v1084 = vsel %vm588, %v571, 0
      %1086 = vmatprep.subr.bf16.mxu0 0
      %1087 = vmatpush1.bf16.msra.mxu0 %v1084
      %1088 = vmatprep.subr.bf16.mxu0 0
      %1089 = vmatpush1.bf16.msra.mxu0 0
      %1090 = vmatprep.subr.bf16.mxu0 0
      %1091 = vmatpush1.bf16.msra.mxu0 0
      %1092 = vmatprep.subr.bf16.mxu0 0
      %1093 = vmatpush1.bf16.msra.mxu0 0
      %1094 = vmatprep.subr.bf16.mxu0 0
      %1095 = vmatpush1.bf16.msra.mxu0 0
      %1096 = vmatprep.subr.bf16.mxu0 0
      %1097 = vmatpush1.bf16.msra.mxu0 0
      %1098 = vmatprep.subr.bf16.mxu0 0
      %1099 = vmatpush1.bf16.msra.mxu0 0
      %1100 = vmatprep.subr.bf16.mxu0 0
      %1101 = vmatpush1.bf16.msra.mxu0 0
      %1102 = vmatprep.subr.bf16.mxu0 0
      %1103 = vmatpush1.bf16.msra.mxu0 0
      %1104 = vmatprep.subr.bf16.mxu0 0
      %1105 = vmatpush1.bf16.msra.mxu0 0
      %1106 = vmatprep.subr.bf16.mxu0 0
      %1107 = vmatpush1.bf16.msra.mxu0 0
      %1108 = vmatprep.subr.bf16.mxu0 0
      %1109 = vmatpush1.bf16.msra.mxu0 0
      %1110 = vmatprep.subr.bf16.mxu0 0
      %1111 = vmatpush1.bf16.msra.mxu0 0
      %1112 = vmatprep.subr.bf16.mxu0 0
      %1113 = vmatpush1.bf16.msra.mxu0 0
      %1114 = vmatprep.subr.bf16.mxu0 0
      %1115 = vmatpush1.bf16.msra.mxu0 0
      %1116 = vmatprep.subr.bf16.mxu0 0
      %1117 = vmatpush1.bf16.msra.mxu0 0
      %1118 = vmatprep.mubr.bf16.mxu0 0
      %1119 = vmatmul.mubr.bf16.gmra.mrb[0].mxu0 %v1081
      %v1120 = vpop.f32.mrb[0].mxu0
      %v1121 = vadd.f32 0.0, %v1120
      %v1122 = vpop.f32.mrb[0].mxu0
      %v1123 = vpop.f32.mrb[0].mxu0
      %v1124 = vpop.f32.mrb[0].mxu0
      %1125 = vdwg.mxu0
      %v1126 = vadd.f32 %v1079, %v1121
      %1128 = vset.pattern.permute.xlu0 0
      %1129 = vperm.xlu0 %1128, %v583
      %v1130 = vpop.permute.xlu0 %1129
      %v1132 = vadd.f32 %v1126, %v1130
      %v1134 = vsel %vm588, %v731, 0
      %1136 = vmatprep.subr.bf16.mxu0 0
      %1137 = vmatpush1.bf16.msra.mxu0 %v1134
      %1138 = vmatprep.subr.bf16.mxu0 0
      %1139 = vmatpush1.bf16.msra.mxu0 0
      %1140 = vmatprep.subr.bf16.mxu0 0
      %1141 = vmatpush1.bf16.msra.mxu0 0
      %1142 = vmatprep.subr.bf16.mxu0 0
      %1143 = vmatpush1.bf16.msra.mxu0 0
      %1144 = vmatprep.subr.bf16.mxu0 0
      %1145 = vmatpush1.bf16.msra.mxu0 0
      %1146 = vmatprep.subr.bf16.mxu0 0
      %1147 = vmatpush1.bf16.msra.mxu0 0
      %1148 = vmatprep.subr.bf16.mxu0 0
      %1149 = vmatpush1.bf16.msra.mxu0 0
      %1150 = vmatprep.subr.bf16.mxu0 0
      %1151 = vmatpush1.bf16.msra.mxu0 0
      %1152 = vmatprep.subr.bf16.mxu0 0
      %1153 = vmatpush1.bf16.msra.mxu0 0
      %1154 = vmatprep.subr.bf16.mxu0 0
      %1155 = vmatpush1.bf16.msra.mxu0 0
      %1156 = vmatprep.subr.bf16.mxu0 0
      %1157 = vmatpush1.bf16.msra.mxu0 0
      %1158 = vmatprep.subr.bf16.mxu0 0
      %1159 = vmatpush1.bf16.msra.mxu0 0
      %1160 = vmatprep.subr.bf16.mxu0 0
      %1161 = vmatpush1.bf16.msra.mxu0 0
      %1162 = vmatprep.subr.bf16.mxu0 0
      %1163 = vmatpush1.bf16.msra.mxu0 0
      %1164 = vmatprep.subr.bf16.mxu0 0
      %1165 = vmatpush1.bf16.msra.mxu0 0
      %1166 = vmatprep.subr.bf16.mxu0 0
      %1167 = vmatpush1.bf16.msra.mxu0 0
      %1168 = vmatprep.mubr.bf16.mxu0 0
      %1169 = vmatmul.mubr.bf16.gmra.mrb[0].mxu0 %v1034
      %v1170 = vpop.f32.mrb[0].mxu0
      %v1171 = vadd.f32 0.0, %v1170
      %v1172 = vpop.f32.mrb[0].mxu0
      %v1173 = vpop.f32.mrb[0].mxu0
      %v1174 = vpop.f32.mrb[0].mxu0
      %1175 = vdwg.mxu0
      %v1176 = vadd.f32 %v670, %v1171
      %v1178 = vsel %vm588, %v742, 0
      %1180 = vmatprep.subr.bf16.mxu0 0
      %1181 = vmatpush1.bf16.msra.mxu0 %v1178
      %1182 = vmatprep.subr.bf16.mxu0 0
      %1183 = vmatpush1.bf16.msra.mxu0 0
      %1184 = vmatprep.subr.bf16.mxu0 0
      %1185 = vmatpush1.bf16.msra.mxu0 0
      %1186 = vmatprep.subr.bf16.mxu0 0
      %1187 = vmatpush1.bf16.msra.mxu0 0
      %1188 = vmatprep.subr.bf16.mxu0 0
      %1189 = vmatpush1.bf16.msra.mxu0 0
      %1190 = vmatprep.subr.bf16.mxu0 0
      %1191 = vmatpush1.bf16.msra.mxu0 0
      %1192 = vmatprep.subr.bf16.mxu0 0
      %1193 = vmatpush1.bf16.msra.mxu0 0
      %1194 = vmatprep.subr.bf16.mxu0 0
      %1195 = vmatpush1.bf16.msra.mxu0 0
      %1196 = vmatprep.subr.bf16.mxu0 0
      %1197 = vmatpush1.bf16.msra.mxu0 0
      %1198 = vmatprep.subr.bf16.mxu0 0
      %1199 = vmatpush1.bf16.msra.mxu0 0
      %1200 = vmatprep.subr.bf16.mxu0 0
      %1201 = vmatpush1.bf16.msra.mxu0 0
      %1202 = vmatprep.subr.bf16.mxu0 0
      %1203 = vmatpush1.bf16.msra.mxu0 0
      %1204 = vmatprep.subr.bf16.mxu0 0
      %1205 = vmatpush1.bf16.msra.mxu0 0
      %1206 = vmatprep.subr.bf16.mxu0 0
      %1207 = vmatpush1.bf16.msra.mxu0 0
      %1208 = vmatprep.subr.bf16.mxu0 0
      %1209 = vmatpush1.bf16.msra.mxu0 0
      %1210 = vmatprep.subr.bf16.mxu0 0
      %1211 = vmatpush1.bf16.msra.mxu0 0
      %1212 = vmatprep.mubr.bf16.mxu0 0
      %1213 = vmatmul.mubr.bf16.gmra.mrb[0].mxu0 %v1081
      %v1214 = vpop.f32.mrb[0].mxu0
      %v1215 = vadd.f32 0.0, %v1214
      %v1216 = vpop.f32.mrb[0].mxu0
      %v1217 = vpop.f32.mrb[0].mxu0
      %v1218 = vpop.f32.mrb[0].mxu0
      %1219 = vdwg.mxu0
      %v1220 = vadd.f32 %v1176, %v1215
      %v1221 = vadd.f32 %v1220, %v1130
      %v1223 = vsel %vm588, %v753, 0
      %1225 = vmatprep.subr.bf16.mxu0 0
      %1226 = vmatpush1.bf16.msra.mxu0 %v1223
      %1227 = vmatprep.subr.bf16.mxu0 0
      %1228 = vmatpush1.bf16.msra.mxu0 0
      %1229 = vmatprep.subr.bf16.mxu0 0
      %1230 = vmatpush1.bf16.msra.mxu0 0
      %1231 = vmatprep.subr.bf16.mxu0 0
      %1232 = vmatpush1.bf16.msra.mxu0 0
      %1233 = vmatprep.subr.bf16.mxu0 0
      %1234 = vmatpush1.bf16.msra.mxu0 0
      %1235 = vmatprep.subr.bf16.mxu0 0
      %1236 = vmatpush1.bf16.msra.mxu0 0
      %1237 = vmatprep.subr.bf16.mxu0 0
      %1238 = vmatpush1.bf16.msra.mxu0 0
      %1239 = vmatprep.subr.bf16.mxu0 0
      %1240 = vmatpush1.bf16.msra.mxu0 0
      %1241 = vmatprep.subr.bf16.mxu0 0
      %1242 = vmatpush1.bf16.msra.mxu0 0
      %1243 = vmatprep.subr.bf16.mxu0 0
      %1244 = vmatpush1.bf16.msra.mxu0 0
      %1245 = vmatprep.subr.bf16.mxu0 0
      %1246 = vmatpush1.bf16.msra.mxu0 0
      %1247 = vmatprep.subr.bf16.mxu0 0
      %1248 = vmatpush1.bf16.msra.mxu0 0
      %1249 = vmatprep.subr.bf16.mxu0 0
      %1250 = vmatpush1.bf16.msra.mxu0 0
      %1251 = vmatprep.subr.bf16.mxu0 0
      %1252 = vmatpush1.bf16.msra.mxu0 0
      %1253 = vmatprep.subr.bf16.mxu0 0
      %1254 = vmatpush1.bf16.msra.mxu0 0
      %1255 = vmatprep.subr.bf16.mxu0 0
      %1256 = vmatpush1.bf16.msra.mxu0 0
      %1257 = vmatprep.mubr.bf16.mxu0 0
      %1258 = vmatmul.mubr.bf16.gmra.mrb[0].mxu0 %v1034
      %v1259 = vpop.f32.mrb[0].mxu0
      %v1260 = vadd.f32 0.0, %v1259
      %v1261 = vpop.f32.mrb[0].mxu0
      %v1262 = vpop.f32.mrb[0].mxu0
      %v1263 = vpop.f32.mrb[0].mxu0
      %1264 = vdwg.mxu0
      %v1265 = vadd.f32 %v670, %v1260
      %v1267 = vsel %vm588, %v759, 0
      %1269 = vmatprep.subr.bf16.mxu0 0
      %1270 = vmatpush1.bf16.msra.mxu0 %v1267
      %1271 = vmatprep.subr.bf16.mxu0 0
      %1272 = vmatpush1.bf16.msra.mxu0 0
      %1273 = vmatprep.subr.bf16.mxu0 0
      %1274 = vmatpush1.bf16.msra.mxu0 0
      %1275 = vmatprep.subr.bf16.mxu0 0
      %1276 = vmatpush1.bf16.msra.mxu0 0
      %1277 = vmatprep.subr.bf16.mxu0 0
      %1278 = vmatpush1.bf16.msra.mxu0 0
      %1279 = vmatprep.subr.bf16.mxu0 0
      %1280 = vmatpush1.bf16.msra.mxu0 0
      %1281 = vmatprep.subr.bf16.mxu0 0
      %1282 = vmatpush1.bf16.msra.mxu0 0
      %1283 = vmatprep.subr.bf16.mxu0 0
      %1284 = vmatpush1.bf16.msra.mxu0 0
      %1285 = vmatprep.subr.bf16.mxu0 0
      %1286 = vmatpush1.bf16.msra.mxu0 0
      %1287 = vmatprep.subr.bf16.mxu0 0
      %1288 = vmatpush1.bf16.msra.mxu0 0
      %1289 = vmatprep.subr.bf16.mxu0 0
      %1290 = vmatpush1.bf16.msra.mxu0 0
      %1291 = vmatprep.subr.bf16.mxu0 0
      %1292 = vmatpush1.bf16.msra.mxu0 0
      %1293 = vmatprep.subr.bf16.mxu0 0
      %1294 = vmatpush1.bf16.msra.mxu0 0
      %1295 = vmatprep.subr.bf16.mxu0 0
      %1296 = vmatpush1.bf16.msra.mxu0 0
      %1297 = vmatprep.subr.bf16.mxu0 0
      %1298 = vmatpush1.bf16.msra.mxu0 0
      %1299 = vmatprep.subr.bf16.mxu0 0
      %1300 = vmatpush1.bf16.msra.mxu0 0
      %1301 = vmatprep.mubr.bf16.mxu0 0
      %1302 = vmatmul.mubr.bf16.gmra.mrb[0].mxu0 %v1081
      %v1303 = vpop.f32.mrb[0].mxu0
      %v1304 = vadd.f32 0.0, %v1303
      %v1305 = vpop.f32.mrb[0].mxu0
      %v1306 = vpop.f32.mrb[0].mxu0
      %v1307 = vpop.f32.mrb[0].mxu0
      %1308 = vdwg.mxu0
      %v1309 = vadd.f32 %v1265, %v1304
      %v1310 = vadd.f32 %v1309, %v1130
      %v1312 = vrot.slane %v945, 4
      %v1315 = vrot.slane %v1132, 4
      %v1318 = vrot.slane %v1310, 4
      %vm1320 = vcmask 1043456
      %v1321 = vsel %vm1320, %v858, %v1312
      %v1322 = vsel %vm1320, %v1032, %v1315
      %v1323 = vsel %vm1320, %v1221, %v1318
      %vm1324 = vcmask 523264
      %1325 = vst.msk [vmem:[%s407] sm:$0xff] %vm1324, %v1321
      %1326 = vst.msk [vmem:[%s407 + $0x8] sm:$0xff] %vm1324, %v1322
      %1327 = vst.msk [vmem:[%s407 + $0x10] sm:$0xff] %vm1324, %v1323
      %v1328 = vsel %vm1324, %v1321, 0.0
      %1329 = vadd.xlane.f32.xlu0 %v1328
      %v1330 = vpop.xlane.xlu0 %1329
      %v1331 = vsel %vm1324, %v1322, 0.0
      %1332 = vadd.xlane.f32.xlu0 %v1331
      %v1333 = vpop.xlane.xlu0 %1332
      %v1334 = vsel %vm1324, %v1323, 0.0
      %1335 = vadd.xlane.f32.xlu0 %v1334
      %v1336 = vpop.xlane.xlu0 %1335
      %v1337 = vmul.f32 %v1321, %v1321
      %v1338 = vmul.f32 %v1322, %v1322
      %v1339 = vmul.f32 %v1323, %v1323
      %v1340 = vsel %vm1324, %v1337, 0.0
      %1341 = vadd.xlane.f32.xlu0 %v1340
      %v1342 = vpop.xlane.xlu0 %1341
      %v1343 = vsel %vm1324, %v1338, 0.0
      %1344 = vadd.xlane.f32.xlu0 %v1343
      %v1345 = vpop.xlane.xlu0 %1344
      %v1346 = vsel %vm1324, %v1339, 0.0
      %1347 = vadd.xlane.f32.xlu0 %v1346
      %v1348 = vpop.xlane.xlu0 %1347
      %v1349 = vsel %vm703, %v1330, %v1342
      %v1350 = vsel %vm703, %v1333, %v1345
      %v1351 = vsel %vm703, %v1336, %v1348
      %1352 = vst.msk [vmem:[%s412] sm:$0xff] %vm745, %v1349
      %1353 = vst.msk [vmem:[%s412 + $0x8] sm:$0xff] %vm745, %v1350
      %1354 = vst.msk [vmem:[%s412 + $0x10] sm:$0xff] %vm745, %v1351
      %p1355 = scmp.lt.s32.totalorder %s22, 1
      %s1356 = scalar_select %p1355, %s22, 1
      %s1357 = smul.addr %s1356, 3
      %s1358 = smul.addr %s1357, 8
      %s1359 = scalar_lea.vmem %s9, %s1358
      %p1360 = scmp.lt.s32.totalorder %s22, 1
      %s1361 = scalar_select %p1360, %s22, 1
      %s1362 = smul.addr %s1361, 3
      %s1363 = smul.addr %s1362, 8
      %s1364 = scalar_lea.vmem %s10, %s1363
      // Predicated region
      $region57: #{teab_forward.2} parent=55 // pred_check
        %p1365 = pneg %p244
      $region58: #{teab_forward.2} parent=55 // pred_check_branch
        %1367 = sbr.rel (%p1365) target = $region60
      $region59: #{teab_forward.2} parent=55 // pred_region
        _
      $region60: #{teab_forward.2} parent=55 // pred_fallthru
        _
      // Predicated region
      $region61: #{teab_forward.2} parent=55 // pred_check
        %p1368 = pneg %p270
      $region62: #{teab_forward.2} parent=55 // pred_check_branch
        %1370 = sbr.rel (%p1368) target = $region64
      $region63: #{teab_forward.2} parent=55 // pred_region
        _
      $region64: #{teab_forward.2} parent=55 // pred_fallthru
        _
    $region56: #{teab_forward.2} parent=5 // pred_fallthru
      _
    %p1371 = scmp.le.s32.totalorder 2, %s17
    // Predicated region
    $region65: #{teab_forward.2} parent=5 // pred_check
      %p1372 = pneg %p1371
    $region66: #{teab_forward.2} parent=5 // pred_check_branch
      %1374 = sbr.rel (%p1372) target = $region68
    $region67: #{teab_forward.2} parent=5 // pred_region
      %s1375 = ssub.s32 %s17, 2
      // Predicated region
      $region69: #{teab_forward.2} parent=67 // pred_check
        %p1376 = pneg %p250
      $region70: #{teab_forward.2} parent=67 // pred_check_branch
        %1378 = sbr.rel (%p1376) target = $region72
      $region71: #{teab_forward.2} parent=67 // pred_region
        %p1379 = scmp.lt.s32.totalorder %s23, 1
        %s1380 = scalar_select %p1379, %s23, 1
        %s1381 = smul.addr %s1380, 3
        %s1382 = smul.addr %s1381, 8
        %s1383 = scalar_lea.vmem %s9, %s1382
      $region72: #{teab_forward.2} parent=67 // pred_fallthru
        _
      // Predicated region
      $region73: #{teab_forward.2} parent=67 // pred_check
        %p1384 = pneg %p276
      $region74: #{teab_forward.2} parent=67 // pred_check_branch
        %1386 = sbr.rel (%p1384) target = $region76
      $region75: #{teab_forward.2} parent=67 // pred_region
        %p1387 = scmp.lt.s32.totalorder %s23, 1
        %s1388 = scalar_select %p1387, %s23, 1
        %s1389 = smul.addr %s1388, 3
        %s1390 = smul.addr %s1389, 8
        %s1391 = scalar_lea.vmem %s10, %s1390
      $region76: #{teab_forward.2} parent=67 // pred_fallthru
        _
    $region68: #{teab_forward.2} parent=5 // pred_fallthru
      _
  $region6: #{teab_forward.2} parent=0 // loop_footer
    %s21 = sadd.s32 1, %s17
  $region7: #{teab_forward.2} parent=0 // loop_footer_branch
    %16 = sbr.rel target = $region3
  $region8: #{teab_forward.2} parent=0 // loop_exit
    _

// kernel: teab_forward.3
$region0: #{teab_forward.3}
  #allocation0 [shape = 'u32[]', space=smem, size = 0x4, offset = 0x4, fixed_abs, tag = 'smem constant byte address 0x4 - core index']
  #allocation1 [shape = 'u32[144,128]{1,0:T(1,128)}', space=vmem, size = 0x12000, scoped, tag = 'internal scratch']
  %s0 = inlined_call_operand.vmem [shape: f32[2,24,64], index: 0, kind: input, shape index: {}]
  %s1 = inlined_call_operand.vmem [shape: f32[24,1], index: 1, kind: input, shape index: {}]
  %s2 = inlined_call_operand.vmem [shape: f32[24,1], index: 2, kind: input, shape index: {}]
  %s3 = inlined_call_operand.vmem [shape: f32[64,9], index: 3, kind: input, shape index: {}]
  %s4 = inlined_call_operand.vmem [shape: bf16[9,24,24], index: 4, kind: input, shape index: {}]
  %s5 = inlined_call_operand.vmem [shape: f32[24,1], index: 5, kind: input, shape index: {}]
  %s6 = inlined_call_operand.vmem [shape: bf16[16,24], index: 6, kind: input, shape index: {}]
  %s7 = inlined_call_operand.vmem [shape: f32[16,1], index: 7, kind: input, shape index: {}]
  %s8 = inlined_call_operand.vmem [shape: f32[9,256], index: 8, kind: input, shape index: {}]
  %s9 = inlined_call_operand.vmem [shape: f32[2,16,256], index: 9, kind: input, shape index: {}]
  %s10 = inlined_call_operand.vmem [shape: f32[2,16,256], index: 10, kind: output, shape index: {}]
  %s11 = sld [smem:[#allocation0]]
  $region73: #{teab_forward.3} parent=0
    _
  %s13 = ssub.s32 1, %s11
  %s14 = scalar_select 0, %s13, %s11
  loop: start=0, step=1, limit=4
  $region2: #{teab_forward.3} parent=0 // loop_pre_header
    _
  $region3: #{teab_forward.3} parent=0 // loop_header
    %s16 = sphi 0, %s20
    %p17 = scmp.ge.s32.totalorder %s16, 4
    %s26 = sphi 0, %s28
    %s29 = sphi 0, %s26
    %s30 = sphi 0, %s29
    %s46 = sphi 0, %s30
    %s50 = sphi 0, %s50
    %s52 = sphi 0, %s50
    %s53 = sphi 0, %s52
    %s67 = sphi 0, %s53
    %s71 = sphi 0, %s71
    %s73 = sphi 0, %s71
    %s74 = sphi 0, %s73
    %s88 = sphi 0, %s74
    %s92 = sphi 0, %s92
    %s94 = sphi 0, %s92
    %s95 = sphi 0, %s94
    %s109 = sphi 0, %s95
    %s113 = sphi 0, %s113
    %s115 = sphi 0, %s113
    %s116 = sphi 0, %s115
    %s130 = sphi 0, %s116
    %s134 = sphi 0, %s134
    %s136 = sphi 0, %s134
    %s137 = sphi 0, %s136
    %s151 = sphi 0, %s137
    %s155 = sphi 0, %s155
    %s157 = sphi 0, %s155
    %s158 = sphi 0, %s157
    %s172 = sphi 0, %s158
    %s176 = sphi 0, %s176
    %s178 = sphi 0, %s176
    %s179 = sphi 0, %s178
    %s193 = sphi 0, %s179
    %s197 = sphi 0, %s197
    %s199 = sphi 0, %s197
    %s200 = sphi 0, %s199
    %s214 = sphi 0, %s200
    %s220 = sphi 0, %s222
    %s223 = sphi 0, %s220
    %s224 = sphi 0, %s223
    %s240 = sphi 0, %s224
    %s246 = sphi 0, %s248
    %s249 = sphi 0, %s246
    %s250 = sphi 0, %s249
    %s266 = sphi 0, %s250
  $region4: #{teab_forward.3} parent=0 // loop_header_branch
    %19 = sbr.rel (%p17) target = $region8
  $region5: #{teab_forward.3} parent=0 // loop_body
    %s21 = ssub.s32 %s16, 1
    %s22 = ssub.s32 %s16, 2
    %s23 = sadd.s32 %s16, 1
    %s24 = ssub.s32 %s16, %s23
    %p25 = scmp.eq.s32.totalorder %s24, 0
    %s27 = sadd.s32 %s26, 1
    %s28 = scalar_select %p25, %s26, %s27
    %p31 = pneg %p25
    %p32 = scmp.eq.s32.totalorder %s16, 1
    %p33 = por %p31, %p32
    %p34 = scmp.ne.s32.totalorder %s26, %s29
    %p35 = scmp.eq.s32.totalorder %s16, 0
    %p36 = por %p34, %p35
    %p37 = scmp.ne.s32.totalorder %s26, %s29
    %p38 = scmp.eq.s32.totalorder %s21, 1
    %p39 = por %p37, %p38
    %p40 = scmp.ne.s32.totalorder %s29, %s30
    %p41 = scmp.eq.s32.totalorder %s21, 0
    %p42 = por %p40, %p41
    %p43 = scmp.ne.s32.totalorder %s29, %s30
    %p44 = scmp.eq.s32.totalorder %s22, 1
    %p45 = por %p43, %p44
    %p47 = scmp.ne.s32.totalorder %s30, %s46
    %p48 = scmp.eq.s32.totalorder %s22, 0
    %p49 = por %p47, %p48
    %s51 = sadd.s32 %s50, 1
    %p54 = scmp.eq.s32.totalorder %s16, 1
    %p55 = scmp.ne.s32.totalorder %s50, %s52
    %p56 = scmp.eq.s32.totalorder %s16, 0
    %p57 = por %p55, %p56
    %p58 = scmp.ne.s32.totalorder %s50, %s52
    %p59 = scmp.eq.s32.totalorder %s21, 1
    %p60 = por %p58, %p59
    %p61 = scmp.ne.s32.totalorder %s52, %s53
    %p62 = scmp.eq.s32.totalorder %s21, 0
    %p63 = por %p61, %p62
    %p64 = scmp.ne.s32.totalorder %s52, %s53
    %p65 = scmp.eq.s32.totalorder %s22, 1
    %p66 = por %p64, %p65
    %p68 = scmp.ne.s32.totalorder %s53, %s67
    %p69 = scmp.eq.s32.totalorder %s22, 0
    %p70 = por %p68, %p69
    %s72 = sadd.s32 %s71, 1
    %p75 = scmp.eq.s32.totalorder %s16, 1
    %p76 = scmp.ne.s32.totalorder %s71, %s73
    %p77 = scmp.eq.s32.totalorder %s16, 0
    %p78 = por %p76, %p77
    %p79 = scmp.ne.s32.totalorder %s71, %s73
    %p80 = scmp.eq.s32.totalorder %s21, 1
    %p81 = por %p79, %p80
    %p82 = scmp.ne.s32.totalorder %s73, %s74
    %p83 = scmp.eq.s32.totalorder %s21, 0
    %p84 = por %p82, %p83
    %p85 = scmp.ne.s32.totalorder %s73, %s74
    %p86 = scmp.eq.s32.totalorder %s22, 1
    %p87 = por %p85, %p86
    %p89 = scmp.ne.s32.totalorder %s74, %s88
    %p90 = scmp.eq.s32.totalorder %s22, 0
    %p91 = por %p89, %p90
    %s93 = sadd.s32 %s92, 1
    %p96 = scmp.eq.s32.totalorder %s16, 1
    %p97 = scmp.ne.s32.totalorder %s92, %s94
    %p98 = scmp.eq.s32.totalorder %s16, 0
    %p99 = por %p97, %p98
    %p100 = scmp.ne.s32.totalorder %s92, %s94
    %p101 = scmp.eq.s32.totalorder %s21, 1
    %p102 = por %p100, %p101
    %p103 = scmp.ne.s32.totalorder %s94, %s95
    %p104 = scmp.eq.s32.totalorder %s21, 0
    %p105 = por %p103, %p104
    %p106 = scmp.ne.s32.totalorder %s94, %s95
    %p107 = scmp.eq.s32.totalorder %s22, 1
    %p108 = por %p106, %p107
    %p110 = scmp.ne.s32.totalorder %s95, %s109
    %p111 = scmp.eq.s32.totalorder %s22, 0
    %p112 = por %p110, %p111
    %s114 = sadd.s32 %s113, 1
    %p117 = scmp.eq.s32.totalorder %s16, 1
    %p118 = scmp.ne.s32.totalorder %s113, %s115
    %p119 = scmp.eq.s32.totalorder %s16, 0
    %p120 = por %p118, %p119
    %p121 = scmp.ne.s32.totalorder %s113, %s115
    %p122 = scmp.eq.s32.totalorder %s21, 1
    %p123 = por %p121, %p122
    %p124 = scmp.ne.s32.totalorder %s115, %s116
    %p125 = scmp.eq.s32.totalorder %s21, 0
    %p126 = por %p124, %p125
    %p127 = scmp.ne.s32.totalorder %s115, %s116
    %p128 = scmp.eq.s32.totalorder %s22, 1
    %p129 = por %p127, %p128
    %p131 = scmp.ne.s32.totalorder %s116, %s130
    %p132 = scmp.eq.s32.totalorder %s22, 0
    %p133 = por %p131, %p132
    %s135 = sadd.s32 %s134, 1
    %p138 = scmp.eq.s32.totalorder %s16, 1
    %p139 = scmp.ne.s32.totalorder %s134, %s136
    %p140 = scmp.eq.s32.totalorder %s16, 0
    %p141 = por %p139, %p140
    %p142 = scmp.ne.s32.totalorder %s134, %s136
    %p143 = scmp.eq.s32.totalorder %s21, 1
    %p144 = por %p142, %p143
    %p145 = scmp.ne.s32.totalorder %s136, %s137
    %p146 = scmp.eq.s32.totalorder %s21, 0
    %p147 = por %p145, %p146
    %p148 = scmp.ne.s32.totalorder %s136, %s137
    %p149 = scmp.eq.s32.totalorder %s22, 1
    %p150 = por %p148, %p149
    %p152 = scmp.ne.s32.totalorder %s137, %s151
    %p153 = scmp.eq.s32.totalorder %s22, 0
    %p154 = por %p152, %p153
    %s156 = sadd.s32 %s155, 1
    %p159 = scmp.eq.s32.totalorder %s16, 1
    %p160 = scmp.ne.s32.totalorder %s155, %s157
    %p161 = scmp.eq.s32.totalorder %s16, 0
    %p162 = por %p160, %p161
    %p163 = scmp.ne.s32.totalorder %s155, %s157
    %p164 = scmp.eq.s32.totalorder %s21, 1
    %p165 = por %p163, %p164
    %p166 = scmp.ne.s32.totalorder %s157, %s158
    %p167 = scmp.eq.s32.totalorder %s21, 0
    %p168 = por %p166, %p167
    %p169 = scmp.ne.s32.totalorder %s157, %s158
    %p170 = scmp.eq.s32.totalorder %s22, 1
    %p171 = por %p169, %p170
    %p173 = scmp.ne.s32.totalorder %s158, %s172
    %p174 = scmp.eq.s32.totalorder %s22, 0
    %p175 = por %p173, %p174
    %s177 = sadd.s32 %s176, 1
    %p180 = scmp.eq.s32.totalorder %s16, 1
    %p181 = scmp.ne.s32.totalorder %s176, %s178
    %p182 = scmp.eq.s32.totalorder %s16, 0
    %p183 = por %p181, %p182
    %p184 = scmp.ne.s32.totalorder %s176, %s178
    %p185 = scmp.eq.s32.totalorder %s21, 1
    %p186 = por %p184, %p185
    %p187 = scmp.ne.s32.totalorder %s178, %s179
    %p188 = scmp.eq.s32.totalorder %s21, 0
    %p189 = por %p187, %p188
    %p190 = scmp.ne.s32.totalorder %s178, %s179
    %p191 = scmp.eq.s32.totalorder %s22, 1
    %p192 = por %p190, %p191
    %p194 = scmp.ne.s32.totalorder %s179, %s193
    %p195 = scmp.eq.s32.totalorder %s22, 0
    %p196 = por %p194, %p195
    %s198 = sadd.s32 %s197, 1
    %p201 = scmp.eq.s32.totalorder %s16, 1
    %p202 = scmp.ne.s32.totalorder %s197, %s199
    %p203 = scmp.eq.s32.totalorder %s16, 0
    %p204 = por %p202, %p203
    %p205 = scmp.ne.s32.totalorder %s197, %s199
    %p206 = scmp.eq.s32.totalorder %s21, 1
    %p207 = por %p205, %p206
    %p208 = scmp.ne.s32.totalorder %s199, %s200
    %p209 = scmp.eq.s32.totalorder %s21, 0
    %p210 = por %p208, %p209
    %p211 = scmp.ne.s32.totalorder %s199, %s200
    %p212 = scmp.eq.s32.totalorder %s22, 1
    %p213 = por %p211, %p212
    %p215 = scmp.ne.s32.totalorder %s200, %s214
    %p216 = scmp.eq.s32.totalorder %s22, 0
    %p217 = por %p215, %p216
    %s218 = ssub.s32 %s16, %s23
    %p219 = scmp.eq.s32.totalorder %s218, 0
    %s221 = sadd.s32 %s220, 1
    %s222 = scalar_select %p219, %s220, %s221
    %p225 = pneg %p219
    %p226 = scmp.eq.s32.totalorder %s16, 1
    %p227 = por %p225, %p226
    %p228 = scmp.ne.s32.totalorder %s220, %s223
    %p229 = scmp.eq.s32.totalorder %s16, 0
    %p230 = por %p228, %p229
    %p231 = scmp.ne.s32.totalorder %s220, %s223
    %p232 = scmp.eq.s32.totalorder %s21, 1
    %p233 = por %p231, %p232
    %p234 = scmp.ne.s32.totalorder %s223, %s224
    %p235 = scmp.eq.s32.totalorder %s21, 0
    %p236 = por %p234, %p235
    %p237 = scmp.ne.s32.totalorder %s223, %s224
    %p238 = scmp.eq.s32.totalorder %s22, 1
    %p239 = por %p237, %p238
    %p241 = scmp.ne.s32.totalorder %s224, %s240
    %p242 = scmp.eq.s32.totalorder %s22, 0
    %p243 = por %p241, %p242
    %s244 = ssub.s32 %s16, %s23
    %p245 = scmp.eq.s32.totalorder %s244, 0
    %s247 = sadd.s32 %s246, 1
    %s248 = scalar_select %p245, %s246, %s247
    %p251 = pneg %p245
    %p252 = scmp.eq.s32.totalorder %s16, 1
    %p253 = por %p251, %p252
    %p254 = scmp.ne.s32.totalorder %s246, %s249
    %p255 = scmp.eq.s32.totalorder %s16, 0
    %p256 = por %p254, %p255
    %p257 = scmp.ne.s32.totalorder %s246, %s249
    %p258 = scmp.eq.s32.totalorder %s21, 1
    %p259 = por %p257, %p258
    %p260 = scmp.ne.s32.totalorder %s249, %s250
    %p261 = scmp.eq.s32.totalorder %s21, 0
    %p262 = por %p260, %p261
    %p263 = scmp.ne.s32.totalorder %s249, %s250
    %p264 = scmp.eq.s32.totalorder %s22, 1
    %p265 = por %p263, %p264
    %p267 = scmp.ne.s32.totalorder %s250, %s266
    %p268 = scmp.eq.s32.totalorder %s22, 0
    %p269 = por %p267, %p268
    %p270 = scmp.le.s32.totalorder 1, %s16
    %p271 = scmp.lt.s32.totalorder %s16, 3
    %p272 = pnand %p270, %p271
    %p273 = pneg %p272
    // Predicated region
    $region9: #{teab_forward.3} parent=5 // pred_check
      _
    $region10: #{teab_forward.3} parent=5 // pred_check_branch
      %275 = sbr.rel (%p272) target = $region12
    $region11: #{teab_forward.3} parent=5 // pred_region
      %s276 = ssub.s32 %s16, 1
      // Predicated region
      $region13: #{teab_forward.3} parent=11 // pred_check
        %p277 = pneg %p63
      $region14: #{teab_forward.3} parent=11 // pred_check_branch
        %279 = sbr.rel (%p277) target = $region16
      $region15: #{teab_forward.3} parent=11 // pred_region
        _
      $region16: #{teab_forward.3} parent=11 // pred_fallthru
        _
      // Predicated region
      $region17: #{teab_forward.3} parent=11 // pred_check
        %p280 = pneg %p84
      $region18: #{teab_forward.3} parent=11 // pred_check_branch
        %282 = sbr.rel (%p280) target = $region20
      $region19: #{teab_forward.3} parent=11 // pred_region
        _
      $region20: #{teab_forward.3} parent=11 // pred_fallthru
        _
      // Predicated region
      $region21: #{teab_forward.3} parent=11 // pred_check
        %p283 = pneg %p105
      $region22: #{teab_forward.3} parent=11 // pred_check_branch
        %285 = sbr.rel (%p283) target = $region24
      $region23: #{teab_forward.3} parent=11 // pred_region
        _
      $region24: #{teab_forward.3} parent=11 // pred_fallthru
        _
      // Predicated region
      $region25: #{teab_forward.3} parent=11 // pred_check
        %p286 = pneg %p126
      $region26: #{teab_forward.3} parent=11 // pred_check_branch
        %288 = sbr.rel (%p286) target = $region28
      $region27: #{teab_forward.3} parent=11 // pred_region
        _
      $region28: #{teab_forward.3} parent=11 // pred_fallthru
        _
      // Predicated region
      $region29: #{teab_forward.3} parent=11 // pred_check
        %p289 = pneg %p147
      $region30: #{teab_forward.3} parent=11 // pred_check_branch
        %291 = sbr.rel (%p289) target = $region32
      $region31: #{teab_forward.3} parent=11 // pred_region
        _
      $region32: #{teab_forward.3} parent=11 // pred_fallthru
        _
      // Predicated region
      $region33: #{teab_forward.3} parent=11 // pred_check
        %p292 = pneg %p168
      $region34: #{teab_forward.3} parent=11 // pred_check_branch
        %294 = sbr.rel (%p292) target = $region36
      $region35: #{teab_forward.3} parent=11 // pred_region
        _
      $region36: #{teab_forward.3} parent=11 // pred_fallthru
        _
      // Predicated region
      $region37: #{teab_forward.3} parent=11 // pred_check
        %p295 = pneg %p189
      $region38: #{teab_forward.3} parent=11 // pred_check_branch
        %297 = sbr.rel (%p295) target = $region40
      $region39: #{teab_forward.3} parent=11 // pred_region
        _
      $region40: #{teab_forward.3} parent=11 // pred_fallthru
        _
      // Predicated region
      $region41: #{teab_forward.3} parent=11 // pred_check
        %p298 = pneg %p210
      $region42: #{teab_forward.3} parent=11 // pred_check_branch
        %300 = sbr.rel (%p298) target = $region44
      $region43: #{teab_forward.3} parent=11 // pred_region
        _
      $region44: #{teab_forward.3} parent=11 // pred_fallthru
        _
    $region12: #{teab_forward.3} parent=5 // pred_fallthru
      _
    %p301 = scmp.lt.s32.totalorder %s16, 2
    // Predicated region
    $region45: #{teab_forward.3} parent=5 // pred_check
      %p302 = pneg %p301
    $region46: #{teab_forward.3} parent=5 // pred_check_branch
      %304 = sbr.rel (%p302) target = $region48
    $region47: #{teab_forward.3} parent=5 // pred_region
      // Predicated region
      $region49: #{teab_forward.3} parent=47 // pred_check
        %p305 = pneg %p36
      $region50: #{teab_forward.3} parent=47 // pred_check_branch
        %307 = sbr.rel (%p305) target = $region52
      $region51: #{teab_forward.3} parent=47 // pred_region
        %p308 = scmp.lt.s32.totalorder %s16, 1
        %s309 = scalar_select %p308, %s16, 1
        %s310 = smul.addr %s309, 3
        %s311 = smul.addr %s310, 8
        %s312 = scalar_lea.vmem %s0, %s311
      $region52: #{teab_forward.3} parent=47 // pred_fallthru
        _
      // Predicated region
      $region53: #{teab_forward.3} parent=47 // pred_check
        %p313 = pneg %p230
      $region54: #{teab_forward.3} parent=47 // pred_check_branch
        %315 = sbr.rel (%p313) target = $region56
      $region55: #{teab_forward.3} parent=47 // pred_region
        %p316 = scmp.lt.s32.totalorder %s16, 1
        %s317 = scalar_select %p316, %s16, 1
        %s318 = smul.addr %s317, 4
        %s319 = smul.addr %s318, 8
        %s320 = scalar_lea.vmem %s9, %s319
      $region56: #{teab_forward.3} parent=47 // pred_fallthru
        _
    $region48: #{teab_forward.3} parent=5 // pred_fallthru
      _
    %p321 = scmp.le.s32.totalorder 1, %s16
    %p322 = scmp.lt.s32.totalorder %s16, 3
    %p323 = pnand %p321, %p322
    %p324 = pneg %p323
    // Predicated region
    $region57: #{teab_forward.3} parent=5 // pred_check
      _
    $region58: #{teab_forward.3} parent=5 // pred_check_branch
      %326 = sbr.rel (%p323) target = $region60
    $region59: #{teab_forward.3} parent=5 // pred_region
      %s327 = ssub.s32 %s16, 1
      %p328 = scmp.lt.s32.totalorder %s21, 1
      %s329 = scalar_select %p328, %s21, 1
      %s330 = smul.addr %s329, 3
      %s331 = smul.addr %s330, 8
      %s332 = scalar_lea.vmem %s0, %s331
      %p333 = pneg %p42
      %p334 = pneg %p39
      %p335 = pneg %p63
      %p336 = pneg %p60
      %p337 = pneg %p84
      %p338 = pneg %p81
      %p339 = pneg %p105
      %p340 = pneg %p102
      %p341 = pneg %p126
      %p342 = pneg %p123
      %p343 = pneg %p147
      %p344 = pneg %p144
      %p345 = pneg %p168
      %p346 = pneg %p165
      %p347 = pneg %p189
      %p348 = pneg %p186
      %p349 = pneg %p210
      %p350 = pneg %p207
      %p351 = scmp.lt.s32.totalorder %s21, 1
      %s352 = scalar_select %p351, %s21, 1
      %s353 = smul.addr %s352, 4
      %s354 = smul.addr %s353, 8
      %s355 = scalar_lea.vmem %s9, %s354
      %p356 = pneg %p236
      %p357 = pneg %p233
      %p358 = pneg %p262
      %p359 = pneg %p259
      %p360 = scmp.lt.s32.totalorder %s21, 1
      %s361 = scalar_select %p360, %s21, 1
      %s362 = smul.addr %s361, 4
      %s363 = smul.addr %s362, 8
      %s364 = scalar_lea.vmem %s10, %s363
      %p365 = scmp.lt.s32.totalorder %s21, 1
      %s366 = scalar_select %p365, %s21, 1
      %s367 = smul.addr %s366, 3
      %s368 = smul.addr %s367, 8
      %s369 = scalar_lea.vmem %s0, %s368
      %p370 = scmp.lt.s32.totalorder %s21, 1
      %s371 = scalar_select %p370, %s21, 1
      %s372 = smul.addr %s371, 4
      %s373 = smul.addr %s372, 8
      %s374 = scalar_lea.vmem %s9, %s373
      %p375 = scmp.lt.s32.totalorder %s21, 1
      %s376 = scalar_select %p375, %s21, 1
      %s377 = smul.addr %s376, 4
      %s378 = smul.addr %s377, 8
      %s379 = scalar_lea.vmem %s10, %s378
      %v383 = vld [vmem:[%s369] sm:$0xff]
      %v384 = vld [vmem:[%s369 + $0x8] sm:$0xff]
      %v385 = vld [vmem:[%s369 + $0x10] sm:$0xff]
      %v386 = vld [vmem:[%s1] sm:$0xff]
      %v387 = vld [vmem:[%s1 + $0x8] sm:$0xff]
      %v388 = vld [vmem:[%s1 + $0x10] sm:$0xff]
      %390 = vset.pattern.permute.xlu0 0
      %391 = vperm.xlu0 %390, %v386
      %v392 = vpop.permute.xlu0 %391
      %395 = vset.pattern.permute.xlu0 0
      %396 = vperm.xlu0 %395, %v387
      %v397 = vpop.permute.xlu0 %396
      %400 = vset.pattern.permute.xlu0 0
      %401 = vperm.xlu0 %400, %v388
      %v402 = vpop.permute.xlu0 %401
      %v404 = vmul.f32 %v383, %v392
      %v405 = vmul.f32 %v384, %v397
      %v406 = vmul.f32 %v385, %v402
      %v407 = vld [vmem:[%s2] sm:$0xff]
      %v408 = vld [vmem:[%s2 + $0x8] sm:$0xff]
      %v409 = vld [vmem:[%s2 + $0x10] sm:$0xff]
      %411 = vset.pattern.permute.xlu0 0
      %412 = vperm.xlu0 %411, %v407
      %v413 = vpop.permute.xlu0 %412
      %416 = vset.pattern.permute.xlu0 0
      %417 = vperm.xlu0 %416, %v408
      %v418 = vpop.permute.xlu0 %417
      %421 = vset.pattern.permute.xlu0 0
      %422 = vperm.xlu0 %421, %v409
      %v423 = vpop.permute.xlu0 %422
      %v425 = vadd.f32 %v404, %v413
      %v426 = vadd.f32 %v405, %v418
      %v427 = vadd.f32 %v406, %v423
      %v428 = vmax.f32 %v425, 0.0
      %v429 = vmax.f32 %v426, 0.0
      %v430 = vmax.f32 %v427, 0.0
      %434 = vrot.lane.b32.xlu0 %v428, 127
      %v435 = vpop.permute.xlu0 %434
      %436 = vrot.lane.b32.xlu0 %v429, 127
      %v437 = vpop.permute.xlu0 %436
      %438 = vrot.lane.b32.xlu0 %v430, 127
      %v439 = vpop.permute.xlu0 %438
      %vm443 = vcmask 515072
      %v444 = vsel %vm443, %v435, 0.0
      %v445 = vsel %vm443, %v437, 0.0
      %v446 = vsel %vm443, %v439, 0.0
      %v447 = vlaneseq
      %v448 = vand.u32 %v447, 127
      %vm449 = vcmp.lt.s32.totalorder %v448, 0
      %v450 = vsub.s32 0, %v448
      %v451 = vsel %vm449, %v450, %v448
      %v452 = vshrl.u32 %v451, 3
      %v453 = vand.u32 %v451, 7
      %v454 = vsub.s32 0, %v453
      %v455 = vsel %vm449, %v454, %v453
      %vm456 = vcmp.ne.s32.totalorder %v455, 0
      %vm457 = vcmp.lt.s32.totalorder %v455, 0
      %vm458 = vmand %vm457, %vm456
      %v459 = vadd.s32 %v455, 8
      %v460 = vsel %vm458, %v459, %v455
      %vm461 = vcmp.lt.s32.totalorder %v460, 7
      %v462 = vsel %vm461, 1, 0
      %vm463 = vcmp.eq.s32.totalorder %v462, 1
      %v464 = vsel %vm463, %v444, 0.0
      %v465 = vsel %vm463, %v445, 0.0
      %v466 = vsel %vm463, %v446, 0.0
      %v467 = vmax.f32 %v428, %v464
      %v468 = vmax.f32 %v429, %v465
      %v469 = vmax.f32 %v430, %v466
      %470 = vrot.lane.b32.xlu0 %v428, 126
      %v471 = vpop.permute.xlu0 %470
      %472 = vrot.lane.b32.xlu0 %v429, 126
      %v473 = vpop.permute.xlu0 %472
      %474 = vrot.lane.b32.xlu0 %v430, 126
      %v475 = vpop.permute.xlu0 %474
      %vm479 = vcmask 506880
      %v480 = vsel %vm479, %v471, 0.0
      %v481 = vsel %vm479, %v473, 0.0
      %v482 = vsel %vm479, %v475, 0.0
      %vm483 = vcmp.lt.s32.totalorder %v460, 6
      %v484 = vsel %vm483, 1, 0
      %vm485 = vcmp.eq.s32.totalorder %v484, 1
      %v486 = vsel %vm485, %v480, 0.0
      %v487 = vsel %vm485, %v481, 0.0
      %v488 = vsel %vm485, %v482, 0.0
      %v489 = vmax.f32 %v467, %v486
      %v490 = vmax.f32 %v468, %v487
      %v491 = vmax.f32 %v469, %v488
      %492 = vrot.lane.b32.xlu0 %v428, 125
      %v493 = vpop.permute.xlu0 %492
      %494 = vrot.lane.b32.xlu0 %v429, 125
      %v495 = vpop.permute.xlu0 %494
      %496 = vrot.lane.b32.xlu0 %v430, 125
      %v497 = vpop.permute.xlu0 %496
      %vm501 = vcmask 498688
      %v502 = vsel %vm501, %v493, 0.0
      %v503 = vsel %vm501, %v495, 0.0
      %v504 = vsel %vm501, %v497, 0.0
      %vm505 = vcmp.lt.s32.totalorder %v460, 5
      %v506 = vsel %vm505, 1, 0
      %vm507 = vcmp.eq.s32.totalorder %v506, 1
      %v508 = vsel %vm507, %v502, 0.0
      %v509 = vsel %vm507, %v503, 0.0
      %v510 = vsel %vm507, %v504, 0.0
      %v511 = vmax.f32 %v489, %v508
      %v512 = vmax.f32 %v490, %v509
      %v513 = vmax.f32 %v491, %v510
      %517 = vrot.lane.b32.xlu0 %v511, 120
      %v518 = vpop.permute.xlu0 %517
      %519 = vrot.lane.b32.xlu0 %v512, 120
      %v520 = vpop.permute.xlu0 %519
      %521 = vrot.lane.b32.xlu0 %v513, 120
      %v522 = vpop.permute.xlu0 %521
      %vm526 = vcmask 457728
      %v527 = vsel %vm526, %v518, 0.0
      %v528 = vsel %vm526, %v520, 0.0
      %v529 = vsel %vm526, %v522, 0.0
      %v530 = vmax.f32 %v511, %v527
      %v531 = vmax.f32 %v512, %v528
      %v532 = vmax.f32 %v513, %v529
      %533 = vrot.lane.b32.xlu0 %v511, 112
      %v534 = vpop.permute.xlu0 %533
      %535 = vrot.lane.b32.xlu0 %v512, 112
      %v536 = vpop.permute.xlu0 %535
      %537 = vrot.lane.b32.xlu0 %v513, 112
      %v538 = vpop.permute.xlu0 %537
      %vm542 = vcmask 392192
      %v543 = vsel %vm542, %v534, 0.0
      %v544 = vsel %vm542, %v536, 0.0
      %v545 = vsel %vm542, %v538, 0.0
      %v546 = vmax.f32 %v530, %v543
      %v547 = vmax.f32 %v531, %v544
      %v548 = vmax.f32 %v532, %v545
      %549 = vrot.lane.b32.xlu0 %v511, 104
      %v550 = vpop.permute.xlu0 %549
      %551 = vrot.lane.b32.xlu0 %v512, 104
      %v552 = vpop.permute.xlu0 %551
      %553 = vrot.lane.b32.xlu0 %v513, 104
      %v554 = vpop.permute.xlu0 %553
      %vm558 = vcmask 326656
      %v559 = vsel %vm558, %v550, 0.0
      %v560 = vsel %vm558, %v552, 0.0
      %v561 = vsel %vm558, %v554, 0.0
      %v562 = vmax.f32 %v546, %v559
      %v563 = vmax.f32 %v547, %v560
      %v564 = vmax.f32 %v548, %v561
      %v565 = vld [vmem:[%s3] sm:$0xff]
      %v566 = vld [vmem:[%s3 + $0x8] sm:$0xff]
      %v567 = vld [vmem:[%s3 + $0x10] sm:$0xff]
      %v568 = vld [vmem:[%s3 + $0x18] sm:$0xff]
      %v569 = vld [vmem:[%s3 + $0x20] sm:$0xff]
      %v570 = vld [vmem:[%s3 + $0x28] sm:$0xff]
      %v571 = vld [vmem:[%s3 + $0x30] sm:$0xff]
      %v572 = vld [vmem:[%s3 + $0x38] sm:$0xff]
      %vm573 = vcmask 523264
      %v575 = vsel %vm573, %v562, 0
      %v578 = vsel %vm573, %v563, 0
      %v581 = vsel %vm573, %v564, 0
      %583 = vmatprep.subr.mxu0 0.0
      %584 = vmatpush1.msra.mxu0 %v565
      %585 = vmatprep.subr.mxu0 0.0
      %586 = vmatpush1.msra.mxu0 %v566
      %587 = vmatprep.subr.mxu0 0.0
      %588 = vmatpush1.msra.mxu0 %v567
      %589 = vmatprep.subr.mxu0 0.0
      %590 = vmatpush1.msra.mxu0 %v568
      %591 = vmatprep.subr.mxu0 0.0
      %592 = vmatpush1.msra.mxu0 %v569
      %593 = vmatprep.subr.mxu0 0.0
      %594 = vmatpush1.msra.mxu0 %v570
      %595 = vmatprep.subr.mxu0 0.0
      %596 = vmatpush1.msra.mxu0 %v571
      %597 = vmatprep.subr.mxu0 0.0
      %598 = vmatpush1.msra.mxu0 %v572
      %599 = vmatprep.subr.mxu0 0.0
      %600 = vmatpush1.msra.mxu0 0.0
      %601 = vmatprep.subr.mxu0 0.0
      %602 = vmatpush1.msra.mxu0 0.0
      %603 = vmatprep.subr.mxu0 0.0
      %604 = vmatpush1.msra.mxu0 0.0
      %605 = vmatprep.subr.mxu0 0.0
      %606 = vmatpush1.msra.mxu0 0.0
      %607 = vmatprep.subr.mxu0 0.0
      %608 = vmatpush1.msra.mxu0 0.0
      %609 = vmatprep.subr.mxu0 0.0
      %610 = vmatpush1.msra.mxu0 0.0
      %611 = vmatprep.subr.mxu0 0.0
      %612 = vmatpush1.msra.mxu0 0.0
      %613 = vmatprep.subr.mxu0 0.0
      %614 = vmatpush1.msra.mxu0 0.0
      %615 = vmatprep.subr.mxu0 0.0
      %616 = vmatpush1.msra.mxu0 0.0
      %617 = vmatprep.subr.mxu0 0.0
      %618 = vmatpush1.msra.mxu0 0.0
      %619 = vmatprep.subr.mxu0 0.0
      %620 = vmatpush1.msra.mxu0 0.0
      %621 = vmatprep.subr.mxu0 0.0
      %622 = vmatpush1.msra.mxu0 0.0
      %623 = vmatprep.subr.mxu0 0.0
      %624 = vmatpush1.msra.mxu0 0.0
      %625 = vmatprep.subr.mxu0 0.0
      %626 = vmatpush1.msra.mxu0 0.0
      %627 = vmatprep.subr.mxu0 0.0
      %628 = vmatpush1.msra.mxu0 0.0
      %629 = vmatprep.subr.mxu0 0.0
      %630 = vmatpush1.msra.mxu0 0.0
      %631 = vmatprep.subr.mxu0 0.0
      %632 = vmatpush1.msra.mxu0 0.0
      %633 = vmatprep.subr.mxu0 0.0
      %634 = vmatpush1.msra.mxu0 0.0
      %635 = vmatprep.subr.mxu0 0.0
      %636 = vmatpush1.msra.mxu0 0.0
      %637 = vmatprep.subr.mxu0 0.0
      %638 = vmatpush1.msra.mxu0 0.0
      %639 = vmatprep.subr.mxu0 0.0
      %640 = vmatpush1.msra.mxu0 0.0
      %641 = vmatprep.subr.mxu0 0.0
      %642 = vmatpush1.msra.mxu0 0.0
      %643 = vmatprep.subr.mxu0 0.0
      %644 = vmatpush1.msra.mxu0 0.0
      %645 = vmatprep.subr.mxu0 0.0
      %646 = vmatpush1.msra.mxu0 0.0
      %647 = vmatprep.mubr.f32.mxu0 0.0
      %648 = vmatmul.mubr.f32.gmra.mrb[0].mxu0 %v575
      %v649 = vpop.f32.mrb[0].mxu0
      %v650 = vadd.f32 0.0, %v649
      %v651 = vpop.f32.mrb[0].mxu0
      %652 = vmatprep.mubr.f32.mxu0 0.0
      %653 = vmatmul.mubr.f32.gmra.mrb[0].mxu0 %v578
      %v654 = vpop.f32.mrb[0].mxu0
      %v655 = vadd.f32 0.0, %v654
      %v656 = vpop.f32.mrb[0].mxu0
      %657 = vmatprep.mubr.f32.mxu0 0.0
      %658 = vmatmul.mubr.f32.gmra.mrb[0].mxu0 %v581
      %v659 = vpop.f32.mrb[0].mxu0
      %v660 = vadd.f32 0.0, %v659
      %v661 = vpop.f32.mrb[0].mxu0
      %662 = vdwg.mxu0
      %v663 = vpack.c.bf16 %v655, %v650
      %v664 = vpack.c.bf16 %v660, %v660
      %667 = vrot.lane.b32.xlu0 %v663, 4
      %v668 = vpop.permute.xlu0 %667
      %669 = vrot.lane.b32.xlu0 %v664, 4
      %v670 = vpop.permute.xlu0 %669
      %vm671 = vcmask 31744
      %v674 = vsel %vm671, 0, %v668
      %v677 = vsel %vm671, 0, %v670
      %vm679 = vcmp.lt.s32.totalorder %v448, 0
      %v680 = vsub.s32 0, %v448
      %v681 = vsel %vm679, %v680, %v448
      %v682 = vmul.u32.u64.compose %v681, 2863311531
      %v683 = vextract.low.u32 %v682
      %v684 = vextract.high.u32 %v682
      %v685 = vshrl.u32 %v684, 1
      %v686 = vmul.u32 %v685, 3
      %v687 = vsub.s32 %v681, %v686
      %v688 = vsub.s32 0, %v687
      %v689 = vsel %vm679, %v688, %v687
      %vm690 = vcmp.ne.s32.totalorder %v689, 0
      %vm691 = vcmp.lt.s32.totalorder %v689, 0
      %vm692 = vmand %vm691, %vm690
      %v693 = vadd.s32 %v689, 3
      %v694 = vsel %vm692, %v693, %v689
      %vm695 = vcmp.ge.s32.totalorder %v694, 1
      %v696 = vsel %vm695, 1, 0
      %vm697 = vcmp.eq.s32.totalorder %v696, 1
      %vm698 = vmpackc.low %vm697, %vm697
      %v699 = vsel %vm698, 65537, 0
      %v700 = vlaneseq
      %v701 = vshrl.u32 %v700, 7
      %v702 = vsub.s32 0, %v701
      %v703 = vrot.slane %v699, %v702
      %vm704 = vcmp.ne.s16.totalorder %v703, 0
      %v705 = vsel %vm704, %v674, 0
      %v706 = vsel %vm704, %v677, 0
      %v707 = vld [vmem:[%s4] sm:$0xf]
      %v708 = vld [vmem:[%s4 + $0x4] sm:$0xf]
      %v709 = vld [vmem:[%s4 + $0x8] sm:$0xf]
      %710 = vrot.lane.b32.xlu0 %v663, 3
      %v711 = vpop.permute.xlu0 %710
      %712 = vrot.lane.b32.xlu0 %v664, 3
      %v713 = vpop.permute.xlu0 %712
      %vm714 = vcmask 23552
      %v716 = vsel %vm714, 0, %v711
      %v719 = vsel %vm714, 0, %v713
      %s720 = scalar_lea.vmem %s4, 12
      %v721 = vld [vmem:[%s720] sm:$0xf]
      %v722 = vld [vmem:[%s720 + $0x4] sm:$0xf]
      %v723 = vld [vmem:[%s720 + $0x8] sm:$0xf]
      %v727 = vunpack.c.l.b16 %v721
      %v728 = vunpack.c.l.b16 %v722
      %v729 = vunpack.c.l.b16 %v723
      %v730 = vpack.c.b16 %v728, %v727
      %v731 = vpack.c.b16 %v729, %v729
      %vm732 = vcmask 195584
      %v734 = vsel %vm732, %v730, 0
      %v737 = vsel %vm732, %v731, 0
      %vm739 = vcmask 1043456
      %v740 = vsel %vm739, %v719, 0
      %742 = vmatprep.subr.bf16.mxu0 0
      %743 = vmatpush1.bf16.msra.mxu0 %v716
      %744 = vmatprep.subr.bf16.mxu0 0
      %745 = vmatpush1.bf16.msra.mxu0 %v740
      %746 = vmatprep.subr.bf16.mxu0 0
      %747 = vmatpush1.bf16.msra.mxu0 0
      %748 = vmatprep.subr.bf16.mxu0 0
      %749 = vmatpush1.bf16.msra.mxu0 0
      %750 = vmatprep.subr.bf16.mxu0 0
      %751 = vmatpush1.bf16.msra.mxu0 0
      %752 = vmatprep.subr.bf16.mxu0 0
      %753 = vmatpush1.bf16.msra.mxu0 0
      %754 = vmatprep.subr.bf16.mxu0 0
      %755 = vmatpush1.bf16.msra.mxu0 0
      %756 = vmatprep.subr.bf16.mxu0 0
      %757 = vmatpush1.bf16.msra.mxu0 0
      %758 = vmatprep.subr.bf16.mxu0 0
      %759 = vmatpush1.bf16.msra.mxu0 0
      %760 = vmatprep.subr.bf16.mxu0 0
      %761 = vmatpush1.bf16.msra.mxu0 0
      %762 = vmatprep.subr.bf16.mxu0 0
      %763 = vmatpush1.bf16.msra.mxu0 0
      %764 = vmatprep.subr.bf16.mxu0 0
      %765 = vmatpush1.bf16.msra.mxu0 0
      %766 = vmatprep.subr.bf16.mxu0 0
      %767 = vmatpush1.bf16.msra.mxu0 0
      %768 = vmatprep.subr.bf16.mxu0 0
      %769 = vmatpush1.bf16.msra.mxu0 0
      %770 = vmatprep.subr.bf16.mxu0 0
      %771 = vmatpush1.bf16.msra.mxu0 0
      %772 = vmatprep.subr.bf16.mxu0 0
      %773 = vmatpush1.bf16.msra.mxu0 0
      %774 = vmatprep.mubr.bf16.mxu0 0
      %775 = vmatmul.mubr.bf16.gmra.mrb[0].mxu0 %v734
      %v776 = vpop.f32.mrb[0].mxu0
      %v777 = vadd.f32 0.0, %v776
      %v778 = vpop.f32.mrb[0].mxu0
      %v779 = vpop.f32.mrb[0].mxu0
      %v780 = vadd.f32 0.0, %v779
      %v781 = vpop.f32.mrb[0].mxu0
      %782 = vmatprep.mubr.bf16.mxu0 0
      %783 = vmatmul.mubr.bf16.gmra.mrb[0].mxu0 %v737
      %v784 = vpop.f32.mrb[0].mxu0
      %v785 = vadd.f32 0.0, %v784
      %v786 = vpop.f32.mrb[0].mxu0
      %v787 = vpop.f32.mrb[0].mxu0
      %v788 = vpop.f32.mrb[0].mxu0
      %789 = vdwg.mxu0
      %v793 = vunpack.c.l.b16 %v707
      %v794 = vunpack.c.l.b16 %v708
      %v795 = vunpack.c.l.b16 %v709
      %v796 = vpack.c.b16 %v794, %v793
      %v797 = vpack.c.b16 %v795, %v795
      %v799 = vsel %vm732, %v796, 0
      %v802 = vsel %vm732, %v797, 0
      %v805 = vsel %vm739, %v706, 0
      %807 = vmatprep.subr.bf16.mxu0 0
      %808 = vmatpush1.bf16.msra.mxu0 %v705
      %809 = vmatprep.subr.bf16.mxu0 0
      %810 = vmatpush1.bf16.msra.mxu0 %v805
      %811 = vmatprep.subr.bf16.mxu0 0
      %812 = vmatpush1.bf16.msra.mxu0 0
      %813 = vmatprep.subr.bf16.mxu0 0
      %814 = vmatpush1.bf16.msra.mxu0 0
      %815 = vmatprep.subr.bf16.mxu0 0
      %816 = vmatpush1.bf16.msra.mxu0 0
      %817 = vmatprep.subr.bf16.mxu0 0
      %818 = vmatpush1.bf16.msra.mxu0 0
      %819 = vmatprep.subr.bf16.mxu0 0
      %820 = vmatpush1.bf16.msra.mxu0 0
      %821 = vmatprep.subr.bf16.mxu0 0
      %822 = vmatpush1.bf16.msra.mxu0 0
      %823 = vmatprep.subr.bf16.mxu0 0
      %824 = vmatpush1.bf16.msra.mxu0 0
      %825 = vmatprep.subr.bf16.mxu0 0
      %826 = vmatpush1.bf16.msra.mxu0 0
      %827 = vmatprep.subr.bf16.mxu0 0
      %828 = vmatpush1.bf16.msra.mxu0 0
      %829 = vmatprep.subr.bf16.mxu0 0
      %830 = vmatpush1.bf16.msra.mxu0 0
      %831 = vmatprep.subr.bf16.mxu0 0
      %832 = vmatpush1.bf16.msra.mxu0 0
      %833 = vmatprep.subr.bf16.mxu0 0
      %834 = vmatpush1.bf16.msra.mxu0 0
      %835 = vmatprep.subr.bf16.mxu0 0
      %836 = vmatpush1.bf16.msra.mxu0 0
      %837 = vmatprep.subr.bf16.mxu0 0
      %838 = vmatpush1.bf16.msra.mxu0 0
      %839 = vmatprep.mubr.bf16.mxu0 0
      %840 = vmatmul.mubr.bf16.gmra.mrb[0].mxu0 %v799
      %v841 = vpop.f32.mrb[0].mxu0
      %v842 = vadd.f32 %v777, %v841
      %v843 = vpop.f32.mrb[0].mxu0
      %v844 = vpop.f32.mrb[0].mxu0
      %v845 = vadd.f32 %v780, %v844
      %v846 = vpop.f32.mrb[0].mxu0
      %847 = vmatprep.mubr.bf16.mxu0 0
      %848 = vmatmul.mubr.bf16.gmra.mrb[0].mxu0 %v802
      %v849 = vpop.f32.mrb[0].mxu0
      %v850 = vadd.f32 %v785, %v849
      %v851 = vpop.f32.mrb[0].mxu0
      %v852 = vpop.f32.mrb[0].mxu0
      %v853 = vpop.f32.mrb[0].mxu0
      %854 = vdwg.mxu0
      %855 = vrot.lane.b32.xlu0 %v663, 2
      %v856 = vpop.permute.xlu0 %855
      %857 = vrot.lane.b32.xlu0 %v664, 2
      %v858 = vpop.permute.xlu0 %857
      %vm859 = vcmask 15360
      %v861 = vsel %vm859, 0, %v856
      %v864 = vsel %vm859, 0, %v858
      %vm866 = vcmp.lt.s32.totalorder %v694, 2
      %v867 = vsel %vm866, 1, 0
      %vm868 = vcmp.eq.s32.totalorder %v867, 1
      %vm869 = vmpackc.low %vm868, %vm868
      %v870 = vsel %vm869, 65537, 0
      %v871 = vlaneseq
      %v872 = vshrl.u32 %v871, 7
      %v873 = vsub.s32 0, %v872
      %v874 = vrot.slane %v870, %v873
      %vm875 = vcmp.ne.s16.totalorder %v874, 0
      %v876 = vsel %vm875, %v861, 0
      %v877 = vsel %vm875, %v864, 0
      %s878 = scalar_lea.vmem %s4, 24
      %v879 = vld [vmem:[%s878] sm:$0xf]
      %v880 = vld [vmem:[%s878 + $0x4] sm:$0xf]
      %v881 = vld [vmem:[%s878 + $0x8] sm:$0xf]
      %v885 = vunpack.c.l.b16 %v879
      %v886 = vunpack.c.l.b16 %v880
      %v887 = vunpack.c.l.b16 %v881
      %v888 = vpack.c.b16 %v886, %v885
      %v889 = vpack.c.b16 %v887, %v887
      %v891 = vsel %vm732, %v888, 0
      %v894 = vsel %vm732, %v889, 0
      %v897 = vsel %vm739, %v877, 0
      %899 = vmatprep.subr.bf16.mxu0 0
      %900 = vmatpush1.bf16.msra.mxu0 %v876
      %901 = vmatprep.subr.bf16.mxu0 0
      %902 = vmatpush1.bf16.msra.mxu0 %v897
      %903 = vmatprep.subr.bf16.mxu0 0
      %904 = vmatpush1.bf16.msra.mxu0 0
      %905 = vmatprep.subr.bf16.mxu0 0
      %906 = vmatpush1.bf16.msra.mxu0 0
      %907 = vmatprep.subr.bf16.mxu0 0
      %908 = vmatpush1.bf16.msra.mxu0 0
      %909 = vmatprep.subr.bf16.mxu0 0
      %910 = vmatpush1.bf16.msra.mxu0 0
      %911 = vmatprep.subr.bf16.mxu0 0
      %912 = vmatpush1.bf16.msra.mxu0 0
      %913 = vmatprep.subr.bf16.mxu0 0
      %914 = vmatpush1.bf16.msra.mxu0 0
      %915 = vmatprep.subr.bf16.mxu0 0
      %916 = vmatpush1.bf16.msra.mxu0 0
      %917 = vmatprep.subr.bf16.mxu0 0
      %918 = vmatpush1.bf16.msra.mxu0 0
      %919 = vmatprep.subr.bf16.mxu0 0
      %920 = vmatpush1.bf16.msra.mxu0 0
      %921 = vmatprep.subr.bf16.mxu0 0
      %922 = vmatpush1.bf16.msra.mxu0 0
      %923 = vmatprep.subr.bf16.mxu0 0
      %924 = vmatpush1.bf16.msra.mxu0 0
      %925 = vmatprep.subr.bf16.mxu0 0
      %926 = vmatpush1.bf16.msra.mxu0 0
      %927 = vmatprep.subr.bf16.mxu0 0
      %928 = vmatpush1.bf16.msra.mxu0 0
      %929 = vmatprep.subr.bf16.mxu0 0
      %930 = vmatpush1.bf16.msra.mxu0 0
      %931 = vmatprep.mubr.bf16.mxu0 0
      %932 = vmatmul.mubr.bf16.gmra.mrb[0].mxu0 %v891
      %v933 = vpop.f32.mrb[0].mxu0
      %v934 = vadd.f32 0.0, %v933
      %v935 = vpop.f32.mrb[0].mxu0
      %v936 = vpop.f32.mrb[0].mxu0
      %v937 = vadd.f32 0.0, %v936
      %v938 = vpop.f32.mrb[0].mxu0
      %939 = vmatprep.mubr.bf16.mxu0 0
      %940 = vmatmul.mubr.bf16.gmra.mrb[0].mxu0 %v894
      %v941 = vpop.f32.mrb[0].mxu0
      %v942 = vadd.f32 0.0, %v941
      %v943 = vpop.f32.mrb[0].mxu0
      %v944 = vpop.f32.mrb[0].mxu0
      %v945 = vpop.f32.mrb[0].mxu0
      %946 = vdwg.mxu0
      %v947 = vadd.f32 %v842, %v934
      %v948 = vadd.f32 %v845, %v937
      %v949 = vadd.f32 %v850, %v942
      %950 = vrot.lane.b32.xlu0 %v663, 1
      %v951 = vpop.permute.xlu0 %950
      %952 = vrot.lane.b32.xlu0 %v664, 1
      %v953 = vpop.permute.xlu0 %952
      %vm954 = vcmask 7168
      %v956 = vsel %vm954, 0, %v951
      %v959 = vsel %vm954, 0, %v953
      %v961 = vsel %vm704, %v956, 0
      %v962 = vsel %vm704, %v959, 0
      %s963 = scalar_lea.vmem %s4, 36
      %v964 = vld [vmem:[%s963] sm:$0xf]
      %v965 = vld [vmem:[%s963 + $0x4] sm:$0xf]
      %v966 = vld [vmem:[%s963 + $0x8] sm:$0xf]
      %v970 = vunpack.c.l.b16 %v964
      %v971 = vunpack.c.l.b16 %v965
      %v972 = vunpack.c.l.b16 %v966
      %v973 = vpack.c.b16 %v971, %v970
      %v974 = vpack.c.b16 %v972, %v972
      %v976 = vsel %vm732, %v973, 0
      %v979 = vsel %vm732, %v974, 0
      %v982 = vsel %vm739, %v962, 0
      %984 = vmatprep.subr.bf16.mxu0 0
      %985 = vmatpush1.bf16.msra.mxu0 %v961
      %986 = vmatprep.subr.bf16.mxu0 0
      %987 = vmatpush1.bf16.msra.mxu0 %v982
      %988 = vmatprep.subr.bf16.mxu0 0
      %989 = vmatpush1.bf16.msra.mxu0 0
      %990 = vmatprep.subr.bf16.mxu0 0
      %991 = vmatpush1.bf16.msra.mxu0 0
      %992 = vmatprep.subr.bf16.mxu0 0
      %993 = vmatpush1.bf16.msra.mxu0 0
      %994 = vmatprep.subr.bf16.mxu0 0
      %995 = vmatpush1.bf16.msra.mxu0 0
      %996 = vmatprep.subr.bf16.mxu0 0
      %997 = vmatpush1.bf16.msra.mxu0 0
      %998 = vmatprep.subr.bf16.mxu0 0
      %999 = vmatpush1.bf16.msra.mxu0 0
      %1000 = vmatprep.subr.bf16.mxu0 0
      %1001 = vmatpush1.bf16.msra.mxu0 0
      %1002 = vmatprep.subr.bf16.mxu0 0
      %1003 = vmatpush1.bf16.msra.mxu0 0
      %1004 = vmatprep.subr.bf16.mxu0 0
      %1005 = vmatpush1.bf16.msra.mxu0 0
      %1006 = vmatprep.subr.bf16.mxu0 0
      %1007 = vmatpush1.bf16.msra.mxu0 0
      %1008 = vmatprep.subr.bf16.mxu0 0
      %1009 = vmatpush1.bf16.msra.mxu0 0
      %1010 = vmatprep.subr.bf16.mxu0 0
      %1011 = vmatpush1.bf16.msra.mxu0 0
      %1012 = vmatprep.subr.bf16.mxu0 0
      %1013 = vmatpush1.bf16.msra.mxu0 0
      %1014 = vmatprep.subr.bf16.mxu0 0
      %1015 = vmatpush1.bf16.msra.mxu0 0
      %1016 = vmatprep.mubr.bf16.mxu0 0
      %1017 = vmatmul.mubr.bf16.gmra.mrb[0].mxu0 %v976
      %v1018 = vpop.f32.mrb[0].mxu0
      %v1019 = vadd.f32 0.0, %v1018
      %v1020 = vpop.f32.mrb[0].mxu0
      %v1021 = vpop.f32.mrb[0].mxu0
      %v1022 = vadd.f32 0.0, %v1021
      %v1023 = vpop.f32.mrb[0].mxu0
      %1024 = vmatprep.mubr.bf16.mxu0 0
      %1025 = vmatmul.mubr.bf16.gmra.mrb[0].mxu0 %v979
      %v1026 = vpop.f32.mrb[0].mxu0
      %v1027 = vadd.f32 0.0, %v1026
      %v1028 = vpop.f32.mrb[0].mxu0
      %v1029 = vpop.f32.mrb[0].mxu0
      %v1030 = vpop.f32.mrb[0].mxu0
      %1031 = vdwg.mxu0
      %v1032 = vadd.f32 %v947, %v1019
      %v1033 = vadd.f32 %v948, %v1022
      %v1034 = vadd.f32 %v949, %v1027
      %s1035 = scalar_lea.vmem %s4, 48
      %v1036 = vld [vmem:[%s1035] sm:$0xf]
      %v1037 = vld [vmem:[%s1035 + $0x4] sm:$0xf]
      %v1038 = vld [vmem:[%s1035 + $0x8] sm:$0xf]
      %v1042 = vunpack.c.l.b16 %v1036
      %v1043 = vunpack.c.l.b16 %v1037
      %v1044 = vunpack.c.l.b16 %v1038
      %v1045 = vpack.c.b16 %v1043, %v1042
      %v1046 = vpack.c.b16 %v1044, %v1044
      %v1048 = vsel %vm732, %v1045, 0
      %v1051 = vsel %vm732, %v1046, 0
      %v1054 = vsel %vm739, %v664, 0
      %1056 = vmatprep.subr.bf16.mxu0 0
      %1057 = vmatpush1.bf16.msra.mxu0 %v663
      %1058 = vmatprep.subr.bf16.mxu0 0
      %1059 = vmatpush1.bf16.msra.mxu0 %v1054
      %1060 = vmatprep.subr.bf16.mxu0 0
      %1061 = vmatpush1.bf16.msra.mxu0 0
      %1062 = vmatprep.subr.bf16.mxu0 0
      %1063 = vmatpush1.bf16.msra.mxu0 0
      %1064 = vmatprep.subr.bf16.mxu0 0
      %1065 = vmatpush1.bf16.msra.mxu0 0
      %1066 = vmatprep.subr.bf16.mxu0 0
      %1067 = vmatpush1.bf16.msra.mxu0 0
      %1068 = vmatprep.subr.bf16.mxu0 0
      %1069 = vmatpush1.bf16.msra.mxu0 0
      %1070 = vmatprep.subr.bf16.mxu0 0
      %1071 = vmatpush1.bf16.msra.mxu0 0
      %1072 = vmatprep.subr.bf16.mxu0 0
      %1073 = vmatpush1.bf16.msra.mxu0 0
      %1074 = vmatprep.subr.bf16.mxu0 0
      %1075 = vmatpush1.bf16.msra.mxu0 0
      %1076 = vmatprep.subr.bf16.mxu0 0
      %1077 = vmatpush1.bf16.msra.mxu0 0
      %1078 = vmatprep.subr.bf16.mxu0 0
      %1079 = vmatpush1.bf16.msra.mxu0 0
      %1080 = vmatprep.subr.bf16.mxu0 0
      %1081 = vmatpush1.bf16.msra.mxu0 0
      %1082 = vmatprep.subr.bf16.mxu0 0
      %1083 = vmatpush1.bf16.msra.mxu0 0
      %1084 = vmatprep.subr.bf16.mxu0 0
      %1085 = vmatpush1.bf16.msra.mxu0 0
      %1086 = vmatprep.subr.bf16.mxu0 0
      %1087 = vmatpush1.bf16.msra.mxu0 0
      %1088 = vmatprep.mubr.bf16.mxu0 0
      %1089 = vmatmul.mubr.bf16.gmra.mrb[0].mxu0 %v1048
      %v1090 = vpop.f32.mrb[0].mxu0
      %v1091 = vadd.f32 0.0, %v1090
      %v1092 = vpop.f32.mrb[0].mxu0
      %v1093 = vpop.f32.mrb[0].mxu0
      %v1094 = vadd.f32 0.0, %v1093
      %v1095 = vpop.f32.mrb[0].mxu0
      %1096 = vmatprep.mubr.bf16.mxu0 0
      %1097 = vmatmul.mubr.bf16.gmra.mrb[0].mxu0 %v1051
      %v1098 = vpop.f32.mrb[0].mxu0
      %v1099 = vadd.f32 0.0, %v1098
      %v1100 = vpop.f32.mrb[0].mxu0
      %v1101 = vpop.f32.mrb[0].mxu0
      %v1102 = vpop.f32.mrb[0].mxu0
      %1103 = vdwg.mxu0
      %v1104 = vadd.f32 %v1032, %v1091
      %v1105 = vadd.f32 %v1033, %v1094
      %v1106 = vadd.f32 %v1034, %v1099
      %1107 = vrot.lane.b32.xlu0 %v663, 127
      %v1108 = vpop.permute.xlu0 %1107
      %1109 = vrot.lane.b32.xlu0 %v664, 127
      %v1110 = vpop.permute.xlu0 %1109
      %vm1111 = vcmask 64512
      %v1113 = vsel %vm1111, %v1108, 0
      %v1116 = vsel %vm1111, %v1110, 0
      %v1118 = vsel %vm875, %v1113, 0
      %v1119 = vsel %vm875, %v1116, 0
      %s1120 = scalar_lea.vmem %s4, 60
      %v1121 = vld [vmem:[%s1120] sm:$0xf]
      %v1122 = vld [vmem:[%s1120 + $0x4] sm:$0xf]
      %v1123 = vld [vmem:[%s1120 + $0x8] sm:$0xf]
      %v1127 = vunpack.c.l.b16 %v1121
      %v1128 = vunpack.c.l.b16 %v1122
      %v1129 = vunpack.c.l.b16 %v1123
      %v1130 = vpack.c.b16 %v1128, %v1127
      %v1131 = vpack.c.b16 %v1129, %v1129
      %v1133 = vsel %vm732, %v1130, 0
      %v1136 = vsel %vm732, %v1131, 0
      %v1139 = vsel %vm739, %v1119, 0
      %1141 = vmatprep.subr.bf16.mxu0 0
      %1142 = vmatpush1.bf16.msra.mxu0 %v1118
      %1143 = vmatprep.subr.bf16.mxu0 0
      %1144 = vmatpush1.bf16.msra.mxu0 %v1139
      %1145 = vmatprep.subr.bf16.mxu0 0
      %1146 = vmatpush1.bf16.msra.mxu0 0
      %1147 = vmatprep.subr.bf16.mxu0 0
      %1148 = vmatpush1.bf16.msra.mxu0 0
      %1149 = vmatprep.subr.bf16.mxu0 0
      %1150 = vmatpush1.bf16.msra.mxu0 0
      %1151 = vmatprep.subr.bf16.mxu0 0
      %1152 = vmatpush1.bf16.msra.mxu0 0
      %1153 = vmatprep.subr.bf16.mxu0 0
      %1154 = vmatpush1.bf16.msra.mxu0 0
      %1155 = vmatprep.subr.bf16.mxu0 0
      %1156 = vmatpush1.bf16.msra.mxu0 0
      %1157 = vmatprep.subr.bf16.mxu0 0
      %1158 = vmatpush1.bf16.msra.mxu0 0
      %1159 = vmatprep.subr.bf16.mxu0 0
      %1160 = vmatpush1.bf16.msra.mxu0 0
      %1161 = vmatprep.subr.bf16.mxu0 0
      %1162 = vmatpush1.bf16.msra.mxu0 0
      %1163 = vmatprep.subr.bf16.mxu0 0
      %1164 = vmatpush1.bf16.msra.mxu0 0
      %1165 = vmatprep.subr.bf16.mxu0 0
      %1166 = vmatpush1.bf16.msra.mxu0 0
      %1167 = vmatprep.subr.bf16.mxu0 0
      %1168 = vmatpush1.bf16.msra.mxu0 0
      %1169 = vmatprep.subr.bf16.mxu0 0
      %1170 = vmatpush1.bf16.msra.mxu0 0
      %1171 = vmatprep.subr.bf16.mxu0 0
      %1172 = vmatpush1.bf16.msra.mxu0 0
      %1173 = vmatprep.mubr.bf16.mxu0 0
      %1174 = vmatmul.mubr.bf16.gmra.mrb[0].mxu0 %v1133
      %v1175 = vpop.f32.mrb[0].mxu0
      %v1176 = vadd.f32 0.0, %v1175
      %v1177 = vpop.f32.mrb[0].mxu0
      %v1178 = vpop.f32.mrb[0].mxu0
      %v1179 = vadd.f32 0.0, %v1178
      %v1180 = vpop.f32.mrb[0].mxu0
      %1181 = vmatprep.mubr.bf16.mxu0 0
      %1182 = vmatmul.mubr.bf16.gmra.mrb[0].mxu0 %v1136
      %v1183 = vpop.f32.mrb[0].mxu0
      %v1184 = vadd.f32 0.0, %v1183
      %v1185 = vpop.f32.mrb[0].mxu0
      %v1186 = vpop.f32.mrb[0].mxu0
      %v1187 = vpop.f32.mrb[0].mxu0
      %1188 = vdwg.mxu0
      %v1189 = vadd.f32 %v1104, %v1176
      %v1190 = vadd.f32 %v1105, %v1179
      %v1191 = vadd.f32 %v1106, %v1184
      %1192 = vrot.lane.b32.xlu0 %v663, 126
      %v1193 = vpop.permute.xlu0 %1192
      %1194 = vrot.lane.b32.xlu0 %v664, 126
      %v1195 = vpop.permute.xlu0 %1194
      %vm1196 = vcmask 56320
      %v1198 = vsel %vm1196, %v1193, 0
      %v1201 = vsel %vm1196, %v1195, 0
      %v1203 = vsel %vm704, %v1198, 0
      %v1204 = vsel %vm704, %v1201, 0
      %s1205 = scalar_lea.vmem %s4, 72
      %v1206 = vld [vmem:[%s1205] sm:$0xf]
      %v1207 = vld [vmem:[%s1205 + $0x4] sm:$0xf]
      %v1208 = vld [vmem:[%s1205 + $0x8] sm:$0xf]
      %v1212 = vunpack.c.l.b16 %v1206
      %v1213 = vunpack.c.l.b16 %v1207
      %v1214 = vunpack.c.l.b16 %v1208
      %v1215 = vpack.c.b16 %v1213, %v1212
      %v1216 = vpack.c.b16 %v1214, %v1214
      %v1218 = vsel %vm732, %v1215, 0
      %v1221 = vsel %vm732, %v1216, 0
      %v1224 = vsel %vm739, %v1204, 0
      %1226 = vmatprep.subr.bf16.mxu0 0
      %1227 = vmatpush1.bf16.msra.mxu0 %v1203
      %1228 = vmatprep.subr.bf16.mxu0 0
      %1229 = vmatpush1.bf16.msra.mxu0 %v1224
      %1230 = vmatprep.subr.bf16.mxu0 0
      %1231 = vmatpush1.bf16.msra.mxu0 0
      %1232 = vmatprep.subr.bf16.mxu0 0
      %1233 = vmatpush1.bf16.msra.mxu0 0
      %1234 = vmatprep.subr.bf16.mxu0 0
      %1235 = vmatpush1.bf16.msra.mxu0 0
      %1236 = vmatprep.subr.bf16.mxu0 0
      %1237 = vmatpush1.bf16.msra.mxu0 0
      %1238 = vmatprep.subr.bf16.mxu0 0
      %1239 = vmatpush1.bf16.msra.mxu0 0
      %1240 = vmatprep.subr.bf16.mxu0 0
      %1241 = vmatpush1.bf16.msra.mxu0 0
      %1242 = vmatprep.subr.bf16.mxu0 0
      %1243 = vmatpush1.bf16.msra.mxu0 0
      %1244 = vmatprep.subr.bf16.mxu0 0
      %1245 = vmatpush1.bf16.msra.mxu0 0
      %1246 = vmatprep.subr.bf16.mxu0 0
      %1247 = vmatpush1.bf16.msra.mxu0 0
      %1248 = vmatprep.subr.bf16.mxu0 0
      %1249 = vmatpush1.bf16.msra.mxu0 0
      %1250 = vmatprep.subr.bf16.mxu0 0
      %1251 = vmatpush1.bf16.msra.mxu0 0
      %1252 = vmatprep.subr.bf16.mxu0 0
      %1253 = vmatpush1.bf16.msra.mxu0 0
      %1254 = vmatprep.subr.bf16.mxu0 0
      %1255 = vmatpush1.bf16.msra.mxu0 0
      %1256 = vmatprep.subr.bf16.mxu0 0
      %1257 = vmatpush1.bf16.msra.mxu0 0
      %1258 = vmatprep.mubr.bf16.mxu0 0
      %1259 = vmatmul.mubr.bf16.gmra.mrb[0].mxu0 %v1218
      %v1260 = vpop.f32.mrb[0].mxu0
      %v1261 = vadd.f32 0.0, %v1260
      %v1262 = vpop.f32.mrb[0].mxu0
      %v1263 = vpop.f32.mrb[0].mxu0
      %v1264 = vadd.f32 0.0, %v1263
      %v1265 = vpop.f32.mrb[0].mxu0
      %1266 = vmatprep.mubr.bf16.mxu0 0
      %1267 = vmatmul.mubr.bf16.gmra.mrb[0].mxu0 %v1221
      %v1268 = vpop.f32.mrb[0].mxu0
      %v1269 = vadd.f32 0.0, %v1268
      %v1270 = vpop.f32.mrb[0].mxu0
      %v1271 = vpop.f32.mrb[0].mxu0
      %v1272 = vpop.f32.mrb[0].mxu0
      %1273 = vdwg.mxu0
      %v1274 = vadd.f32 %v1189, %v1261
      %v1275 = vadd.f32 %v1190, %v1264
      %v1276 = vadd.f32 %v1191, %v1269
      %1277 = vrot.lane.b32.xlu0 %v663, 125
      %v1278 = vpop.permute.xlu0 %1277
      %1279 = vrot.lane.b32.xlu0 %v664, 125
      %v1280 = vpop.permute.xlu0 %1279
      %vm1281 = vcmask 48128
      %v1283 = vsel %vm1281, %v1278, 0
      %v1286 = vsel %vm1281, %v1280, 0
      %s1287 = scalar_lea.vmem %s4, 84
      %v1288 = vld [vmem:[%s1287] sm:$0xf]
      %v1289 = vld [vmem:[%s1287 + $0x4] sm:$0xf]
      %v1290 = vld [vmem:[%s1287 + $0x8] sm:$0xf]
      %v1294 = vunpack.c.l.b16 %v1288
      %v1295 = vunpack.c.l.b16 %v1289
      %v1296 = vunpack.c.l.b16 %v1290
      %v1297 = vpack.c.b16 %v1295, %v1294
      %v1298 = vpack.c.b16 %v1296, %v1296
      %v1300 = vsel %vm732, %v1297, 0
      %v1303 = vsel %vm732, %v1298, 0
      %v1305 = vsel %vm739, %v1286, 0
      %1307 = vmatprep.subr.bf16.mxu0 0
      %1308 = vmatpush1.bf16.msra.mxu0 %v1283
      %1309 = vmatprep.subr.bf16.mxu0 0
      %1310 = vmatpush1.bf16.msra.mxu0 %v1305
      %1311 = vmatprep.subr.bf16.mxu0 0
      %1312 = vmatpush1.bf16.msra.mxu0 0
      %1313 = vmatprep.subr.bf16.mxu0 0
      %1314 = vmatpush1.bf16.msra.mxu0 0
      %1315 = vmatprep.subr.bf16.mxu0 0
      %1316 = vmatpush1.bf16.msra.mxu0 0
      %1317 = vmatprep.subr.bf16.mxu0 0
      %1318 = vmatpush1.bf16.msra.mxu0 0
      %1319 = vmatprep.subr.bf16.mxu0 0
      %1320 = vmatpush1.bf16.msra.mxu0 0
      %1321 = vmatprep.subr.bf16.mxu0 0
      %1322 = vmatpush1.bf16.msra.mxu0 0
      %1323 = vmatprep.subr.bf16.mxu0 0
      %1324 = vmatpush1.bf16.msra.mxu0 0
      %1325 = vmatprep.subr.bf16.mxu0 0
      %1326 = vmatpush1.bf16.msra.mxu0 0
      %1327 = vmatprep.subr.bf16.mxu0 0
      %1328 = vmatpush1.bf16.msra.mxu0 0
      %1329 = vmatprep.subr.bf16.mxu0 0
      %1330 = vmatpush1.bf16.msra.mxu0 0
      %1331 = vmatprep.subr.bf16.mxu0 0
      %1332 = vmatpush1.bf16.msra.mxu0 0
      %1333 = vmatprep.subr.bf16.mxu0 0
      %1334 = vmatpush1.bf16.msra.mxu0 0
      %1335 = vmatprep.subr.bf16.mxu0 0
      %1336 = vmatpush1.bf16.msra.mxu0 0
      %1337 = vmatprep.subr.bf16.mxu0 0
      %1338 = vmatpush1.bf16.msra.mxu0 0
      %1339 = vmatprep.mubr.bf16.mxu0 0
      %1340 = vmatmul.mubr.bf16.gmra.mrb[0].mxu0 %v1300
      %v1341 = vpop.f32.mrb[0].mxu0
      %v1342 = vadd.f32 0.0, %v1341
      %v1343 = vpop.f32.mrb[0].mxu0
      %v1344 = vpop.f32.mrb[0].mxu0
      %v1345 = vadd.f32 0.0, %v1344
      %v1346 = vpop.f32.mrb[0].mxu0
      %1347 = vmatprep.mubr.bf16.mxu0 0
      %1348 = vmatmul.mubr.bf16.gmra.mrb[0].mxu0 %v1303
      %v1349 = vpop.f32.mrb[0].mxu0
      %v1350 = vadd.f32 0.0, %v1349
      %v1351 = vpop.f32.mrb[0].mxu0
      %v1352 = vpop.f32.mrb[0].mxu0
      %v1353 = vpop.f32.mrb[0].mxu0
      %1354 = vdwg.mxu0
      %v1355 = vadd.f32 %v1274, %v1342
      %v1356 = vadd.f32 %v1275, %v1345
      %v1357 = vadd.f32 %v1276, %v1350
      %1358 = vrot.lane.b32.xlu0 %v663, 124
      %v1359 = vpop.permute.xlu0 %1358
      %1360 = vrot.lane.b32.xlu0 %v664, 124
      %v1361 = vpop.permute.xlu0 %1360
      %vm1362 = vcmask 39936
      %v1364 = vsel %vm1362, %v1359, 0
      %v1367 = vsel %vm1362, %v1361, 0
      %v1369 = vsel %vm875, %v1364, 0
      %v1370 = vsel %vm875, %v1367, 0
      %s1371 = scalar_lea.vmem %s4, 96
      %v1372 = vld [vmem:[%s1371] sm:$0xf]
      %v1373 = vld [vmem:[%s1371 + $0x4] sm:$0xf]
      %v1374 = vld [vmem:[%s1371 + $0x8] sm:$0xf]
      %v1378 = vunpack.c.l.b16 %v1372
      %v1379 = vunpack.c.l.b16 %v1373
      %v1380 = vunpack.c.l.b16 %v1374
      %v1381 = vpack.c.b16 %v1379, %v1378
      %v1382 = vpack.c.b16 %v1380, %v1380
      %v1384 = vsel %vm732, %v1381, 0
      %v1387 = vsel %vm732, %v1382, 0
      %v1390 = vsel %vm739, %v1370, 0
      %1392 = vmatprep.subr.bf16.mxu0 0
      %1393 = vmatpush1.bf16.msra.mxu0 %v1369
      %1394 = vmatprep.subr.bf16.mxu0 0
      %1395 = vmatpush1.bf16.msra.mxu0 %v1390
      %1396 = vmatprep.subr.bf16.mxu0 0
      %1397 = vmatpush1.bf16.msra.mxu0 0
      %1398 = vmatprep.subr.bf16.mxu0 0
      %1399 = vmatpush1.bf16.msra.mxu0 0
      %1400 = vmatprep.subr.bf16.mxu0 0
      %1401 = vmatpush1.bf16.msra.mxu0 0
      %1402 = vmatprep.subr.bf16.mxu0 0
      %1403 = vmatpush1.bf16.msra.mxu0 0
      %1404 = vmatprep.subr.bf16.mxu0 0
      %1405 = vmatpush1.bf16.msra.mxu0 0
      %1406 = vmatprep.subr.bf16.mxu0 0
      %1407 = vmatpush1.bf16.msra.mxu0 0
      %1408 = vmatprep.subr.bf16.mxu0 0
      %1409 = vmatpush1.bf16.msra.mxu0 0
      %1410 = vmatprep.subr.bf16.mxu0 0
      %1411 = vmatpush1.bf16.msra.mxu0 0
      %1412 = vmatprep.subr.bf16.mxu0 0
      %1413 = vmatpush1.bf16.msra.mxu0 0
      %1414 = vmatprep.subr.bf16.mxu0 0
      %1415 = vmatpush1.bf16.msra.mxu0 0
      %1416 = vmatprep.subr.bf16.mxu0 0
      %1417 = vmatpush1.bf16.msra.mxu0 0
      %1418 = vmatprep.subr.bf16.mxu0 0
      %1419 = vmatpush1.bf16.msra.mxu0 0
      %1420 = vmatprep.subr.bf16.mxu0 0
      %1421 = vmatpush1.bf16.msra.mxu0 0
      %1422 = vmatprep.subr.bf16.mxu0 0
      %1423 = vmatpush1.bf16.msra.mxu0 0
      %1424 = vmatprep.mubr.bf16.mxu0 0
      %1425 = vmatmul.mubr.bf16.gmra.mrb[0].mxu0 %v1384
      %v1426 = vpop.f32.mrb[0].mxu0
      %v1427 = vadd.f32 0.0, %v1426
      %v1428 = vpop.f32.mrb[0].mxu0
      %v1429 = vpop.f32.mrb[0].mxu0
      %v1430 = vadd.f32 0.0, %v1429
      %v1431 = vpop.f32.mrb[0].mxu0
      %1432 = vmatprep.mubr.bf16.mxu0 0
      %1433 = vmatmul.mubr.bf16.gmra.mrb[0].mxu0 %v1387
      %v1434 = vpop.f32.mrb[0].mxu0
      %v1435 = vadd.f32 0.0, %v1434
      %v1436 = vpop.f32.mrb[0].mxu0
      %v1437 = vpop.f32.mrb[0].mxu0
      %v1438 = vpop.f32.mrb[0].mxu0
      %1439 = vdwg.mxu0
      %v1440 = vadd.f32 %v1355, %v1427
      %v1441 = vadd.f32 %v1356, %v1430
      %v1442 = vadd.f32 %v1357, %v1435
      %v1443 = vld [vmem:[%s5] sm:$0xff]
      %v1444 = vld [vmem:[%s5 + $0x8] sm:$0xff]
      %v1445 = vld [vmem:[%s5 + $0x10] sm:$0xff]
      %1447 = vset.pattern.permute.xlu0 0
      %1448 = vperm.xlu0 %1447, %v1443
      %v1449 = vpop.permute.xlu0 %1448
      %1452 = vset.pattern.permute.xlu0 0
      %1453 = vperm.xlu0 %1452, %v1444
      %v1454 = vpop.permute.xlu0 %1453
      %1457 = vset.pattern.permute.xlu0 0
      %1458 = vperm.xlu0 %1457, %v1445
      %v1459 = vpop.permute.xlu0 %1458
      %v1461 = vadd.f32 %v1440, %v1449
      %v1462 = vadd.f32 %v1441, %v1454
      %v1463 = vadd.f32 %v1442, %v1459
      %v1464 = vld [vmem:[%s6] sm:$0xf]
      %v1465 = vld [vmem:[%s6 + $0x4] sm:$0xf]
      %v1466 = vpack.c.bf16 %v1462, %v1461
      %v1467 = vpack.c.bf16 %v1463, %v1463
      %v1468 = vld [vmem:[%s7] sm:$0xff]
      %v1469 = vld [vmem:[%s7 + $0x8] sm:$0xff]
      %1471 = vset.pattern.permute.xlu0 0
      %1472 = vperm.xlu0 %1471, %v1468
      %v1473 = vpop.permute.xlu0 %1472
      %1476 = vset.pattern.permute.xlu0 0
      %1477 = vperm.xlu0 %1476, %v1469
      %v1478 = vpop.permute.xlu0 %1477
      %v1482 = vunpack.c.l.b16 %v1464
      %v1483 = vunpack.c.l.b16 %v1465
      %v1484 = vpack.c.b16 %v1483, %v1482
      %v1486 = vsel %vm732, %v1484, 0
      %v1489 = vsel %vm739, %v1467, 0
      %1491 = vmatprep.subr.bf16.mxu0 0
      %1492 = vmatpush1.bf16.msra.mxu0 %v1466
      %1493 = vmatprep.subr.bf16.mxu0 0
      %1494 = vmatpush1.bf16.msra.mxu0 %v1489
      %1495 = vmatprep.subr.bf16.mxu0 0
      %1496 = vmatpush1.bf16.msra.mxu0 0
      %1497 = vmatprep.subr.bf16.mxu0 0
      %1498 = vmatpush1.bf16.msra.mxu0 0
      %1499 = vmatprep.subr.bf16.mxu0 0
      %1500 = vmatpush1.bf16.msra.mxu0 0
      %1501 = vmatprep.subr.bf16.mxu0 0
      %1502 = vmatpush1.bf16.msra.mxu0 0
      %1503 = vmatprep.subr.bf16.mxu0 0
      %1504 = vmatpush1.bf16.msra.mxu0 0
      %1505 = vmatprep.subr.bf16.mxu0 0
      %1506 = vmatpush1.bf16.msra.mxu0 0
      %1507 = vmatprep.subr.bf16.mxu0 0
      %1508 = vmatpush1.bf16.msra.mxu0 0
      %1509 = vmatprep.subr.bf16.mxu0 0
      %1510 = vmatpush1.bf16.msra.mxu0 0
      %1511 = vmatprep.subr.bf16.mxu0 0
      %1512 = vmatpush1.bf16.msra.mxu0 0
      %1513 = vmatprep.subr.bf16.mxu0 0
      %1514 = vmatpush1.bf16.msra.mxu0 0
      %1515 = vmatprep.subr.bf16.mxu0 0
      %1516 = vmatpush1.bf16.msra.mxu0 0
      %1517 = vmatprep.subr.bf16.mxu0 0
      %1518 = vmatpush1.bf16.msra.mxu0 0
      %1519 = vmatprep.subr.bf16.mxu0 0
      %1520 = vmatpush1.bf16.msra.mxu0 0
      %1521 = vmatprep.subr.bf16.mxu0 0
      %1522 = vmatpush1.bf16.msra.mxu0 0
      %1523 = vmatprep.mubr.bf16.mxu0 0
      %1524 = vmatmul.mubr.bf16.gmra.mrb[0].mxu0 %v1486
      %v1525 = vpop.f32.mrb[0].mxu0
      %v1526 = vadd.f32 %v1473, %v1525
      %v1527 = vpop.f32.mrb[0].mxu0
      %v1528 = vpop.f32.mrb[0].mxu0
      %v1529 = vadd.f32 %v1478, %v1528
      %v1530 = vpop.f32.mrb[0].mxu0
      %1531 = vdwg.mxu0
      %v1532 = vld [vmem:[%s8] sm:$0xff]
      %v1533 = vld [vmem:[%s8 + $0x8] sm:$0xff]
      %v1534 = vld [vmem:[%s8 + $0x10] sm:$0x1]
      %v1535 = vld [vmem:[%s8 + $0x18] sm:$0x1]
      %vm1536 = vcmask 72704
      %v1538 = vsel %vm1536, %v1526, 0
      %v1541 = vsel %vm1536, %v1529, 0
      %vm1543 = vcmask 1040384
      %v1545 = vsel %vm1543, %v1534, 0
      %v1548 = vsel %vm1543, %v1535, 0
      %1550 = vmatprep.subr.mxu0 %v1533
      %1551 = vmatpush1.msra.mxu0 %v1532
      %1552 = vmatprep.subr.mxu0 %v1548
      %1553 = vmatpush1.msra.mxu0 %v1545
      %1554 = vmatprep.subr.mxu0 0.0
      %1555 = vmatpush1.msra.mxu0 0.0
      %1556 = vmatprep.subr.mxu0 0.0
      %1557 = vmatpush1.msra.mxu0 0.0
      %1558 = vmatprep.subr.mxu0 0.0
      %1559 = vmatpush1.msra.mxu0 0.0
      %1560 = vmatprep.subr.mxu0 0.0
      %1561 = vmatpush1.msra.mxu0 0.0
      %1562 = vmatprep.subr.mxu0 0.0
      %1563 = vmatpush1.msra.mxu0 0.0
      %1564 = vmatprep.subr.mxu0 0.0
      %1565 = vmatpush1.msra.mxu0 0.0
      %1566 = vmatprep.subr.mxu0 0.0
      %1567 = vmatpush1.msra.mxu0 0.0
      %1568 = vmatprep.subr.mxu0 0.0
      %1569 = vmatpush1.msra.mxu0 0.0
      %1570 = vmatprep.subr.mxu0 0.0
      %1571 = vmatpush1.msra.mxu0 0.0
      %1572 = vmatprep.subr.mxu0 0.0
      %1573 = vmatpush1.msra.mxu0 0.0
      %1574 = vmatprep.subr.mxu0 0.0
      %1575 = vmatpush1.msra.mxu0 0.0
      %1576 = vmatprep.subr.mxu0 0.0
      %1577 = vmatpush1.msra.mxu0 0.0
      %1578 = vmatprep.subr.mxu0 0.0
      %1579 = vmatpush1.msra.mxu0 0.0
      %1580 = vmatprep.subr.mxu0 0.0
      %1581 = vmatpush1.msra.mxu0 0.0
      %1582 = vmatprep.subr.mxu0 0.0
      %1583 = vmatpush1.msra.mxu0 0.0
      %1584 = vmatprep.subr.mxu0 0.0
      %1585 = vmatpush1.msra.mxu0 0.0
      %1586 = vmatprep.subr.mxu0 0.0
      %1587 = vmatpush1.msra.mxu0 0.0
      %1588 = vmatprep.subr.mxu0 0.0
      %1589 = vmatpush1.msra.mxu0 0.0
      %1590 = vmatprep.subr.mxu0 0.0
      %1591 = vmatpush1.msra.mxu0 0.0
      %1592 = vmatprep.subr.mxu0 0.0
      %1593 = vmatpush1.msra.mxu0 0.0
      %1594 = vmatprep.subr.mxu0 0.0
      %1595 = vmatpush1.msra.mxu0 0.0
      %1596 = vmatprep.subr.mxu0 0.0
      %1597 = vmatpush1.msra.mxu0 0.0
      %1598 = vmatprep.subr.mxu0 0.0
      %1599 = vmatpush1.msra.mxu0 0.0
      %1600 = vmatprep.subr.mxu0 0.0
      %1601 = vmatpush1.msra.mxu0 0.0
      %1602 = vmatprep.subr.mxu0 0.0
      %1603 = vmatpush1.msra.mxu0 0.0
      %1604 = vmatprep.subr.mxu0 0.0
      %1605 = vmatpush1.msra.mxu0 0.0
      %1606 = vmatprep.subr.mxu0 0.0
      %1607 = vmatpush1.msra.mxu0 0.0
      %1608 = vmatprep.subr.mxu0 0.0
      %1609 = vmatpush1.msra.mxu0 0.0
      %1610 = vmatprep.subr.mxu0 0.0
      %1611 = vmatpush1.msra.mxu0 0.0
      %1612 = vmatprep.subr.mxu0 0.0
      %1613 = vmatpush1.msra.mxu0 0.0
      %1614 = vmatprep.mubr.f32.mxu0 0.0
      %1615 = vmatmul.mubr.f32.gmra.mrb[0].mxu0 %v1538
      %v1616 = vpop.f32.mrb[0].mxu0
      %v1617 = vadd.f32 0.0, %v1616
      %v1618 = vpop.f32.mrb[0].mxu0
      %v1619 = vadd.f32 0.0, %v1618
      %1620 = vmatprep.mubr.f32.mxu0 0.0
      %1621 = vmatmul.mubr.f32.gmra.mrb[0].mxu0 %v1541
      %v1622 = vpop.f32.mrb[0].mxu0
      %v1623 = vadd.f32 0.0, %v1622
      %v1624 = vpop.f32.mrb[0].mxu0
      %v1625 = vadd.f32 0.0, %v1624
      %1626 = vdwg.mxu0
      %v1627 = vxor.u32 %v1617, 2147483648
      %v1628 = vxor.u32 %v1619, 2147483648
      %v1629 = vxor.u32 %v1623, 2147483648
      %v1630 = vxor.u32 %v1625, 2147483648
      %v1631 = vmul.f32 %v1627, 1.442695
      %v1632 = vpow.pop %v1631
      %v1633 = vmul.f32 %v1628, 1.442695
      %v1634 = vpow.pop %v1633
      %v1635 = vmul.f32 %v1629, 1.442695
      %v1636 = vpow.pop %v1635
      %v1637 = vmul.f32 %v1630, 1.442695
      %v1638 = vpow.pop %v1637
      %v1639 = vadd.f32 %v1632, 1.0
      %v1640 = vadd.f32 %v1634, 1.0
      %v1641 = vadd.f32 %v1636, 1.0
      %v1642 = vadd.f32 %v1638, 1.0
      %v1643 = vrcp.pop %v1639
      %v1644 = vmul.f32 1.0, %v1643
      %v1645 = vrcp.pop %v1640
      %v1646 = vmul.f32 1.0, %v1645
      %v1647 = vrcp.pop %v1641
      %v1648 = vmul.f32 1.0, %v1647
      %v1649 = vrcp.pop %v1642
      %v1650 = vmul.f32 1.0, %v1649
      %v1651 = vld [vmem:[%s374] sm:$0xff]
      %v1652 = vld [vmem:[%s374 + $0x8] sm:$0xff]
      %v1653 = vld [vmem:[%s374 + $0x10] sm:$0xff]
      %v1654 = vld [vmem:[%s374 + $0x18] sm:$0xff]
      %v1655 = vadd.f32 %v1651, %v1644
      %v1656 = vadd.f32 %v1652, %v1646
      %v1657 = vadd.f32 %v1653, %v1648
      %v1658 = vadd.f32 %v1654, %v1650
      %1659 = vst [vmem:[%s379] sm:$0xff] %v1655
      %1660 = vst [vmem:[%s379 + $0x8] sm:$0xff] %v1656
      %1661 = vst [vmem:[%s379 + $0x10] sm:$0xff] %v1657
      %1662 = vst [vmem:[%s379 + $0x18] sm:$0xff] %v1658
      %p1663 = scmp.lt.s32.totalorder %s21, 1
      %s1664 = scalar_select %p1663, %s21, 1
      %s1665 = smul.addr %s1664, 4
      %s1666 = smul.addr %s1665, 8
      %s1667 = scalar_lea.vmem %s10, %s1666
      // Predicated region
      $region61: #{teab_forward.3} parent=59 // pred_check
        %p1668 = pneg %p259
      $region62: #{teab_forward.3} parent=59 // pred_check_branch
        %1670 = sbr.rel (%p1668) target = $region64
      $region63: #{teab_forward.3} parent=59 // pred_region
        _
      $region64: #{teab_forward.3} parent=59 // pred_fallthru
        _
    $region60: #{teab_forward.3} parent=5 // pred_fallthru
      _
    %p1671 = scmp.le.s32.totalorder 2, %s16
    // Predicated region
    $region65: #{teab_forward.3} parent=5 // pred_check
      %p1672 = pneg %p1671
    $region66: #{teab_forward.3} parent=5 // pred_check_branch
      %1674 = sbr.rel (%p1672) target = $region68
    $region67: #{teab_forward.3} parent=5 // pred_region
      %s1675 = ssub.s32 %s16, 2
      // Predicated region
      $region69: #{teab_forward.3} parent=67 // pred_check
        %p1676 = pneg %p265
      $region70: #{teab_forward.3} parent=67 // pred_check_branch
        %1678 = sbr.rel (%p1676) target = $region72
      $region71: #{teab_forward.3} parent=67 // pred_region
        %p1679 = scmp.lt.s32.totalorder %s22, 1
        %s1680 = scalar_select %p1679, %s22, 1
        %s1681 = smul.addr %s1680, 4
        %s1682 = smul.addr %s1681, 8
        %s1683 = scalar_lea.vmem %s10, %s1682
      $region72: #{teab_forward.3} parent=67 // pred_fallthru
        _
    $region68: #{teab_forward.3} parent=5 // pred_fallthru
      _
  $region6: #{teab_forward.3} parent=0 // loop_footer
    %s20 = sadd.s32 1, %s16
  $region7: #{teab_forward.3} parent=0 // loop_footer_branch
    %15 = sbr.rel target = $region3
  $region8: #{teab_forward.3} parent=0 // loop_exit
    _

</llo_original>
